<compile_context>
chip_gen: v6e
topology: v6e:2x2x1
jax: 0.10.0
libtpu: 0.0.40
codegen_flags: <defaults>
</compile_context>

<pallas_src>
import math
import functools

import jax
import jax.numpy as jnp
from jax.experimental import pallas as pl
from jax.experimental.pallas import tpu as pltpu

H1 = 1024       # first hidden width  (Linear(D, 1024))
H2_RAW = 300    # second hidden width (Linear(1024, 300)) in the PyTorch module
H2 = 384        # lane-dense padded second hidden width (3 * 128)


def _round_up(n, m):
    return ((n + m - 1) // m) * m


def _gelu(x, approx):
    if approx:
        # tanh-form GELU: transcendental runs on the EUP (its own VLIW slot)
        # instead of the erf VALU polynomial. Deviates from F.gelu's default
        # exact-erf numerics by ~1e-3 (accepted tolerance, not silent: flag).
        return jax.nn.gelu(x, approximate=True)
    # Exact erf-based GELU (F.gelu default numerics).
    return 0.5 * x * (1.0 + jax.lax.erf(x * (1.0 / math.sqrt(2.0))))


def _encoder_kernel(x_ref,               # (TM, D)   bf16
                    m_ref,               # (TM, D)   bf16 dropout scale mask (0 or 2)
                    w1_ref, b1_ref,      # (D, 1024) bf16, (1, 1024) f32
                    w2_ref, b2_ref,      # (1024,H2) bf16, (1, H2)   f32
                    w3_ref, b3_ref,      # (H2, Cp)  bf16, (1, Cp)   f32
                    out_ref,             # (TM, Cp)  f32
                    *, approx_gelu):
    # dropout(p=0.5): mask pre-scaled by 1/(1-p)=2; multiply in bf16 and feed
    # the MXU directly (scaling by a power of two is exact in bf16).
    x = x_ref[...] * m_ref[...]

    # Linear1 + GELU (bf16 MXU operands, f32 accumulate; bias/GELU in f32).
    h1 = jnp.dot(x, w1_ref[...], preferred_element_type=jnp.float32) + b1_ref[...]
    h1 = _gelu(h1, approx_gelu)

    # Linear2 + GELU.
    h2 = jnp.dot(h1.astype(jnp.bfloat16), w2_ref[...],
                 preferred_element_type=jnp.float32) + b2_ref[...]
    h2 = _gelu(h2, approx_gelu)

    # Linear3 + sigmoid.
    logits = jnp.dot(h2.astype(jnp.bfloat16), w3_ref[...],
                     preferred_element_type=jnp.float32) + b3_ref[...]
    out_ref[...] = jax.nn.sigmoid(logits).astype(out_ref.dtype)


def prepare_params(params):
    """One-time weight prep -- cache the result, do NOT call per forward pass.

    Pads the 300-wide hidden layer to 384 (=3*128) and the class dim up to a
    multiple of 128 (lane-dense stores / full vregs), and casts the matmul
    operands to bf16 (halves resident-weight DMA). Biases stay f32. Padded
    rows/cols are zero, so results are identical in the real columns.
    """
    w1, b1 = params["w1"], params["b1"]
    w2, b2 = params["w2"], params["b2"]
    w3, b3 = params["w3"], params["b3"]
    C = w3.shape[1]
    Cp = _round_up(max(C, 128), 128)
    return {
        "w1": w1.astype(jnp.bfloat16),
        "b1": b1.astype(jnp.float32),
        "w2": jnp.pad(w2, ((0, 0), (0, H2 - H2_RAW))).astype(jnp.bfloat16),
        "b2": jnp.pad(b2, ((0, 0), (0, H2 - H2_RAW))).astype(jnp.float32),
        "w3": jnp.pad(w3, ((0, H2 - H2_RAW), (0, Cp - C))).astype(jnp.bfloat16),
        "b3": jnp.pad(b3, ((0, 0), (0, Cp - C))).astype(jnp.float32),
    }


_VMEM_BUDGET = 24 * 1024 * 1024  # headroom under the 32 MiB scoped limit


def _vmem_estimate(tm, D, Cp):
    stream = 2 * (tm * D * 2 + tm * D * 2 + tm * Cp * 4)   # x, mask (bf16), out (f32), x2 buf
    weights = 2 * 2 * (D * H1 + H1 * H2 + H2 * Cp)         # bf16, double-buffered
    biases = 2 * 4 * (H1 + H2 + Cp)
    interm = tm * (H1 + H2 + Cp) * 4                        # f32 activations
    return stream + weights + biases + interm


def _choose_tm(Bp, D, Cp):
    """Pick the batch-tile size: prefer >=4 grid steps (pipelining + v7x
    dual-TC sharding), else >=2, under a conservative VMEM budget."""
    if Bp <= 128:
        return Bp
    for min_steps in (4, 2):
        for tm in (512, 256, 128):
            if Bp % tm == 0 and Bp // tm >= min_steps and \
                    _vmem_estimate(tm, D, Cp) <= _VMEM_BUDGET:
                return tm
    return 128


def encoder_forward(x, prepped, key, *, classes_num, training=True, approx_gelu=True):
    """Forward pass. x: (B, D) float. prepped: output of prepare_params().

    Returns sigmoid probabilities of shape (B, classes_num), float32.
    """
    B, D = x.shape
    w1b, b1 = prepped["w1"], prepped["b1"]
    w2b, b2 = prepped["w2"], prepped["b2"]
    w3b, b3 = prepped["w3"], prepped["b3"]
    Cp = w3b.shape[1]
    C = classes_num
    assert C <= Cp

    # Pad the batch up to a multiple of 128 so odd batch sizes still get a
    # multi-step, pipelined (and on v7x dual-TC-shardable) grid instead of one
    # giant unpipelined TM=B tile.
    Bp = _round_up(max(B, 128), 128)
    TM = _choose_tm(Bp, D, Cp)
    grid = (Bp // TM,)

    # dropout(p=0.5) keep mask, pre-scaled by 1/(1-p)=2, shipped as bf16
    # ({0,2} exact). x is shipped bf16 too (it is a bf16 MXU operand anyway;
    # scaling by 2 commutes with bf16 rounding, so operands are identical).
    # TODO(synk): on real HW the mask stream can be removed entirely with
    # in-kernel pltpu.prng_seed/prng_random_bits; host path kept for
    # portability (interpret mode has no hardware PRNG).
    xb = x.astype(jnp.bfloat16)
    if training:
        keep = jax.random.bernoulli(key, 0.5, (B, D))
        mask = keep.astype(jnp.bfloat16) * 2.0
    else:
        mask = jnp.ones((B, D), jnp.bfloat16)
    if Bp != B:
        xb = jnp.pad(xb, ((0, Bp - B), (0, 0)))
        mask = jnp.pad(mask, ((0, Bp - B), (0, 0)))

    tiled = lambda shape: pl.BlockSpec(shape, lambda i: (i, 0))
    resident = lambda shape: pl.BlockSpec(shape, lambda i: (0, 0))
    # TODO(synk): on v7x (64 MiB VMEM) add pipeline_mode=pl.Buffered(1) to the
    # resident weight specs to drop their double-buffer copy when D is large.

    cost = pl.CostEstimate(
        flops=2 * Bp * (D * H1 + H1 * H2_RAW + H2_RAW * C),
        transcendentals=Bp * (H1 + H2_RAW + C),
        bytes_accessed=(xb.size * 2 + mask.size * 2
                        + w1b.size * 2 + w2b.size * 2 + w3b.size * 2
                        + b1.size * 4 + b2.size * 4 + b3.size * 4
                        + Bp * Cp * 4),
    )

    kernel = functools.partial(_encoder_kernel, approx_gelu=approx_gelu)

    out_padded = pl.pallas_call(
        kernel,
        out_shape=jax.ShapeDtypeStruct((Bp, Cp), jnp.float32),
        grid_spec=pltpu.PrefetchScalarGridSpec(
            num_scalar_prefetch=0,
            grid=grid,
            in_specs=[
                tiled((TM, D)),            # x (bf16)
                tiled((TM, D)),            # dropout mask (bf16)
                resident(w1b.shape), resident(b1.shape),
                resident(w2b.shape), resident(b2.shape),
                resident(w3b.shape), resident(b3.shape),
            ],
            out_specs=tiled((TM, Cp)),
        ),
        compiler_params=pltpu.CompilerParams(
            dimension_semantics=("parallel",),
            vmem_limit_bytes=32 * 1024 * 1024,
        ),
        cost_estimate=cost,
    )(xb, mask, w1b, b1, w2b, b2, w3b, b3)

    return out_padded[:B, :C]


def encoder_reference(x, params, key, *, training=True, approx_gelu=True):
    """Pure-JAX f32 reference with the same (deterministic) dropout mask."""
    B, D = x.shape
    if training:
        keep = jax.random.bernoulli(key, 0.5, (B, D))
        h = x * keep.astype(jnp.float32) * 2.0
    else:
        h = x
    h = _gelu(h @ params["w1"] + params["b1"], approx_gelu)
    h = _gelu(h @ params["w2"] + params["b2"], approx_gelu)
    return jax.nn.sigmoid(h @ params["w3"] + params["b3"])


def init_params(key, D, classes_num):
    """Deterministic synthetic parameters (Kaiming-uniform-ish like nn.Linear)."""
    ks = jax.random.split(key, 6)

    def linear(kw, kb, fan_in, fan_out):
        bound = 1.0 / math.sqrt(fan_in)
        w = jax.random.uniform(kw, (fan_in, fan_out), jnp.float32, -bound, bound)
        b = jax.random.uniform(kb, (1, fan_out), jnp.float32, -bound, bound)
        return w, b

    w1, b1 = linear(ks[0], ks[1], D, H1)
    w2, b2 = linear(ks[2], ks[3], H1, H2_RAW)
    w3, b3 = linear(ks[4], ks[5], H2_RAW, classes_num)
    return {"w1": w1, "b1": b1, "w2": w2, "b2": b2, "w3": w3, "b3": b3}


if __name__ == "__main__":
    key = jax.random.PRNGKey(0)
    k_x, k_p, k_drop, k_x2 = jax.random.split(key, 4)

    D, classes_num = 32, 10
    params = init_params(k_p, D, classes_num)
    prepped = prepare_params(params)        # one-time cached weight prep

    # Small batch: single padded 128-row tile.
    x = jax.random.normal(k_x, (8, D), dtype=jnp.float32)
    out = jax.block_until_ready(
        encoder_forward(x, prepped, k_drop, classes_num=classes_num, training=True))
    assert out.shape == (8, classes_num), out.shape
    assert bool(jnp.all(jnp.isfinite(out)))
    assert bool(jnp.all((out >= 0.0) & (out <= 1.0)))       # sigmoid range
    ref = encoder_reference(x, params, k_drop, training=True)
    assert float(jnp.max(jnp.abs(out - ref))) < 2e-2         # bf16 matmul tolerance

    # Non-multiple batch: exercises the pad-to-128 path and a multi-step grid.
    x2 = jax.random.normal(k_x2, (200, D), dtype=jnp.float32)
    out2 = jax.block_until_ready(
        encoder_forward(x2, prepped, k_drop, classes_num=classes_num, training=False))
    assert out2.shape == (200, classes_num), out2.shape
    ref2 = encoder_reference(x2, params, k_drop, training=False)
    assert float(jnp.max(jnp.abs(out2 - ref2))) < 2e-2

    print("KERNEL_OK")
</pallas_src>

<mosaic_0001>
module attributes {stable_mosaic.version = 11 : i64} {
  func.func @_encoder_kernel(%arg0: i32, %arg1: memref<128x32xbf16, #tpu.memory_space<vmem>>, %arg2: memref<128x32xbf16, #tpu.memory_space<vmem>>, %arg3: memref<32x1024xbf16, #tpu.memory_space<vmem>>, %arg4: memref<1x1024xf32, #tpu.memory_space<vmem>>, %arg5: memref<1024x384xbf16, #tpu.memory_space<vmem>>, %arg6: memref<1x384xf32, #tpu.memory_space<vmem>>, %arg7: memref<384x128xbf16, #tpu.memory_space<vmem>>, %arg8: memref<1x128xf32, #tpu.memory_space<vmem>>, %arg9: memref<128x128xf32, #tpu.memory_space<vmem>>) attributes {dimension_semantics = [#tpu.dimension_semantics<parallel>], iteration_bounds = array<i64: 1>, scalar_prefetch = 0 : i64, scratch_operands = 0 : i64, tpu.core_type = #tpu.core_type<tc>, window_params = [{transform_indices = @transform_0, window_bounds = array<i64: 128, 32>}, {transform_indices = @transform_1, window_bounds = array<i64: 128, 32>}, {pipeline_mode = #tpu.pipeline_mode<synchronous>, transform_indices = @transform_2, window_bounds = array<i64: 32, 1024>}, {pipeline_mode = #tpu.pipeline_mode<synchronous>, transform_indices = @transform_3, window_bounds = array<i64: 1, 1024>}, {pipeline_mode = #tpu.pipeline_mode<synchronous>, transform_indices = @transform_4, window_bounds = array<i64: 1024, 384>}, {pipeline_mode = #tpu.pipeline_mode<synchronous>, transform_indices = @transform_5, window_bounds = array<i64: 1, 384>}, {pipeline_mode = #tpu.pipeline_mode<synchronous>, transform_indices = @transform_6, window_bounds = array<i64: 384, 128>}, {pipeline_mode = #tpu.pipeline_mode<synchronous>, transform_indices = @transform_7, window_bounds = array<i64: 1, 128>}, {transform_indices = @transform_8, window_bounds = array<i64: 128, 128>}]} {
    %c0 = arith.constant 0 : index
    %c0_0 = arith.constant 0 : index
    %0 = vector.load %arg1[%c0, %c0_0] : memref<128x32xbf16, #tpu.memory_space<vmem>>, vector<128x32xbf16>
    %c0_1 = arith.constant 0 : index
    %c0_2 = arith.constant 0 : index
    %1 = vector.load %arg2[%c0_1, %c0_2] : memref<128x32xbf16, #tpu.memory_space<vmem>>, vector<128x32xbf16>
    %2 = arith.mulf %0, %1 : vector<128x32xbf16>
    %c0_3 = arith.constant 0 : index
    %c0_4 = arith.constant 0 : index
    %3 = vector.load %arg3[%c0_3, %c0_4] : memref<32x1024xbf16, #tpu.memory_space<vmem>>, vector<32x1024xbf16>
    %cst = arith.constant dense<0.000000e+00> : vector<128x1024xf32>
    %4 = tpu.matmul %2, %3, %cst {dimension_numbers = #tpu.dot_dimension_numbers<[1], [0], [0], [1], [0, 0, 1, 1], [], []>} : vector<128x32xbf16>, vector<32x1024xbf16>, vector<128x1024xf32> -> vector<128x1024xf32>
    %c0_5 = arith.constant 0 : index
    %c0_6 = arith.constant 0 : index
    %5 = vector.load %arg4[%c0_5, %c0_6] : memref<1x1024xf32, #tpu.memory_space<vmem>>, vector<1x1024xf32>
    %6 = vector.broadcast %5 : vector<1x1024xf32> to vector<128x1024xf32>
    %7 = arith.addf %4, %6 : vector<128x1024xf32>
    %8 = arith.mulf %7, %7 : vector<128x1024xf32>
    %9 = arith.mulf %7, %8 : vector<128x1024xf32>
    %cst_7 = arith.constant 4.471500e-02 : f32
    %10 = vector.broadcast %cst_7 : f32 to vector<128x1024xf32>
    %11 = arith.mulf %10, %9 : vector<128x1024xf32>
    %12 = arith.addf %7, %11 : vector<128x1024xf32>
    %cst_8 = arith.constant 0.797884583 : f32
    %13 = vector.broadcast %cst_8 : f32 to vector<128x1024xf32>
    %14 = arith.mulf %13, %12 : vector<128x1024xf32>
    %15 = math.tanh %14 : vector<128x1024xf32>
    %cst_9 = arith.constant 1.000000e+00 : f32
    %16 = vector.broadcast %cst_9 : f32 to vector<128x1024xf32>
    %17 = arith.addf %16, %15 : vector<128x1024xf32>
    %cst_10 = arith.constant 5.000000e-01 : f32
    %18 = vector.broadcast %cst_10 : f32 to vector<128x1024xf32>
    %19 = arith.mulf %18, %17 : vector<128x1024xf32>
    %20 = arith.mulf %7, %19 : vector<128x1024xf32>
    %21 = arith.truncf %20 : vector<128x1024xf32> to vector<128x1024xbf16>
    %c0_11 = arith.constant 0 : index
    %c0_12 = arith.constant 0 : index
    %22 = vector.load %arg5[%c0_11, %c0_12] : memref<1024x384xbf16, #tpu.memory_space<vmem>>, vector<1024x384xbf16>
    %cst_13 = arith.constant dense<0.000000e+00> : vector<128x384xf32>
    %23 = tpu.matmul %21, %22, %cst_13 {dimension_numbers = #tpu.dot_dimension_numbers<[1], [0], [0], [1], [0, 0, 1, 1], [], []>} : vector<128x1024xbf16>, vector<1024x384xbf16>, vector<128x384xf32> -> vector<128x384xf32>
    %c0_14 = arith.constant 0 : index
    %c0_15 = arith.constant 0 : index
    %24 = vector.load %arg6[%c0_14, %c0_15] : memref<1x384xf32, #tpu.memory_space<vmem>>, vector<1x384xf32>
    %25 = vector.broadcast %24 : vector<1x384xf32> to vector<128x384xf32>
    %26 = arith.addf %23, %25 : vector<128x384xf32>
    %27 = arith.mulf %26, %26 : vector<128x384xf32>
    %28 = arith.mulf %26, %27 : vector<128x384xf32>
    %cst_16 = arith.constant 4.471500e-02 : f32
    %29 = vector.broadcast %cst_16 : f32 to vector<128x384xf32>
    %30 = arith.mulf %29, %28 : vector<128x384xf32>
    %31 = arith.addf %26, %30 : vector<128x384xf32>
    %cst_17 = arith.constant 0.797884583 : f32
    %32 = vector.broadcast %cst_17 : f32 to vector<128x384xf32>
    %33 = arith.mulf %32, %31 : vector<128x384xf32>
    %34 = math.tanh %33 : vector<128x384xf32>
    %cst_18 = arith.constant 1.000000e+00 : f32
    %35 = vector.broadcast %cst_18 : f32 to vector<128x384xf32>
    %36 = arith.addf %35, %34 : vector<128x384xf32>
    %cst_19 = arith.constant 5.000000e-01 : f32
    %37 = vector.broadcast %cst_19 : f32 to vector<128x384xf32>
    %38 = arith.mulf %37, %36 : vector<128x384xf32>
    %39 = arith.mulf %26, %38 : vector<128x384xf32>
    %40 = arith.truncf %39 : vector<128x384xf32> to vector<128x384xbf16>
    %c0_20 = arith.constant 0 : index
    %c0_21 = arith.constant 0 : index
    %41 = vector.load %arg7[%c0_20, %c0_21] : memref<384x128xbf16, #tpu.memory_space<vmem>>, vector<384x128xbf16>
    %cst_22 = arith.constant dense<0.000000e+00> : vector<128x128xf32>
    %42 = tpu.matmul %40, %41, %cst_22 {dimension_numbers = #tpu.dot_dimension_numbers<[1], [0], [0], [1], [0, 0, 1, 1], [], []>} : vector<128x384xbf16>, vector<384x128xbf16>, vector<128x128xf32> -> vector<128x128xf32>
    %c0_23 = arith.constant 0 : index
    %c0_24 = arith.constant 0 : index
    %43 = vector.load %arg8[%c0_23, %c0_24] : memref<1x128xf32, #tpu.memory_space<vmem>>, vector<1x128xf32>
    %44 = vector.broadcast %43 : vector<1x128xf32> to vector<128x128xf32>
    %45 = arith.addf %42, %44 : vector<128x128xf32>
    %46 = arith.negf %45 : vector<128x128xf32>
    %47 = math.exp %46 : vector<128x128xf32>
    %cst_25 = arith.constant 1.000000e+00 : f32
    %48 = vector.broadcast %cst_25 : f32 to vector<128x128xf32>
    %49 = arith.addf %48, %47 : vector<128x128xf32>
    %50 = arith.divf %48, %49 : vector<128x128xf32>
    %c0_26 = arith.constant 0 : index
    %c0_27 = arith.constant 0 : index
    %51 = vector.load %arg9[%c0_26, %c0_27] : memref<128x128xf32, #tpu.memory_space<vmem>>, vector<128x128xf32>
    tpu.vector_store %arg9[%c0_26, %c0_27], %50 {strides = array<i32>} : memref<128x128xf32, #tpu.memory_space<vmem>>, vector<128x128xf32>,
    return
  }
  func.func @transform_0(%arg0: i32) -> (i32, i32) {
    %c0_i32 = arith.constant 0 : i32
    %c0_i32_0 = arith.constant 0 : i32
    return %arg0, %c0_i32 : i32, i32
  }
  func.func @transform_1(%arg0: i32) -> (i32, i32) {
    %c0_i32 = arith.constant 0 : i32
    %c0_i32_0 = arith.constant 0 : i32
    return %arg0, %c0_i32 : i32, i32
  }
  func.func @transform_2(%arg0: i32) -> (i32, i32) {
    %c0_i32 = arith.constant 0 : i32
    %c0_i32_0 = arith.constant 0 : i32
    %c0_i32_1 = arith.constant 0 : i32
    return %c0_i32, %c0_i32_0 : i32, i32
  }
  func.func @transform_3(%arg0: i32) -> (i32, i32) {
    %c0_i32 = arith.constant 0 : i32
    %c0_i32_0 = arith.constant 0 : i32
    %c0_i32_1 = arith.constant 0 : i32
    return %c0_i32, %c0_i32_0 : i32, i32
  }
  func.func @transform_4(%arg0: i32) -> (i32, i32) {
    %c0_i32 = arith.constant 0 : i32
    %c0_i32_0 = arith.constant 0 : i32
    %c0_i32_1 = arith.constant 0 : i32
    return %c0_i32, %c0_i32_0 : i32, i32
  }
  func.func @transform_5(%arg0: i32) -> (i32, i32) {
    %c0_i32 = arith.constant 0 : i32
    %c0_i32_0 = arith.constant 0 : i32
    %c0_i32_1 = arith.constant 0 : i32
    return %c0_i32, %c0_i32_0 : i32, i32
  }
  func.func @transform_6(%arg0: i32) -> (i32, i32) {
    %c0_i32 = arith.constant 0 : i32
    %c0_i32_0 = arith.constant 0 : i32
    %c0_i32_1 = arith.constant 0 : i32
    return %c0_i32, %c0_i32_0 : i32, i32
  }
  func.func @transform_7(%arg0: i32) -> (i32, i32) {
    %c0_i32 = arith.constant 0 : i32
    %c0_i32_0 = arith.constant 0 : i32
    %c0_i32_1 = arith.constant 0 : i32
    return %c0_i32, %c0_i32_0 : i32, i32
  }
  func.func @transform_8(%arg0: i32) -> (i32, i32) {
    %c0_i32 = arith.constant 0 : i32
    %c0_i32_0 = arith.constant 0 : i32
    return %arg0, %c0_i32 : i32, i32
  }
}

</mosaic_0001>

<llo_original>
// kernel: tpu_custom_call.1
$region0: #{tpu_custom_call.1}
  #allocation0 [shape = 'u32[]', space=smem, size = 0x4, offset = 0x4, fixed_abs, tag = 'smem constant byte address 0x4 - core index']
  #allocation1 [shape = 'u32[144,128]{1,0:T(1,128)}', space=vmem, size = 0x12000, scoped, tag = 'internal scratch']
  %s0 = inlined_call_operand.vmem [shape: bf16[128,32], index: 0, kind: input, shape index: {}]
  %s1 = inlined_call_operand.vmem [shape: bf16[128,32], index: 1, kind: input, shape index: {}]
  %s2 = inlined_call_operand.vmem [shape: bf16[32,1024], index: 2, kind: input, shape index: {}]
  %s3 = inlined_call_operand.vmem [shape: f32[1,1024], index: 3, kind: input, shape index: {}]
  %s4 = inlined_call_operand.hbm [shape: bf16[1024,384], index: 4, kind: input, shape index: {}]
  %s5 = inlined_call_operand.vmem [shape: f32[1,384], index: 5, kind: input, shape index: {}]
  %s6 = inlined_call_operand.hbm [shape: bf16[384,128], index: 6, kind: input, shape index: {}]
  %s7 = inlined_call_operand.vmem [shape: f32[1,128], index: 7, kind: input, shape index: {}]
  %s8 = inlined_call_operand.hbm [shape: f32[128,128], index: 8, kind: output, shape index: {}]
  %s9 = sld [smem:[#allocation0]]
  $region50: #{tpu_custom_call.1} parent=0
    _
  %s11 = ssub.s32 1, %s9
  %s12 = scalar_select 0, %s11, %s9
  $region1: #{tpu_custom_call.1} parent=0
    #allocation2 [shape = 'u8[786432]{0}', space=vmem, size = 0xc0000, scoped, tag = 'input window, operand 4, single buffered']
    #allocation3 [shape = 's32[1]{0}', space=sflag, size = 0x4, scoped, tag = 'scoped memory for tpu_custom_call.1']
    #allocation4 [shape = 's32[1]{0}', space=sflag, size = 0x4, scoped, tag = 'scoped memory for tpu_custom_call.1']
    #allocation5 [shape = 'u8[98304]{0}', space=vmem, size = 0x18000, scoped, tag = 'input window, operand 6, single buffered']
    #allocation6 [shape = 's32[1]{0}', space=sflag, size = 0x4, scoped, tag = 'scoped memory for tpu_custom_call.1']
    #allocation7 [shape = 'u8[65536]{0}', space=vmem, size = 0x10000, scoped, tag = 'output window, operand 0, single buffered']
    %13 = vsyncpa [#allocation3], 0
    %14 = vsyncpa [#allocation6], 0
    %15 = vsyncpa [#allocation4], 0
    // Predicated region
    $region2: #{tpu_custom_call.1} parent=1 // pred_check
      _
    $region3: #{tpu_custom_call.1} parent=1 // pred_check_branch
      %17 = sbr.rel (0) target = $region5
    $region4: #{tpu_custom_call.1} parent=1 // pred_region
      _
    $region5: #{tpu_custom_call.1} parent=1 // pred_fallthru
      _
    // Predicated region
    $region6: #{tpu_custom_call.1} parent=1 // pred_check
      _
    $region7: #{tpu_custom_call.1} parent=1 // pred_check_branch
      %19 = sbr.rel (0) target = $region9
    $region8: #{tpu_custom_call.1} parent=1 // pred_region
      _
    $region9: #{tpu_custom_call.1} parent=1 // pred_fallthru
      _
    // Predicated region
    $region10: #{tpu_custom_call.1} parent=1 // pred_check
      _
    $region11: #{tpu_custom_call.1} parent=1 // pred_check_branch
      %21 = sbr.rel (0) target = $region13
    $region12: #{tpu_custom_call.1} parent=1 // pred_region
      _
    $region13: #{tpu_custom_call.1} parent=1 // pred_fallthru
      _
    // Predicated region
    $region14: #{tpu_custom_call.1} parent=1 // pred_check
      _
    $region15: #{tpu_custom_call.1} parent=1 // pred_check_branch
      %23 = sbr.rel (0) target = $region17
    $region16: #{tpu_custom_call.1} parent=1 // pred_region
      _
    $region17: #{tpu_custom_call.1} parent=1 // pred_fallthru
      _
    // Predicated region
    $region18: #{tpu_custom_call.1} parent=1 // pred_check
      _
    $region19: #{tpu_custom_call.1} parent=1 // pred_check_branch
      %25 = sbr.rel (0) target = $region21
    $region20: #{tpu_custom_call.1} parent=1 // pred_region
      %s27 = ssub.s32 24576, 24576
      %28 = vsyncadd [#allocation3], %s27
      %s29 = sshll.u32 [#allocation2], 4
      %s30 = int_to_ptr.vmem [resolvable:$true] %s29
      %35 = dma.hbm_to_vmem [thread:$0]  %s4, 24576, %s30, [#allocation3], 192, 192, 12
    $region21: #{tpu_custom_call.1} parent=1 // pred_fallthru
      _
    // Predicated region
    $region22: #{tpu_custom_call.1} parent=1 // pred_check
      _
    $region23: #{tpu_custom_call.1} parent=1 // pred_check_branch
      %37 = sbr.rel (0) target = $region25
    $region24: #{tpu_custom_call.1} parent=1 // pred_region
      _
    $region25: #{tpu_custom_call.1} parent=1 // pred_fallthru
      _
    // Predicated region
    $region26: #{tpu_custom_call.1} parent=1 // pred_check
      _
    $region27: #{tpu_custom_call.1} parent=1 // pred_check_branch
      %39 = sbr.rel (0) target = $region29
    $region28: #{tpu_custom_call.1} parent=1 // pred_region
      %s41 = ssub.s32 3072, 3072
      %42 = vsyncadd [#allocation6], %s41
      %s43 = sshll.u32 [#allocation5], 4
      %s44 = int_to_ptr.vmem [resolvable:$true] %s43
      %49 = dma.hbm_to_vmem [thread:$0]  %s6, 3072, %s44, [#allocation6], 64, 64, 4
    $region29: #{tpu_custom_call.1} parent=1 // pred_fallthru
      _
    // Predicated region
    $region30: #{tpu_custom_call.1} parent=1 // pred_check
      _
    $region31: #{tpu_custom_call.1} parent=1 // pred_check_branch
      %51 = sbr.rel (0) target = $region33
    $region32: #{tpu_custom_call.1} parent=1 // pred_region
      _
    $region33: #{tpu_custom_call.1} parent=1 // pred_fallthru
      _
    // Predicated region
    $region34: #{tpu_custom_call.1} parent=1 // pred_check
      _
    $region35: #{tpu_custom_call.1} parent=1 // pred_check_branch
      %53 = sbr.rel (0) target = $region37
    $region36: #{tpu_custom_call.1} parent=1 // pred_region
      %54 = dma.done [#allocation3], 24576
    $region37: #{tpu_custom_call.1} parent=1 // pred_fallthru
      _
    // Predicated region
    $region38: #{tpu_custom_call.1} parent=1 // pred_check
      _
    $region39: #{tpu_custom_call.1} parent=1 // pred_check_branch
      %56 = sbr.rel (0) target = $region41
    $region40: #{tpu_custom_call.1} parent=1 // pred_region
      %57 = dma.done [#allocation6], 3072
    $region41: #{tpu_custom_call.1} parent=1 // pred_fallthru
      _
    %v59 = vld [vmem:[%s0] sm:$0xf]
    %v60 = vld [vmem:[%s0 + $0x4] sm:$0xf]
    %v61 = vld [vmem:[%s0 + $0x8] sm:$0xf]
    %v62 = vld [vmem:[%s0 + $0xc] sm:$0xf]
    %v63 = vld [vmem:[%s0 + $0x10] sm:$0xf]
    %v64 = vld [vmem:[%s0 + $0x14] sm:$0xf]
    %v65 = vld [vmem:[%s0 + $0x18] sm:$0xf]
    %v66 = vld [vmem:[%s0 + $0x1c] sm:$0xf]
    %v67 = vld [vmem:[%s0 + $0x20] sm:$0xf]
    %v68 = vld [vmem:[%s0 + $0x24] sm:$0xf]
    %v69 = vld [vmem:[%s0 + $0x28] sm:$0xf]
    %v70 = vld [vmem:[%s0 + $0x2c] sm:$0xf]
    %v71 = vld [vmem:[%s0 + $0x30] sm:$0xf]
    %v72 = vld [vmem:[%s0 + $0x34] sm:$0xf]
    %v73 = vld [vmem:[%s0 + $0x38] sm:$0xf]
    %v74 = vld [vmem:[%s0 + $0x3c] sm:$0xf]
    %v75 = vld [vmem:[%s1] sm:$0xf]
    %v76 = vld [vmem:[%s1 + $0x4] sm:$0xf]
    %v77 = vld [vmem:[%s1 + $0x8] sm:$0xf]
    %v78 = vld [vmem:[%s1 + $0xc] sm:$0xf]
    %v79 = vld [vmem:[%s1 + $0x10] sm:$0xf]
    %v80 = vld [vmem:[%s1 + $0x14] sm:$0xf]
    %v81 = vld [vmem:[%s1 + $0x18] sm:$0xf]
    %v82 = vld [vmem:[%s1 + $0x1c] sm:$0xf]
    %v83 = vld [vmem:[%s1 + $0x20] sm:$0xf]
    %v84 = vld [vmem:[%s1 + $0x24] sm:$0xf]
    %v85 = vld [vmem:[%s1 + $0x28] sm:$0xf]
    %v86 = vld [vmem:[%s1 + $0x2c] sm:$0xf]
    %v87 = vld [vmem:[%s1 + $0x30] sm:$0xf]
    %v88 = vld [vmem:[%s1 + $0x34] sm:$0xf]
    %v89 = vld [vmem:[%s1 + $0x38] sm:$0xf]
    %v90 = vld [vmem:[%s1 + $0x3c] sm:$0xf]
    %v91 = vmul.bf16 %v59, %v75
    %v92 = vmul.bf16 %v60, %v76
    %v93 = vmul.bf16 %v61, %v77
    %v94 = vmul.bf16 %v62, %v78
    %v95 = vmul.bf16 %v63, %v79
    %v96 = vmul.bf16 %v64, %v80
    %v97 = vmul.bf16 %v65, %v81
    %v98 = vmul.bf16 %v66, %v82
    %v99 = vmul.bf16 %v67, %v83
    %v100 = vmul.bf16 %v68, %v84
    %v101 = vmul.bf16 %v69, %v85
    %v102 = vmul.bf16 %v70, %v86
    %v103 = vmul.bf16 %v71, %v87
    %v104 = vmul.bf16 %v72, %v88
    %v105 = vmul.bf16 %v73, %v89
    %v106 = vmul.bf16 %v74, %v90
    %v107 = vld [vmem:[%s2] sm:$0xff]
    %v108 = vld [vmem:[%s2 + $0x8] sm:$0xff]
    %v109 = vld [vmem:[%s2 + $0x10] sm:$0xff]
    %v110 = vld [vmem:[%s2 + $0x18] sm:$0xff]
    %v111 = vld [vmem:[%s2 + $0x20] sm:$0xff]
    %v112 = vld [vmem:[%s2 + $0x28] sm:$0xff]
    %v113 = vld [vmem:[%s2 + $0x30] sm:$0xff]
    %v114 = vld [vmem:[%s2 + $0x38] sm:$0xff]
    %v115 = vld [vmem:[%s2 + $0x40] sm:$0xff]
    %v116 = vld [vmem:[%s2 + $0x48] sm:$0xff]
    %v117 = vld [vmem:[%s2 + $0x50] sm:$0xff]
    %v118 = vld [vmem:[%s2 + $0x58] sm:$0xff]
    %v119 = vld [vmem:[%s2 + $0x60] sm:$0xff]
    %v120 = vld [vmem:[%s2 + $0x68] sm:$0xff]
    %v121 = vld [vmem:[%s2 + $0x70] sm:$0xff]
    %v122 = vld [vmem:[%s2 + $0x78] sm:$0xff]
    %v123 = vld [vmem:[%s3] sm:$0xff]
    %v125 = vlaneseq
    %v126 = vshrl.u32 %v125, 7
    %v127 = vsub.s32 0, %v126
    %v128 = vrot.slane %v123, %v127
    %v129 = vlaneseq
    %v130 = vshrl.u32 %v129, 7
    %v131 = vsub.s32 1, %v130
    %v132 = vrot.slane %v123, %v131
    %v133 = vlaneseq
    %v134 = vshrl.u32 %v133, 7
    %v135 = vsub.s32 2, %v134
    %v136 = vrot.slane %v123, %v135
    %v137 = vlaneseq
    %v138 = vshrl.u32 %v137, 7
    %v139 = vsub.s32 3, %v138
    %v140 = vrot.slane %v123, %v139
    %v141 = vlaneseq
    %v142 = vshrl.u32 %v141, 7
    %v143 = vsub.s32 4, %v142
    %v144 = vrot.slane %v123, %v143
    %v145 = vlaneseq
    %v146 = vshrl.u32 %v145, 7
    %v147 = vsub.s32 5, %v146
    %v148 = vrot.slane %v123, %v147
    %v149 = vlaneseq
    %v150 = vshrl.u32 %v149, 7
    %v151 = vsub.s32 6, %v150
    %v152 = vrot.slane %v123, %v151
    %v153 = vlaneseq
    %v154 = vshrl.u32 %v153, 7
    %v155 = vsub.s32 7, %v154
    %v156 = vrot.slane %v123, %v155
    %v181 = vunpack.c.l.b16 %v91
    %v182 = vunpack.c.l.b16 %v92
    %v183 = vunpack.c.l.b16 %v93
    %v184 = vunpack.c.l.b16 %v94
    %v185 = vunpack.c.l.b16 %v95
    %v186 = vunpack.c.l.b16 %v96
    %v187 = vunpack.c.l.b16 %v97
    %v188 = vunpack.c.l.b16 %v98
    %v189 = vunpack.c.l.b16 %v99
    %v190 = vunpack.c.l.b16 %v100
    %v191 = vunpack.c.l.b16 %v101
    %v192 = vunpack.c.l.b16 %v102
    %v193 = vunpack.c.l.b16 %v103
    %v194 = vunpack.c.l.b16 %v104
    %v195 = vunpack.c.l.b16 %v105
    %v196 = vunpack.c.l.b16 %v106
    %v197 = vpack.c.b16 %v182, %v181
    %v198 = vpack.c.b16 %v184, %v183
    %v199 = vpack.c.b16 %v186, %v185
    %v200 = vpack.c.b16 %v188, %v187
    %v201 = vpack.c.b16 %v190, %v189
    %v202 = vpack.c.b16 %v192, %v191
    %v203 = vpack.c.b16 %v194, %v193
    %v204 = vpack.c.b16 %v196, %v195
    %v221 = vunpack.c.l.b16 %v107
    %v222 = vunpack.c.h.b16 %v107
    %v223 = vunpack.c.l.b16 %v108
    %v224 = vunpack.c.h.b16 %v108
    %v225 = vunpack.c.l.b16 %v109
    %v226 = vunpack.c.h.b16 %v109
    %v227 = vunpack.c.l.b16 %v110
    %v228 = vunpack.c.h.b16 %v110
    %v229 = vunpack.c.l.b16 %v111
    %v230 = vunpack.c.h.b16 %v111
    %v231 = vunpack.c.l.b16 %v112
    %v232 = vunpack.c.h.b16 %v112
    %v233 = vunpack.c.l.b16 %v113
    %v234 = vunpack.c.h.b16 %v113
    %v235 = vunpack.c.l.b16 %v114
    %v236 = vunpack.c.h.b16 %v114
    %v237 = vunpack.c.l.b16 %v115
    %v238 = vunpack.c.h.b16 %v115
    %v239 = vunpack.c.l.b16 %v116
    %v240 = vunpack.c.h.b16 %v116
    %v241 = vunpack.c.l.b16 %v117
    %v242 = vunpack.c.h.b16 %v117
    %v243 = vunpack.c.l.b16 %v118
    %v244 = vunpack.c.h.b16 %v118
    %v245 = vunpack.c.l.b16 %v119
    %v246 = vunpack.c.h.b16 %v119
    %v247 = vunpack.c.l.b16 %v120
    %v248 = vunpack.c.h.b16 %v120
    %v249 = vunpack.c.l.b16 %v121
    %v250 = vunpack.c.h.b16 %v121
    %v251 = vunpack.c.l.b16 %v122
    %v252 = vunpack.c.h.b16 %v122
    %v253 = vpack.c.b16 %v229, %v221
    %v254 = vpack.c.b16 %v230, %v222
    %v255 = vpack.c.b16 %v231, %v223
    %v256 = vpack.c.b16 %v232, %v224
    %v257 = vpack.c.b16 %v233, %v225
    %v258 = vpack.c.b16 %v234, %v226
    %v259 = vpack.c.b16 %v235, %v227
    %v260 = vpack.c.b16 %v236, %v228
    %v261 = vpack.c.b16 %v245, %v237
    %v262 = vpack.c.b16 %v246, %v238
    %v263 = vpack.c.b16 %v247, %v239
    %v264 = vpack.c.b16 %v248, %v240
    %v265 = vpack.c.b16 %v249, %v241
    %v266 = vpack.c.b16 %v250, %v242
    %v267 = vpack.c.b16 %v251, %v243
    %v268 = vpack.c.b16 %v252, %v244
    %vm285 = vcmask 261120
    %v287 = vsel %vm285, %v197, 0
    %v290 = vsel %vm285, %v198, 0
    %v293 = vsel %vm285, %v199, 0
    %v296 = vsel %vm285, %v200, 0
    %v299 = vsel %vm285, %v201, 0
    %v302 = vsel %vm285, %v202, 0
    %v305 = vsel %vm285, %v203, 0
    %v308 = vsel %vm285, %v204, 0
    %310 = vmatprep.subr.bf16.mxu0 0
    %311 = vmatpush1.bf16.msra.mxu0 0
    %312 = vmatprep.subr.bf16.mxu0 0
    %313 = vmatpush1.bf16.msra.mxu0 0
    %314 = vmatprep.subr.bf16.mxu0 0
    %315 = vmatpush1.bf16.msra.mxu0 0
    %316 = vmatprep.subr.bf16.mxu0 0
    %317 = vmatpush1.bf16.msra.mxu0 0
    %318 = vmatprep.subr.bf16.mxu0 0
    %319 = vmatpush1.bf16.msra.mxu0 0
    %320 = vmatprep.subr.bf16.mxu0 0
    %321 = vmatpush1.bf16.msra.mxu0 0
    %322 = vmatprep.subr.bf16.mxu0 %v262
    %323 = vmatpush1.bf16.msra.mxu0 %v261
    %324 = vmatprep.subr.bf16.mxu0 %v254
    %325 = vmatpush1.bf16.msra.mxu0 %v253
    %326 = vmatprep.subr.bf16.mxu0 0
    %327 = vmatpush2.bf16.msra.mxu0 0
    %328 = vmatprep.subr.bf16.mxu0 0
    %329 = vmatpush2.bf16.msra.mxu0 0
    %330 = vmatprep.subr.bf16.mxu0 0
    %331 = vmatpush2.bf16.msra.mxu0 0
    %332 = vmatprep.subr.bf16.mxu0 0
    %333 = vmatpush2.bf16.msra.mxu0 0
    %334 = vmatprep.subr.bf16.mxu0 0
    %335 = vmatpush2.bf16.msra.mxu0 0
    %336 = vmatprep.subr.bf16.mxu0 0
    %337 = vmatpush2.bf16.msra.mxu0 0
    %338 = vmatprep.subr.bf16.mxu0 0
    %339 = vmatpush2.bf16.msra.mxu0 0
    %340 = vmatprep.subr.bf16.mxu0 0
    %341 = vmatpush2.bf16.msra.mxu0 0
    %342 = vmatprep.mubr.bf16.mxu0 0
    %343 = vmatmul.mubr.bf16.gmra.mxu0 %v287
    %v344 = vpop.f32.mrf.mxu0
    %v345 = vadd.f32 %v128, %v344
    %v346 = vpop.f32.mrf.mxu0
    %v347 = vadd.f32 %v132, %v346
    %v348 = vpop.f32.mrf.mxu0
    %v349 = vadd.f32 %v128, %v348
    %v350 = vpop.f32.mrf.mxu0
    %v351 = vadd.f32 %v132, %v350
    %352 = vmatprep.mubr.bf16.mxu0 0
    %353 = vmatmul.mubr.bf16.gmra.mxu0 %v290
    %v354 = vpop.f32.mrf.mxu0
    %v355 = vadd.f32 %v128, %v354
    %v356 = vpop.f32.mrf.mxu0
    %v357 = vadd.f32 %v132, %v356
    %v358 = vpop.f32.mrf.mxu0
    %v359 = vadd.f32 %v128, %v358
    %v360 = vpop.f32.mrf.mxu0
    %v361 = vadd.f32 %v132, %v360
    %362 = vmatprep.mubr.bf16.mxu0 0
    %363 = vmatmul.mubr.bf16.gmra.mxu0 %v293
    %v364 = vpop.f32.mrf.mxu0
    %v365 = vadd.f32 %v128, %v364
    %v366 = vpop.f32.mrf.mxu0
    %v367 = vadd.f32 %v132, %v366
    %v368 = vpop.f32.mrf.mxu0
    %v369 = vadd.f32 %v128, %v368
    %v370 = vpop.f32.mrf.mxu0
    %v371 = vadd.f32 %v132, %v370
    %372 = vmatprep.mubr.bf16.mxu0 0
    %373 = vmatmul.mubr.bf16.gmra.mxu0 %v296
    %v374 = vpop.f32.mrf.mxu0
    %v375 = vadd.f32 %v128, %v374
    %v376 = vpop.f32.mrf.mxu0
    %v377 = vadd.f32 %v132, %v376
    %v378 = vpop.f32.mrf.mxu0
    %v379 = vadd.f32 %v128, %v378
    %v380 = vpop.f32.mrf.mxu0
    %v381 = vadd.f32 %v132, %v380
    %382 = vmatprep.mubr.bf16.mxu0 0
    %383 = vmatmul.mubr.bf16.gmra.mxu0 %v299
    %v384 = vpop.f32.mrf.mxu0
    %v385 = vadd.f32 %v128, %v384
    %v386 = vpop.f32.mrf.mxu0
    %v387 = vadd.f32 %v132, %v386
    %v388 = vpop.f32.mrf.mxu0
    %v389 = vadd.f32 %v128, %v388
    %v390 = vpop.f32.mrf.mxu0
    %v391 = vadd.f32 %v132, %v390
    %392 = vmatprep.mubr.bf16.mxu0 0
    %393 = vmatmul.mubr.bf16.gmra.mxu0 %v302
    %v394 = vpop.f32.mrf.mxu0
    %v395 = vadd.f32 %v128, %v394
    %v396 = vpop.f32.mrf.mxu0
    %v397 = vadd.f32 %v132, %v396
    %v398 = vpop.f32.mrf.mxu0
    %v399 = vadd.f32 %v128, %v398
    %v400 = vpop.f32.mrf.mxu0
    %v401 = vadd.f32 %v132, %v400
    %402 = vmatprep.mubr.bf16.mxu0 0
    %403 = vmatmul.mubr.bf16.gmra.mxu0 %v305
    %v404 = vpop.f32.mrf.mxu0
    %v405 = vadd.f32 %v128, %v404
    %v406 = vpop.f32.mrf.mxu0
    %v407 = vadd.f32 %v132, %v406
    %v408 = vpop.f32.mrf.mxu0
    %v409 = vadd.f32 %v128, %v408
    %v410 = vpop.f32.mrf.mxu0
    %v411 = vadd.f32 %v132, %v410
    %412 = vmatprep.mubr.bf16.mxu0 0
    %413 = vmatmul.mubr.bf16.gmra.mxu0 %v308
    %v414 = vpop.f32.mrf.mxu0
    %v415 = vadd.f32 %v128, %v414
    %v416 = vpop.f32.mrf.mxu0
    %v417 = vadd.f32 %v132, %v416
    %v418 = vpop.f32.mrf.mxu0
    %v419 = vadd.f32 %v128, %v418
    %v420 = vpop.f32.mrf.mxu0
    %v421 = vadd.f32 %v132, %v420
    %422 = vdwg.mxu0
    %423 = vmatprep.subr.bf16.mxu0 0
    %424 = vmatpush1.bf16.msra.mxu0 0
    %425 = vmatprep.subr.bf16.mxu0 0
    %426 = vmatpush1.bf16.msra.mxu0 0
    %427 = vmatprep.subr.bf16.mxu0 0
    %428 = vmatpush1.bf16.msra.mxu0 0
    %429 = vmatprep.subr.bf16.mxu0 0
    %430 = vmatpush1.bf16.msra.mxu0 0
    %431 = vmatprep.subr.bf16.mxu0 0
    %432 = vmatpush1.bf16.msra.mxu0 0
    %433 = vmatprep.subr.bf16.mxu0 0
    %434 = vmatpush1.bf16.msra.mxu0 0
    %435 = vmatprep.subr.bf16.mxu0 %v264
    %436 = vmatpush1.bf16.msra.mxu0 %v263
    %437 = vmatprep.subr.bf16.mxu0 %v256
    %438 = vmatpush1.bf16.msra.mxu0 %v255
    %439 = vmatprep.subr.bf16.mxu0 0
    %440 = vmatpush2.bf16.msra.mxu0 0
    %441 = vmatprep.subr.bf16.mxu0 0
    %442 = vmatpush2.bf16.msra.mxu0 0
    %443 = vmatprep.subr.bf16.mxu0 0
    %444 = vmatpush2.bf16.msra.mxu0 0
    %445 = vmatprep.subr.bf16.mxu0 0
    %446 = vmatpush2.bf16.msra.mxu0 0
    %447 = vmatprep.subr.bf16.mxu0 0
    %448 = vmatpush2.bf16.msra.mxu0 0
    %449 = vmatprep.subr.bf16.mxu0 0
    %450 = vmatpush2.bf16.msra.mxu0 0
    %451 = vmatprep.subr.bf16.mxu0 0
    %452 = vmatpush2.bf16.msra.mxu0 0
    %453 = vmatprep.subr.bf16.mxu0 0
    %454 = vmatpush2.bf16.msra.mxu0 0
    %455 = vmatprep.mubr.bf16.mxu0 0
    %456 = vmatmul.mubr.bf16.gmra.mxu0 %v287
    %v457 = vpop.f32.mrf.mxu0
    %v458 = vadd.f32 %v136, %v457
    %v459 = vpop.f32.mrf.mxu0
    %v460 = vadd.f32 %v140, %v459
    %v461 = vpop.f32.mrf.mxu0
    %v462 = vadd.f32 %v136, %v461
    %v463 = vpop.f32.mrf.mxu0
    %v464 = vadd.f32 %v140, %v463
    %465 = vmatprep.mubr.bf16.mxu0 0
    %466 = vmatmul.mubr.bf16.gmra.mxu0 %v290
    %v467 = vpop.f32.mrf.mxu0
    %v468 = vadd.f32 %v136, %v467
    %v469 = vpop.f32.mrf.mxu0
    %v470 = vadd.f32 %v140, %v469
    %v471 = vpop.f32.mrf.mxu0
    %v472 = vadd.f32 %v136, %v471
    %v473 = vpop.f32.mrf.mxu0
    %v474 = vadd.f32 %v140, %v473
    %475 = vmatprep.mubr.bf16.mxu0 0
    %476 = vmatmul.mubr.bf16.gmra.mxu0 %v293
    %v477 = vpop.f32.mrf.mxu0
    %v478 = vadd.f32 %v136, %v477
    %v479 = vpop.f32.mrf.mxu0
    %v480 = vadd.f32 %v140, %v479
    %v481 = vpop.f32.mrf.mxu0
    %v482 = vadd.f32 %v136, %v481
    %v483 = vpop.f32.mrf.mxu0
    %v484 = vadd.f32 %v140, %v483
    %485 = vmatprep.mubr.bf16.mxu0 0
    %486 = vmatmul.mubr.bf16.gmra.mxu0 %v296
    %v487 = vpop.f32.mrf.mxu0
    %v488 = vadd.f32 %v136, %v487
    %v489 = vpop.f32.mrf.mxu0
    %v490 = vadd.f32 %v140, %v489
    %v491 = vpop.f32.mrf.mxu0
    %v492 = vadd.f32 %v136, %v491
    %v493 = vpop.f32.mrf.mxu0
    %v494 = vadd.f32 %v140, %v493
    %495 = vmatprep.mubr.bf16.mxu0 0
    %496 = vmatmul.mubr.bf16.gmra.mxu0 %v299
    %v497 = vpop.f32.mrf.mxu0
    %v498 = vadd.f32 %v136, %v497
    %v499 = vpop.f32.mrf.mxu0
    %v500 = vadd.f32 %v140, %v499
    %v501 = vpop.f32.mrf.mxu0
    %v502 = vadd.f32 %v136, %v501
    %v503 = vpop.f32.mrf.mxu0
    %v504 = vadd.f32 %v140, %v503
    %505 = vmatprep.mubr.bf16.mxu0 0
    %506 = vmatmul.mubr.bf16.gmra.mxu0 %v302
    %v507 = vpop.f32.mrf.mxu0
    %v508 = vadd.f32 %v136, %v507
    %v509 = vpop.f32.mrf.mxu0
    %v510 = vadd.f32 %v140, %v509
    %v511 = vpop.f32.mrf.mxu0
    %v512 = vadd.f32 %v136, %v511
    %v513 = vpop.f32.mrf.mxu0
    %v514 = vadd.f32 %v140, %v513
    %515 = vmatprep.mubr.bf16.mxu0 0
    %516 = vmatmul.mubr.bf16.gmra.mxu0 %v305
    %v517 = vpop.f32.mrf.mxu0
    %v518 = vadd.f32 %v136, %v517
    %v519 = vpop.f32.mrf.mxu0
    %v520 = vadd.f32 %v140, %v519
    %v521 = vpop.f32.mrf.mxu0
    %v522 = vadd.f32 %v136, %v521
    %v523 = vpop.f32.mrf.mxu0
    %v524 = vadd.f32 %v140, %v523
    %525 = vmatprep.mubr.bf16.mxu0 0
    %526 = vmatmul.mubr.bf16.gmra.mxu0 %v308
    %v527 = vpop.f32.mrf.mxu0
    %v528 = vadd.f32 %v136, %v527
    %v529 = vpop.f32.mrf.mxu0
    %v530 = vadd.f32 %v140, %v529
    %v531 = vpop.f32.mrf.mxu0
    %v532 = vadd.f32 %v136, %v531
    %v533 = vpop.f32.mrf.mxu0
    %v534 = vadd.f32 %v140, %v533
    %535 = vdwg.mxu0
    %536 = vmatprep.subr.bf16.mxu0 0
    %537 = vmatpush1.bf16.msra.mxu0 0
    %538 = vmatprep.subr.bf16.mxu0 0
    %539 = vmatpush1.bf16.msra.mxu0 0
    %540 = vmatprep.subr.bf16.mxu0 0
    %541 = vmatpush1.bf16.msra.mxu0 0
    %542 = vmatprep.subr.bf16.mxu0 0
    %543 = vmatpush1.bf16.msra.mxu0 0
    %544 = vmatprep.subr.bf16.mxu0 0
    %545 = vmatpush1.bf16.msra.mxu0 0
    %546 = vmatprep.subr.bf16.mxu0 0
    %547 = vmatpush1.bf16.msra.mxu0 0
    %548 = vmatprep.subr.bf16.mxu0 %v266
    %549 = vmatpush1.bf16.msra.mxu0 %v265
    %550 = vmatprep.subr.bf16.mxu0 %v258
    %551 = vmatpush1.bf16.msra.mxu0 %v257
    %552 = vmatprep.subr.bf16.mxu0 0
    %553 = vmatpush2.bf16.msra.mxu0 0
    %554 = vmatprep.subr.bf16.mxu0 0
    %555 = vmatpush2.bf16.msra.mxu0 0
    %556 = vmatprep.subr.bf16.mxu0 0
    %557 = vmatpush2.bf16.msra.mxu0 0
    %558 = vmatprep.subr.bf16.mxu0 0
    %559 = vmatpush2.bf16.msra.mxu0 0
    %560 = vmatprep.subr.bf16.mxu0 0
    %561 = vmatpush2.bf16.msra.mxu0 0
    %562 = vmatprep.subr.bf16.mxu0 0
    %563 = vmatpush2.bf16.msra.mxu0 0
    %564 = vmatprep.subr.bf16.mxu0 0
    %565 = vmatpush2.bf16.msra.mxu0 0
    %566 = vmatprep.subr.bf16.mxu0 0
    %567 = vmatpush2.bf16.msra.mxu0 0
    %568 = vmatprep.mubr.bf16.mxu0 0
    %569 = vmatmul.mubr.bf16.gmra.mxu0 %v287
    %v570 = vpop.f32.mrf.mxu0
    %v571 = vadd.f32 %v144, %v570
    %v572 = vpop.f32.mrf.mxu0
    %v573 = vadd.f32 %v148, %v572
    %v574 = vpop.f32.mrf.mxu0
    %v575 = vadd.f32 %v144, %v574
    %v576 = vpop.f32.mrf.mxu0
    %v577 = vadd.f32 %v148, %v576
    %578 = vmatprep.mubr.bf16.mxu0 0
    %579 = vmatmul.mubr.bf16.gmra.mxu0 %v290
    %v580 = vpop.f32.mrf.mxu0
    %v581 = vadd.f32 %v144, %v580
    %v582 = vpop.f32.mrf.mxu0
    %v583 = vadd.f32 %v148, %v582
    %v584 = vpop.f32.mrf.mxu0
    %v585 = vadd.f32 %v144, %v584
    %v586 = vpop.f32.mrf.mxu0
    %v587 = vadd.f32 %v148, %v586
    %588 = vmatprep.mubr.bf16.mxu0 0
    %589 = vmatmul.mubr.bf16.gmra.mxu0 %v293
    %v590 = vpop.f32.mrf.mxu0
    %v591 = vadd.f32 %v144, %v590
    %v592 = vpop.f32.mrf.mxu0
    %v593 = vadd.f32 %v148, %v592
    %v594 = vpop.f32.mrf.mxu0
    %v595 = vadd.f32 %v144, %v594
    %v596 = vpop.f32.mrf.mxu0
    %v597 = vadd.f32 %v148, %v596
    %598 = vmatprep.mubr.bf16.mxu0 0
    %599 = vmatmul.mubr.bf16.gmra.mxu0 %v296
    %v600 = vpop.f32.mrf.mxu0
    %v601 = vadd.f32 %v144, %v600
    %v602 = vpop.f32.mrf.mxu0
    %v603 = vadd.f32 %v148, %v602
    %v604 = vpop.f32.mrf.mxu0
    %v605 = vadd.f32 %v144, %v604
    %v606 = vpop.f32.mrf.mxu0
    %v607 = vadd.f32 %v148, %v606
    %608 = vmatprep.mubr.bf16.mxu0 0
    %609 = vmatmul.mubr.bf16.gmra.mxu0 %v299
    %v610 = vpop.f32.mrf.mxu0
    %v611 = vadd.f32 %v144, %v610
    %v612 = vpop.f32.mrf.mxu0
    %v613 = vadd.f32 %v148, %v612
    %v614 = vpop.f32.mrf.mxu0
    %v615 = vadd.f32 %v144, %v614
    %v616 = vpop.f32.mrf.mxu0
    %v617 = vadd.f32 %v148, %v616
    %618 = vmatprep.mubr.bf16.mxu0 0
    %619 = vmatmul.mubr.bf16.gmra.mxu0 %v302
    %v620 = vpop.f32.mrf.mxu0
    %v621 = vadd.f32 %v144, %v620
    %v622 = vpop.f32.mrf.mxu0
    %v623 = vadd.f32 %v148, %v622
    %v624 = vpop.f32.mrf.mxu0
    %v625 = vadd.f32 %v144, %v624
    %v626 = vpop.f32.mrf.mxu0
    %v627 = vadd.f32 %v148, %v626
    %628 = vmatprep.mubr.bf16.mxu0 0
    %629 = vmatmul.mubr.bf16.gmra.mxu0 %v305
    %v630 = vpop.f32.mrf.mxu0
    %v631 = vadd.f32 %v144, %v630
    %v632 = vpop.f32.mrf.mxu0
    %v633 = vadd.f32 %v148, %v632
    %v634 = vpop.f32.mrf.mxu0
    %v635 = vadd.f32 %v144, %v634
    %v636 = vpop.f32.mrf.mxu0
    %v637 = vadd.f32 %v148, %v636
    %638 = vmatprep.mubr.bf16.mxu0 0
    %639 = vmatmul.mubr.bf16.gmra.mxu0 %v308
    %v640 = vpop.f32.mrf.mxu0
    %v641 = vadd.f32 %v144, %v640
    %v642 = vpop.f32.mrf.mxu0
    %v643 = vadd.f32 %v148, %v642
    %v644 = vpop.f32.mrf.mxu0
    %v645 = vadd.f32 %v144, %v644
    %v646 = vpop.f32.mrf.mxu0
    %v647 = vadd.f32 %v148, %v646
    %648 = vdwg.mxu0
    %649 = vmatprep.subr.bf16.mxu0 0
    %650 = vmatpush1.bf16.msra.mxu0 0
    %651 = vmatprep.subr.bf16.mxu0 0
    %652 = vmatpush1.bf16.msra.mxu0 0
    %653 = vmatprep.subr.bf16.mxu0 0
    %654 = vmatpush1.bf16.msra.mxu0 0
    %655 = vmatprep.subr.bf16.mxu0 0
    %656 = vmatpush1.bf16.msra.mxu0 0
    %657 = vmatprep.subr.bf16.mxu0 0
    %658 = vmatpush1.bf16.msra.mxu0 0
    %659 = vmatprep.subr.bf16.mxu0 0
    %660 = vmatpush1.bf16.msra.mxu0 0
    %661 = vmatprep.subr.bf16.mxu0 %v268
    %662 = vmatpush1.bf16.msra.mxu0 %v267
    %663 = vmatprep.subr.bf16.mxu0 %v260
    %664 = vmatpush1.bf16.msra.mxu0 %v259
    %665 = vmatprep.subr.bf16.mxu0 0
    %666 = vmatpush2.bf16.msra.mxu0 0
    %667 = vmatprep.subr.bf16.mxu0 0
    %668 = vmatpush2.bf16.msra.mxu0 0
    %669 = vmatprep.subr.bf16.mxu0 0
    %670 = vmatpush2.bf16.msra.mxu0 0
    %671 = vmatprep.subr.bf16.mxu0 0
    %672 = vmatpush2.bf16.msra.mxu0 0
    %673 = vmatprep.subr.bf16.mxu0 0
    %674 = vmatpush2.bf16.msra.mxu0 0
    %675 = vmatprep.subr.bf16.mxu0 0
    %676 = vmatpush2.bf16.msra.mxu0 0
    %677 = vmatprep.subr.bf16.mxu0 0
    %678 = vmatpush2.bf16.msra.mxu0 0
    %679 = vmatprep.subr.bf16.mxu0 0
    %680 = vmatpush2.bf16.msra.mxu0 0
    %681 = vmatprep.mubr.bf16.mxu0 0
    %682 = vmatmul.mubr.bf16.gmra.mxu0 %v287
    %v683 = vpop.f32.mrf.mxu0
    %v684 = vadd.f32 %v152, %v683
    %v685 = vpop.f32.mrf.mxu0
    %v686 = vadd.f32 %v156, %v685
    %v687 = vpop.f32.mrf.mxu0
    %v688 = vadd.f32 %v152, %v687
    %v689 = vpop.f32.mrf.mxu0
    %v690 = vadd.f32 %v156, %v689
    %691 = vmatprep.mubr.bf16.mxu0 0
    %692 = vmatmul.mubr.bf16.gmra.mxu0 %v290
    %v693 = vpop.f32.mrf.mxu0
    %v694 = vadd.f32 %v152, %v693
    %v695 = vpop.f32.mrf.mxu0
    %v696 = vadd.f32 %v156, %v695
    %v697 = vpop.f32.mrf.mxu0
    %v698 = vadd.f32 %v152, %v697
    %v699 = vpop.f32.mrf.mxu0
    %v700 = vadd.f32 %v156, %v699
    %701 = vmatprep.mubr.bf16.mxu0 0
    %702 = vmatmul.mubr.bf16.gmra.mxu0 %v293
    %v703 = vpop.f32.mrf.mxu0
    %v704 = vadd.f32 %v152, %v703
    %v705 = vpop.f32.mrf.mxu0
    %v706 = vadd.f32 %v156, %v705
    %v707 = vpop.f32.mrf.mxu0
    %v708 = vadd.f32 %v152, %v707
    %v709 = vpop.f32.mrf.mxu0
    %v710 = vadd.f32 %v156, %v709
    %711 = vmatprep.mubr.bf16.mxu0 0
    %712 = vmatmul.mubr.bf16.gmra.mxu0 %v296
    %v713 = vpop.f32.mrf.mxu0
    %v714 = vadd.f32 %v152, %v713
    %v715 = vpop.f32.mrf.mxu0
    %v716 = vadd.f32 %v156, %v715
    %v717 = vpop.f32.mrf.mxu0
    %v718 = vadd.f32 %v152, %v717
    %v719 = vpop.f32.mrf.mxu0
    %v720 = vadd.f32 %v156, %v719
    %721 = vmatprep.mubr.bf16.mxu0 0
    %722 = vmatmul.mubr.bf16.gmra.mxu0 %v299
    %v723 = vpop.f32.mrf.mxu0
    %v724 = vadd.f32 %v152, %v723
    %v725 = vpop.f32.mrf.mxu0
    %v726 = vadd.f32 %v156, %v725
    %v727 = vpop.f32.mrf.mxu0
    %v728 = vadd.f32 %v152, %v727
    %v729 = vpop.f32.mrf.mxu0
    %v730 = vadd.f32 %v156, %v729
    %731 = vmatprep.mubr.bf16.mxu0 0
    %732 = vmatmul.mubr.bf16.gmra.mxu0 %v302
    %v733 = vpop.f32.mrf.mxu0
    %v734 = vadd.f32 %v152, %v733
    %v735 = vpop.f32.mrf.mxu0
    %v736 = vadd.f32 %v156, %v735
    %v737 = vpop.f32.mrf.mxu0
    %v738 = vadd.f32 %v152, %v737
    %v739 = vpop.f32.mrf.mxu0
    %v740 = vadd.f32 %v156, %v739
    %741 = vmatprep.mubr.bf16.mxu0 0
    %742 = vmatmul.mubr.bf16.gmra.mxu0 %v305
    %v743 = vpop.f32.mrf.mxu0
    %v744 = vadd.f32 %v152, %v743
    %v745 = vpop.f32.mrf.mxu0
    %v746 = vadd.f32 %v156, %v745
    %v747 = vpop.f32.mrf.mxu0
    %v748 = vadd.f32 %v152, %v747
    %v749 = vpop.f32.mrf.mxu0
    %v750 = vadd.f32 %v156, %v749
    %751 = vmatprep.mubr.bf16.mxu0 0
    %752 = vmatmul.mubr.bf16.gmra.mxu0 %v308
    %v753 = vpop.f32.mrf.mxu0
    %v754 = vadd.f32 %v152, %v753
    %v755 = vpop.f32.mrf.mxu0
    %v756 = vadd.f32 %v156, %v755
    %v757 = vpop.f32.mrf.mxu0
    %v758 = vadd.f32 %v152, %v757
    %v759 = vpop.f32.mrf.mxu0
    %v760 = vadd.f32 %v156, %v759
    %761 = vdwg.mxu0
    %v762 = vmul.f32 %v345, %v345
    %v763 = vmul.f32 %v347, %v347
    %v764 = vmul.f32 %v458, %v458
    %v765 = vmul.f32 %v460, %v460
    %v766 = vmul.f32 %v571, %v571
    %v767 = vmul.f32 %v573, %v573
    %v768 = vmul.f32 %v684, %v684
    %v769 = vmul.f32 %v686, %v686
    %v770 = vmul.f32 %v349, %v349
    %v771 = vmul.f32 %v351, %v351
    %v772 = vmul.f32 %v462, %v462
    %v773 = vmul.f32 %v464, %v464
    %v774 = vmul.f32 %v575, %v575
    %v775 = vmul.f32 %v577, %v577
    %v776 = vmul.f32 %v688, %v688
    %v777 = vmul.f32 %v690, %v690
    %v778 = vmul.f32 %v355, %v355
    %v779 = vmul.f32 %v357, %v357
    %v780 = vmul.f32 %v468, %v468
    %v781 = vmul.f32 %v470, %v470
    %v782 = vmul.f32 %v581, %v581
    %v783 = vmul.f32 %v583, %v583
    %v784 = vmul.f32 %v694, %v694
    %v785 = vmul.f32 %v696, %v696
    %v786 = vmul.f32 %v359, %v359
    %v787 = vmul.f32 %v361, %v361
    %v788 = vmul.f32 %v472, %v472
    %v789 = vmul.f32 %v474, %v474
    %v790 = vmul.f32 %v585, %v585
    %v791 = vmul.f32 %v587, %v587
    %v792 = vmul.f32 %v698, %v698
    %v793 = vmul.f32 %v700, %v700
    %v794 = vmul.f32 %v365, %v365
    %v795 = vmul.f32 %v367, %v367
    %v796 = vmul.f32 %v478, %v478
    %v797 = vmul.f32 %v480, %v480
    %v798 = vmul.f32 %v591, %v591
    %v799 = vmul.f32 %v593, %v593
    %v800 = vmul.f32 %v704, %v704
    %v801 = vmul.f32 %v706, %v706
    %v802 = vmul.f32 %v369, %v369
    %v803 = vmul.f32 %v371, %v371
    %v804 = vmul.f32 %v482, %v482
    %v805 = vmul.f32 %v484, %v484
    %v806 = vmul.f32 %v595, %v595
    %v807 = vmul.f32 %v597, %v597
    %v808 = vmul.f32 %v708, %v708
    %v809 = vmul.f32 %v710, %v710
    %v810 = vmul.f32 %v375, %v375
    %v811 = vmul.f32 %v377, %v377
    %v812 = vmul.f32 %v488, %v488
    %v813 = vmul.f32 %v490, %v490
    %v814 = vmul.f32 %v601, %v601
    %v815 = vmul.f32 %v603, %v603
    %v816 = vmul.f32 %v714, %v714
    %v817 = vmul.f32 %v716, %v716
    %v818 = vmul.f32 %v379, %v379
    %v819 = vmul.f32 %v381, %v381
    %v820 = vmul.f32 %v492, %v492
    %v821 = vmul.f32 %v494, %v494
    %v822 = vmul.f32 %v605, %v605
    %v823 = vmul.f32 %v607, %v607
    %v824 = vmul.f32 %v718, %v718
    %v825 = vmul.f32 %v720, %v720
    %v826 = vmul.f32 %v385, %v385
    %v827 = vmul.f32 %v387, %v387
    %v828 = vmul.f32 %v498, %v498
    %v829 = vmul.f32 %v500, %v500
    %v830 = vmul.f32 %v611, %v611
    %v831 = vmul.f32 %v613, %v613
    %v832 = vmul.f32 %v724, %v724
    %v833 = vmul.f32 %v726, %v726
    %v834 = vmul.f32 %v389, %v389
    %v835 = vmul.f32 %v391, %v391
    %v836 = vmul.f32 %v502, %v502
    %v837 = vmul.f32 %v504, %v504
    %v838 = vmul.f32 %v615, %v615
    %v839 = vmul.f32 %v617, %v617
    %v840 = vmul.f32 %v728, %v728
    %v841 = vmul.f32 %v730, %v730
    %v842 = vmul.f32 %v395, %v395
    %v843 = vmul.f32 %v397, %v397
    %v844 = vmul.f32 %v508, %v508
    %v845 = vmul.f32 %v510, %v510
    %v846 = vmul.f32 %v621, %v621
    %v847 = vmul.f32 %v623, %v623
    %v848 = vmul.f32 %v734, %v734
    %v849 = vmul.f32 %v736, %v736
    %v850 = vmul.f32 %v399, %v399
    %v851 = vmul.f32 %v401, %v401
    %v852 = vmul.f32 %v512, %v512
    %v853 = vmul.f32 %v514, %v514
    %v854 = vmul.f32 %v625, %v625
    %v855 = vmul.f32 %v627, %v627
    %v856 = vmul.f32 %v738, %v738
    %v857 = vmul.f32 %v740, %v740
    %v858 = vmul.f32 %v405, %v405
    %v859 = vmul.f32 %v407, %v407
    %v860 = vmul.f32 %v518, %v518
    %v861 = vmul.f32 %v520, %v520
    %v862 = vmul.f32 %v631, %v631
    %v863 = vmul.f32 %v633, %v633
    %v864 = vmul.f32 %v744, %v744
    %v865 = vmul.f32 %v746, %v746
    %v866 = vmul.f32 %v409, %v409
    %v867 = vmul.f32 %v411, %v411
    %v868 = vmul.f32 %v522, %v522
    %v869 = vmul.f32 %v524, %v524
    %v870 = vmul.f32 %v635, %v635
    %v871 = vmul.f32 %v637, %v637
    %v872 = vmul.f32 %v748, %v748
    %v873 = vmul.f32 %v750, %v750
    %v874 = vmul.f32 %v415, %v415
    %v875 = vmul.f32 %v417, %v417
    %v876 = vmul.f32 %v528, %v528
    %v877 = vmul.f32 %v530, %v530
    %v878 = vmul.f32 %v641, %v641
    %v879 = vmul.f32 %v643, %v643
    %v880 = vmul.f32 %v754, %v754
    %v881 = vmul.f32 %v756, %v756
    %v882 = vmul.f32 %v419, %v419
    %v883 = vmul.f32 %v421, %v421
    %v884 = vmul.f32 %v532, %v532
    %v885 = vmul.f32 %v534, %v534
    %v886 = vmul.f32 %v645, %v645
    %v887 = vmul.f32 %v647, %v647
    %v888 = vmul.f32 %v758, %v758
    %v889 = vmul.f32 %v760, %v760
    %v890 = vmul.f32 %v345, %v762
    %v891 = vmul.f32 %v347, %v763
    %v892 = vmul.f32 %v458, %v764
    %v893 = vmul.f32 %v460, %v765
    %v894 = vmul.f32 %v571, %v766
    %v895 = vmul.f32 %v573, %v767
    %v896 = vmul.f32 %v684, %v768
    %v897 = vmul.f32 %v686, %v769
    %v898 = vmul.f32 %v349, %v770
    %v899 = vmul.f32 %v351, %v771
    %v900 = vmul.f32 %v462, %v772
    %v901 = vmul.f32 %v464, %v773
    %v902 = vmul.f32 %v575, %v774
    %v903 = vmul.f32 %v577, %v775
    %v904 = vmul.f32 %v688, %v776
    %v905 = vmul.f32 %v690, %v777
    %v906 = vmul.f32 %v355, %v778
    %v907 = vmul.f32 %v357, %v779
    %v908 = vmul.f32 %v468, %v780
    %v909 = vmul.f32 %v470, %v781
    %v910 = vmul.f32 %v581, %v782
    %v911 = vmul.f32 %v583, %v783
    %v912 = vmul.f32 %v694, %v784
    %v913 = vmul.f32 %v696, %v785
    %v914 = vmul.f32 %v359, %v786
    %v915 = vmul.f32 %v361, %v787
    %v916 = vmul.f32 %v472, %v788
    %v917 = vmul.f32 %v474, %v789
    %v918 = vmul.f32 %v585, %v790
    %v919 = vmul.f32 %v587, %v791
    %v920 = vmul.f32 %v698, %v792
    %v921 = vmul.f32 %v700, %v793
    %v922 = vmul.f32 %v365, %v794
    %v923 = vmul.f32 %v367, %v795
    %v924 = vmul.f32 %v478, %v796
    %v925 = vmul.f32 %v480, %v797
    %v926 = vmul.f32 %v591, %v798
    %v927 = vmul.f32 %v593, %v799
    %v928 = vmul.f32 %v704, %v800
    %v929 = vmul.f32 %v706, %v801
    %v930 = vmul.f32 %v369, %v802
    %v931 = vmul.f32 %v371, %v803
    %v932 = vmul.f32 %v482, %v804
    %v933 = vmul.f32 %v484, %v805
    %v934 = vmul.f32 %v595, %v806
    %v935 = vmul.f32 %v597, %v807
    %v936 = vmul.f32 %v708, %v808
    %v937 = vmul.f32 %v710, %v809
    %v938 = vmul.f32 %v375, %v810
    %v939 = vmul.f32 %v377, %v811
    %v940 = vmul.f32 %v488, %v812
    %v941 = vmul.f32 %v490, %v813
    %v942 = vmul.f32 %v601, %v814
    %v943 = vmul.f32 %v603, %v815
    %v944 = vmul.f32 %v714, %v816
    %v945 = vmul.f32 %v716, %v817
    %v946 = vmul.f32 %v379, %v818
    %v947 = vmul.f32 %v381, %v819
    %v948 = vmul.f32 %v492, %v820
    %v949 = vmul.f32 %v494, %v821
    %v950 = vmul.f32 %v605, %v822
    %v951 = vmul.f32 %v607, %v823
    %v952 = vmul.f32 %v718, %v824
    %v953 = vmul.f32 %v720, %v825
    %v954 = vmul.f32 %v385, %v826
    %v955 = vmul.f32 %v387, %v827
    %v956 = vmul.f32 %v498, %v828
    %v957 = vmul.f32 %v500, %v829
    %v958 = vmul.f32 %v611, %v830
    %v959 = vmul.f32 %v613, %v831
    %v960 = vmul.f32 %v724, %v832
    %v961 = vmul.f32 %v726, %v833
    %v962 = vmul.f32 %v389, %v834
    %v963 = vmul.f32 %v391, %v835
    %v964 = vmul.f32 %v502, %v836
    %v965 = vmul.f32 %v504, %v837
    %v966 = vmul.f32 %v615, %v838
    %v967 = vmul.f32 %v617, %v839
    %v968 = vmul.f32 %v728, %v840
    %v969 = vmul.f32 %v730, %v841
    %v970 = vmul.f32 %v395, %v842
    %v971 = vmul.f32 %v397, %v843
    %v972 = vmul.f32 %v508, %v844
    %v973 = vmul.f32 %v510, %v845
    %v974 = vmul.f32 %v621, %v846
    %v975 = vmul.f32 %v623, %v847
    %v976 = vmul.f32 %v734, %v848
    %v977 = vmul.f32 %v736, %v849
    %v978 = vmul.f32 %v399, %v850
    %v979 = vmul.f32 %v401, %v851
    %v980 = vmul.f32 %v512, %v852
    %v981 = vmul.f32 %v514, %v853
    %v982 = vmul.f32 %v625, %v854
    %v983 = vmul.f32 %v627, %v855
    %v984 = vmul.f32 %v738, %v856
    %v985 = vmul.f32 %v740, %v857
    %v986 = vmul.f32 %v405, %v858
    %v987 = vmul.f32 %v407, %v859
    %v988 = vmul.f32 %v518, %v860
    %v989 = vmul.f32 %v520, %v861
    %v990 = vmul.f32 %v631, %v862
    %v991 = vmul.f32 %v633, %v863
    %v992 = vmul.f32 %v744, %v864
    %v993 = vmul.f32 %v746, %v865
    %v994 = vmul.f32 %v409, %v866
    %v995 = vmul.f32 %v411, %v867
    %v996 = vmul.f32 %v522, %v868
    %v997 = vmul.f32 %v524, %v869
    %v998 = vmul.f32 %v635, %v870
    %v999 = vmul.f32 %v637, %v871
    %v1000 = vmul.f32 %v748, %v872
    %v1001 = vmul.f32 %v750, %v873
    %v1002 = vmul.f32 %v415, %v874
    %v1003 = vmul.f32 %v417, %v875
    %v1004 = vmul.f32 %v528, %v876
    %v1005 = vmul.f32 %v530, %v877
    %v1006 = vmul.f32 %v641, %v878
    %v1007 = vmul.f32 %v643, %v879
    %v1008 = vmul.f32 %v754, %v880
    %v1009 = vmul.f32 %v756, %v881
    %v1010 = vmul.f32 %v419, %v882
    %v1011 = vmul.f32 %v421, %v883
    %v1012 = vmul.f32 %v532, %v884
    %v1013 = vmul.f32 %v534, %v885
    %v1014 = vmul.f32 %v645, %v886
    %v1015 = vmul.f32 %v647, %v887
    %v1016 = vmul.f32 %v758, %v888
    %v1017 = vmul.f32 %v760, %v889
    %v1018 = vmul.f32 %v890, 0.044715
    %v1019 = vmul.f32 %v891, 0.044715
    %v1020 = vmul.f32 %v892, 0.044715
    %v1021 = vmul.f32 %v893, 0.044715
    %v1022 = vmul.f32 %v894, 0.044715
    %v1023 = vmul.f32 %v895, 0.044715
    %v1024 = vmul.f32 %v896, 0.044715
    %v1025 = vmul.f32 %v897, 0.044715
    %v1026 = vmul.f32 %v898, 0.044715
    %v1027 = vmul.f32 %v899, 0.044715
    %v1028 = vmul.f32 %v900, 0.044715
    %v1029 = vmul.f32 %v901, 0.044715
    %v1030 = vmul.f32 %v902, 0.044715
    %v1031 = vmul.f32 %v903, 0.044715
    %v1032 = vmul.f32 %v904, 0.044715
    %v1033 = vmul.f32 %v905, 0.044715
    %v1034 = vmul.f32 %v906, 0.044715
    %v1035 = vmul.f32 %v907, 0.044715
    %v1036 = vmul.f32 %v908, 0.044715
    %v1037 = vmul.f32 %v909, 0.044715
    %v1038 = vmul.f32 %v910, 0.044715
    %v1039 = vmul.f32 %v911, 0.044715
    %v1040 = vmul.f32 %v912, 0.044715
    %v1041 = vmul.f32 %v913, 0.044715
    %v1042 = vmul.f32 %v914, 0.044715
    %v1043 = vmul.f32 %v915, 0.044715
    %v1044 = vmul.f32 %v916, 0.044715
    %v1045 = vmul.f32 %v917, 0.044715
    %v1046 = vmul.f32 %v918, 0.044715
    %v1047 = vmul.f32 %v919, 0.044715
    %v1048 = vmul.f32 %v920, 0.044715
    %v1049 = vmul.f32 %v921, 0.044715
    %v1050 = vmul.f32 %v922, 0.044715
    %v1051 = vmul.f32 %v923, 0.044715
    %v1052 = vmul.f32 %v924, 0.044715
    %v1053 = vmul.f32 %v925, 0.044715
    %v1054 = vmul.f32 %v926, 0.044715
    %v1055 = vmul.f32 %v927, 0.044715
    %v1056 = vmul.f32 %v928, 0.044715
    %v1057 = vmul.f32 %v929, 0.044715
    %v1058 = vmul.f32 %v930, 0.044715
    %v1059 = vmul.f32 %v931, 0.044715
    %v1060 = vmul.f32 %v932, 0.044715
    %v1061 = vmul.f32 %v933, 0.044715
    %v1062 = vmul.f32 %v934, 0.044715
    %v1063 = vmul.f32 %v935, 0.044715
    %v1064 = vmul.f32 %v936, 0.044715
    %v1065 = vmul.f32 %v937, 0.044715
    %v1066 = vmul.f32 %v938, 0.044715
    %v1067 = vmul.f32 %v939, 0.044715
    %v1068 = vmul.f32 %v940, 0.044715
    %v1069 = vmul.f32 %v941, 0.044715
    %v1070 = vmul.f32 %v942, 0.044715
    %v1071 = vmul.f32 %v943, 0.044715
    %v1072 = vmul.f32 %v944, 0.044715
    %v1073 = vmul.f32 %v945, 0.044715
    %v1074 = vmul.f32 %v946, 0.044715
    %v1075 = vmul.f32 %v947, 0.044715
    %v1076 = vmul.f32 %v948, 0.044715
    %v1077 = vmul.f32 %v949, 0.044715
    %v1078 = vmul.f32 %v950, 0.044715
    %v1079 = vmul.f32 %v951, 0.044715
    %v1080 = vmul.f32 %v952, 0.044715
    %v1081 = vmul.f32 %v953, 0.044715
    %v1082 = vmul.f32 %v954, 0.044715
    %v1083 = vmul.f32 %v955, 0.044715
    %v1084 = vmul.f32 %v956, 0.044715
    %v1085 = vmul.f32 %v957, 0.044715
    %v1086 = vmul.f32 %v958, 0.044715
    %v1087 = vmul.f32 %v959, 0.044715
    %v1088 = vmul.f32 %v960, 0.044715
    %v1089 = vmul.f32 %v961, 0.044715
    %v1090 = vmul.f32 %v962, 0.044715
    %v1091 = vmul.f32 %v963, 0.044715
    %v1092 = vmul.f32 %v964, 0.044715
    %v1093 = vmul.f32 %v965, 0.044715
    %v1094 = vmul.f32 %v966, 0.044715
    %v1095 = vmul.f32 %v967, 0.044715
    %v1096 = vmul.f32 %v968, 0.044715
    %v1097 = vmul.f32 %v969, 0.044715
    %v1098 = vmul.f32 %v970, 0.044715
    %v1099 = vmul.f32 %v971, 0.044715
    %v1100 = vmul.f32 %v972, 0.044715
    %v1101 = vmul.f32 %v973, 0.044715
    %v1102 = vmul.f32 %v974, 0.044715
    %v1103 = vmul.f32 %v975, 0.044715
    %v1104 = vmul.f32 %v976, 0.044715
    %v1105 = vmul.f32 %v977, 0.044715
    %v1106 = vmul.f32 %v978, 0.044715
    %v1107 = vmul.f32 %v979, 0.044715
    %v1108 = vmul.f32 %v980, 0.044715
    %v1109 = vmul.f32 %v981, 0.044715
    %v1110 = vmul.f32 %v982, 0.044715
    %v1111 = vmul.f32 %v983, 0.044715
    %v1112 = vmul.f32 %v984, 0.044715
    %v1113 = vmul.f32 %v985, 0.044715
    %v1114 = vmul.f32 %v986, 0.044715
    %v1115 = vmul.f32 %v987, 0.044715
    %v1116 = vmul.f32 %v988, 0.044715
    %v1117 = vmul.f32 %v989, 0.044715
    %v1118 = vmul.f32 %v990, 0.044715
    %v1119 = vmul.f32 %v991, 0.044715
    %v1120 = vmul.f32 %v992, 0.044715
    %v1121 = vmul.f32 %v993, 0.044715
    %v1122 = vmul.f32 %v994, 0.044715
    %v1123 = vmul.f32 %v995, 0.044715
    %v1124 = vmul.f32 %v996, 0.044715
    %v1125 = vmul.f32 %v997, 0.044715
    %v1126 = vmul.f32 %v998, 0.044715
    %v1127 = vmul.f32 %v999, 0.044715
    %v1128 = vmul.f32 %v1000, 0.044715
    %v1129 = vmul.f32 %v1001, 0.044715
    %v1130 = vmul.f32 %v1002, 0.044715
    %v1131 = vmul.f32 %v1003, 0.044715
    %v1132 = vmul.f32 %v1004, 0.044715
    %v1133 = vmul.f32 %v1005, 0.044715
    %v1134 = vmul.f32 %v1006, 0.044715
    %v1135 = vmul.f32 %v1007, 0.044715
    %v1136 = vmul.f32 %v1008, 0.044715
    %v1137 = vmul.f32 %v1009, 0.044715
    %v1138 = vmul.f32 %v1010, 0.044715
    %v1139 = vmul.f32 %v1011, 0.044715
    %v1140 = vmul.f32 %v1012, 0.044715
    %v1141 = vmul.f32 %v1013, 0.044715
    %v1142 = vmul.f32 %v1014, 0.044715
    %v1143 = vmul.f32 %v1015, 0.044715
    %v1144 = vmul.f32 %v1016, 0.044715
    %v1145 = vmul.f32 %v1017, 0.044715
    %v1146 = vadd.f32 %v345, %v1018
    %v1147 = vadd.f32 %v347, %v1019
    %v1148 = vadd.f32 %v458, %v1020
    %v1149 = vadd.f32 %v460, %v1021
    %v1150 = vadd.f32 %v571, %v1022
    %v1151 = vadd.f32 %v573, %v1023
    %v1152 = vadd.f32 %v684, %v1024
    %v1153 = vadd.f32 %v686, %v1025
    %v1154 = vadd.f32 %v349, %v1026
    %v1155 = vadd.f32 %v351, %v1027
    %v1156 = vadd.f32 %v462, %v1028
    %v1157 = vadd.f32 %v464, %v1029
    %v1158 = vadd.f32 %v575, %v1030
    %v1159 = vadd.f32 %v577, %v1031
    %v1160 = vadd.f32 %v688, %v1032
    %v1161 = vadd.f32 %v690, %v1033
    %v1162 = vadd.f32 %v355, %v1034
    %v1163 = vadd.f32 %v357, %v1035
    %v1164 = vadd.f32 %v468, %v1036
    %v1165 = vadd.f32 %v470, %v1037
    %v1166 = vadd.f32 %v581, %v1038
    %v1167 = vadd.f32 %v583, %v1039
    %v1168 = vadd.f32 %v694, %v1040
    %v1169 = vadd.f32 %v696, %v1041
    %v1170 = vadd.f32 %v359, %v1042
    %v1171 = vadd.f32 %v361, %v1043
    %v1172 = vadd.f32 %v472, %v1044
    %v1173 = vadd.f32 %v474, %v1045
    %v1174 = vadd.f32 %v585, %v1046
    %v1175 = vadd.f32 %v587, %v1047
    %v1176 = vadd.f32 %v698, %v1048
    %v1177 = vadd.f32 %v700, %v1049
    %v1178 = vadd.f32 %v365, %v1050
    %v1179 = vadd.f32 %v367, %v1051
    %v1180 = vadd.f32 %v478, %v1052
    %v1181 = vadd.f32 %v480, %v1053
    %v1182 = vadd.f32 %v591, %v1054
    %v1183 = vadd.f32 %v593, %v1055
    %v1184 = vadd.f32 %v704, %v1056
    %v1185 = vadd.f32 %v706, %v1057
    %v1186 = vadd.f32 %v369, %v1058
    %v1187 = vadd.f32 %v371, %v1059
    %v1188 = vadd.f32 %v482, %v1060
    %v1189 = vadd.f32 %v484, %v1061
    %v1190 = vadd.f32 %v595, %v1062
    %v1191 = vadd.f32 %v597, %v1063
    %v1192 = vadd.f32 %v708, %v1064
    %v1193 = vadd.f32 %v710, %v1065
    %v1194 = vadd.f32 %v375, %v1066
    %v1195 = vadd.f32 %v377, %v1067
    %v1196 = vadd.f32 %v488, %v1068
    %v1197 = vadd.f32 %v490, %v1069
    %v1198 = vadd.f32 %v601, %v1070
    %v1199 = vadd.f32 %v603, %v1071
    %v1200 = vadd.f32 %v714, %v1072
    %v1201 = vadd.f32 %v716, %v1073
    %v1202 = vadd.f32 %v379, %v1074
    %v1203 = vadd.f32 %v381, %v1075
    %v1204 = vadd.f32 %v492, %v1076
    %v1205 = vadd.f32 %v494, %v1077
    %v1206 = vadd.f32 %v605, %v1078
    %v1207 = vadd.f32 %v607, %v1079
    %v1208 = vadd.f32 %v718, %v1080
    %v1209 = vadd.f32 %v720, %v1081
    %v1210 = vadd.f32 %v385, %v1082
    %v1211 = vadd.f32 %v387, %v1083
    %v1212 = vadd.f32 %v498, %v1084
    %v1213 = vadd.f32 %v500, %v1085
    %v1214 = vadd.f32 %v611, %v1086
    %v1215 = vadd.f32 %v613, %v1087
    %v1216 = vadd.f32 %v724, %v1088
    %v1217 = vadd.f32 %v726, %v1089
    %v1218 = vadd.f32 %v389, %v1090
    %v1219 = vadd.f32 %v391, %v1091
    %v1220 = vadd.f32 %v502, %v1092
    %v1221 = vadd.f32 %v504, %v1093
    %v1222 = vadd.f32 %v615, %v1094
    %v1223 = vadd.f32 %v617, %v1095
    %v1224 = vadd.f32 %v728, %v1096
    %v1225 = vadd.f32 %v730, %v1097
    %v1226 = vadd.f32 %v395, %v1098
    %v1227 = vadd.f32 %v397, %v1099
    %v1228 = vadd.f32 %v508, %v1100
    %v1229 = vadd.f32 %v510, %v1101
    %v1230 = vadd.f32 %v621, %v1102
    %v1231 = vadd.f32 %v623, %v1103
    %v1232 = vadd.f32 %v734, %v1104
    %v1233 = vadd.f32 %v736, %v1105
    %v1234 = vadd.f32 %v399, %v1106
    %v1235 = vadd.f32 %v401, %v1107
    %v1236 = vadd.f32 %v512, %v1108
    %v1237 = vadd.f32 %v514, %v1109
    %v1238 = vadd.f32 %v625, %v1110
    %v1239 = vadd.f32 %v627, %v1111
    %v1240 = vadd.f32 %v738, %v1112
    %v1241 = vadd.f32 %v740, %v1113
    %v1242 = vadd.f32 %v405, %v1114
    %v1243 = vadd.f32 %v407, %v1115
    %v1244 = vadd.f32 %v518, %v1116
    %v1245 = vadd.f32 %v520, %v1117
    %v1246 = vadd.f32 %v631, %v1118
    %v1247 = vadd.f32 %v633, %v1119
    %v1248 = vadd.f32 %v744, %v1120
    %v1249 = vadd.f32 %v746, %v1121
    %v1250 = vadd.f32 %v409, %v1122
    %v1251 = vadd.f32 %v411, %v1123
    %v1252 = vadd.f32 %v522, %v1124
    %v1253 = vadd.f32 %v524, %v1125
    %v1254 = vadd.f32 %v635, %v1126
    %v1255 = vadd.f32 %v637, %v1127
    %v1256 = vadd.f32 %v748, %v1128
    %v1257 = vadd.f32 %v750, %v1129
    %v1258 = vadd.f32 %v415, %v1130
    %v1259 = vadd.f32 %v417, %v1131
    %v1260 = vadd.f32 %v528, %v1132
    %v1261 = vadd.f32 %v530, %v1133
    %v1262 = vadd.f32 %v641, %v1134
    %v1263 = vadd.f32 %v643, %v1135
    %v1264 = vadd.f32 %v754, %v1136
    %v1265 = vadd.f32 %v756, %v1137
    %v1266 = vadd.f32 %v419, %v1138
    %v1267 = vadd.f32 %v421, %v1139
    %v1268 = vadd.f32 %v532, %v1140
    %v1269 = vadd.f32 %v534, %v1141
    %v1270 = vadd.f32 %v645, %v1142
    %v1271 = vadd.f32 %v647, %v1143
    %v1272 = vadd.f32 %v758, %v1144
    %v1273 = vadd.f32 %v760, %v1145
    %v1274 = vmul.f32 %v1146, 0.7978846
    %v1275 = vmul.f32 %v1147, 0.7978846
    %v1276 = vmul.f32 %v1148, 0.7978846
    %v1277 = vmul.f32 %v1149, 0.7978846
    %v1278 = vmul.f32 %v1150, 0.7978846
    %v1279 = vmul.f32 %v1151, 0.7978846
    %v1280 = vmul.f32 %v1152, 0.7978846
    %v1281 = vmul.f32 %v1153, 0.7978846
    %v1282 = vmul.f32 %v1154, 0.7978846
    %v1283 = vmul.f32 %v1155, 0.7978846
    %v1284 = vmul.f32 %v1156, 0.7978846
    %v1285 = vmul.f32 %v1157, 0.7978846
    %v1286 = vmul.f32 %v1158, 0.7978846
    %v1287 = vmul.f32 %v1159, 0.7978846
    %v1288 = vmul.f32 %v1160, 0.7978846
    %v1289 = vmul.f32 %v1161, 0.7978846
    %v1290 = vmul.f32 %v1162, 0.7978846
    %v1291 = vmul.f32 %v1163, 0.7978846
    %v1292 = vmul.f32 %v1164, 0.7978846
    %v1293 = vmul.f32 %v1165, 0.7978846
    %v1294 = vmul.f32 %v1166, 0.7978846
    %v1295 = vmul.f32 %v1167, 0.7978846
    %v1296 = vmul.f32 %v1168, 0.7978846
    %v1297 = vmul.f32 %v1169, 0.7978846
    %v1298 = vmul.f32 %v1170, 0.7978846
    %v1299 = vmul.f32 %v1171, 0.7978846
    %v1300 = vmul.f32 %v1172, 0.7978846
    %v1301 = vmul.f32 %v1173, 0.7978846
    %v1302 = vmul.f32 %v1174, 0.7978846
    %v1303 = vmul.f32 %v1175, 0.7978846
    %v1304 = vmul.f32 %v1176, 0.7978846
    %v1305 = vmul.f32 %v1177, 0.7978846
    %v1306 = vmul.f32 %v1178, 0.7978846
    %v1307 = vmul.f32 %v1179, 0.7978846
    %v1308 = vmul.f32 %v1180, 0.7978846
    %v1309 = vmul.f32 %v1181, 0.7978846
    %v1310 = vmul.f32 %v1182, 0.7978846
    %v1311 = vmul.f32 %v1183, 0.7978846
    %v1312 = vmul.f32 %v1184, 0.7978846
    %v1313 = vmul.f32 %v1185, 0.7978846
    %v1314 = vmul.f32 %v1186, 0.7978846
    %v1315 = vmul.f32 %v1187, 0.7978846
    %v1316 = vmul.f32 %v1188, 0.7978846
    %v1317 = vmul.f32 %v1189, 0.7978846
    %v1318 = vmul.f32 %v1190, 0.7978846
    %v1319 = vmul.f32 %v1191, 0.7978846
    %v1320 = vmul.f32 %v1192, 0.7978846
    %v1321 = vmul.f32 %v1193, 0.7978846
    %v1322 = vmul.f32 %v1194, 0.7978846
    %v1323 = vmul.f32 %v1195, 0.7978846
    %v1324 = vmul.f32 %v1196, 0.7978846
    %v1325 = vmul.f32 %v1197, 0.7978846
    %v1326 = vmul.f32 %v1198, 0.7978846
    %v1327 = vmul.f32 %v1199, 0.7978846
    %v1328 = vmul.f32 %v1200, 0.7978846
    %v1329 = vmul.f32 %v1201, 0.7978846
    %v1330 = vmul.f32 %v1202, 0.7978846
    %v1331 = vmul.f32 %v1203, 0.7978846
    %v1332 = vmul.f32 %v1204, 0.7978846
    %v1333 = vmul.f32 %v1205, 0.7978846
    %v1334 = vmul.f32 %v1206, 0.7978846
    %v1335 = vmul.f32 %v1207, 0.7978846
    %v1336 = vmul.f32 %v1208, 0.7978846
    %v1337 = vmul.f32 %v1209, 0.7978846
    %v1338 = vmul.f32 %v1210, 0.7978846
    %v1339 = vmul.f32 %v1211, 0.7978846
    %v1340 = vmul.f32 %v1212, 0.7978846
    %v1341 = vmul.f32 %v1213, 0.7978846
    %v1342 = vmul.f32 %v1214, 0.7978846
    %v1343 = vmul.f32 %v1215, 0.7978846
    %v1344 = vmul.f32 %v1216, 0.7978846
    %v1345 = vmul.f32 %v1217, 0.7978846
    %v1346 = vmul.f32 %v1218, 0.7978846
    %v1347 = vmul.f32 %v1219, 0.7978846
    %v1348 = vmul.f32 %v1220, 0.7978846
    %v1349 = vmul.f32 %v1221, 0.7978846
    %v1350 = vmul.f32 %v1222, 0.7978846
    %v1351 = vmul.f32 %v1223, 0.7978846
    %v1352 = vmul.f32 %v1224, 0.7978846
    %v1353 = vmul.f32 %v1225, 0.7978846
    %v1354 = vmul.f32 %v1226, 0.7978846
    %v1355 = vmul.f32 %v1227, 0.7978846
    %v1356 = vmul.f32 %v1228, 0.7978846
    %v1357 = vmul.f32 %v1229, 0.7978846
    %v1358 = vmul.f32 %v1230, 0.7978846
    %v1359 = vmul.f32 %v1231, 0.7978846
    %v1360 = vmul.f32 %v1232, 0.7978846
    %v1361 = vmul.f32 %v1233, 0.7978846
    %v1362 = vmul.f32 %v1234, 0.7978846
    %v1363 = vmul.f32 %v1235, 0.7978846
    %v1364 = vmul.f32 %v1236, 0.7978846
    %v1365 = vmul.f32 %v1237, 0.7978846
    %v1366 = vmul.f32 %v1238, 0.7978846
    %v1367 = vmul.f32 %v1239, 0.7978846
    %v1368 = vmul.f32 %v1240, 0.7978846
    %v1369 = vmul.f32 %v1241, 0.7978846
    %v1370 = vmul.f32 %v1242, 0.7978846
    %v1371 = vmul.f32 %v1243, 0.7978846
    %v1372 = vmul.f32 %v1244, 0.7978846
    %v1373 = vmul.f32 %v1245, 0.7978846
    %v1374 = vmul.f32 %v1246, 0.7978846
    %v1375 = vmul.f32 %v1247, 0.7978846
    %v1376 = vmul.f32 %v1248, 0.7978846
    %v1377 = vmul.f32 %v1249, 0.7978846
    %v1378 = vmul.f32 %v1250, 0.7978846
    %v1379 = vmul.f32 %v1251, 0.7978846
    %v1380 = vmul.f32 %v1252, 0.7978846
    %v1381 = vmul.f32 %v1253, 0.7978846
    %v1382 = vmul.f32 %v1254, 0.7978846
    %v1383 = vmul.f32 %v1255, 0.7978846
    %v1384 = vmul.f32 %v1256, 0.7978846
    %v1385 = vmul.f32 %v1257, 0.7978846
    %v1386 = vmul.f32 %v1258, 0.7978846
    %v1387 = vmul.f32 %v1259, 0.7978846
    %v1388 = vmul.f32 %v1260, 0.7978846
    %v1389 = vmul.f32 %v1261, 0.7978846
    %v1390 = vmul.f32 %v1262, 0.7978846
    %v1391 = vmul.f32 %v1263, 0.7978846
    %v1392 = vmul.f32 %v1264, 0.7978846
    %v1393 = vmul.f32 %v1265, 0.7978846
    %v1394 = vmul.f32 %v1266, 0.7978846
    %v1395 = vmul.f32 %v1267, 0.7978846
    %v1396 = vmul.f32 %v1268, 0.7978846
    %v1397 = vmul.f32 %v1269, 0.7978846
    %v1398 = vmul.f32 %v1270, 0.7978846
    %v1399 = vmul.f32 %v1271, 0.7978846
    %v1400 = vmul.f32 %v1272, 0.7978846
    %v1401 = vmul.f32 %v1273, 0.7978846
    %v1402 = vtanh.pop %v1274
    %v1403 = vtanh.pop %v1275
    %v1404 = vtanh.pop %v1276
    %v1405 = vtanh.pop %v1277
    %v1406 = vtanh.pop %v1278
    %v1407 = vtanh.pop %v1279
    %v1408 = vtanh.pop %v1280
    %v1409 = vtanh.pop %v1281
    %v1410 = vtanh.pop %v1282
    %v1411 = vtanh.pop %v1283
    %v1412 = vtanh.pop %v1284
    %v1413 = vtanh.pop %v1285
    %v1414 = vtanh.pop %v1286
    %v1415 = vtanh.pop %v1287
    %v1416 = vtanh.pop %v1288
    %v1417 = vtanh.pop %v1289
    %v1418 = vtanh.pop %v1290
    %v1419 = vtanh.pop %v1291
    %v1420 = vtanh.pop %v1292
    %v1421 = vtanh.pop %v1293
    %v1422 = vtanh.pop %v1294
    %v1423 = vtanh.pop %v1295
    %v1424 = vtanh.pop %v1296
    %v1425 = vtanh.pop %v1297
    %v1426 = vtanh.pop %v1298
    %v1427 = vtanh.pop %v1299
    %v1428 = vtanh.pop %v1300
    %v1429 = vtanh.pop %v1301
    %v1430 = vtanh.pop %v1302
    %v1431 = vtanh.pop %v1303
    %v1432 = vtanh.pop %v1304
    %v1433 = vtanh.pop %v1305
    %v1434 = vtanh.pop %v1306
    %v1435 = vtanh.pop %v1307
    %v1436 = vtanh.pop %v1308
    %v1437 = vtanh.pop %v1309
    %v1438 = vtanh.pop %v1310
    %v1439 = vtanh.pop %v1311
    %v1440 = vtanh.pop %v1312
    %v1441 = vtanh.pop %v1313
    %v1442 = vtanh.pop %v1314
    %v1443 = vtanh.pop %v1315
    %v1444 = vtanh.pop %v1316
    %v1445 = vtanh.pop %v1317
    %v1446 = vtanh.pop %v1318
    %v1447 = vtanh.pop %v1319
    %v1448 = vtanh.pop %v1320
    %v1449 = vtanh.pop %v1321
    %v1450 = vtanh.pop %v1322
    %v1451 = vtanh.pop %v1323
    %v1452 = vtanh.pop %v1324
    %v1453 = vtanh.pop %v1325
    %v1454 = vtanh.pop %v1326
    %v1455 = vtanh.pop %v1327
    %v1456 = vtanh.pop %v1328
    %v1457 = vtanh.pop %v1329
    %v1458 = vtanh.pop %v1330
    %v1459 = vtanh.pop %v1331
    %v1460 = vtanh.pop %v1332
    %v1461 = vtanh.pop %v1333
    %v1462 = vtanh.pop %v1334
    %v1463 = vtanh.pop %v1335
    %v1464 = vtanh.pop %v1336
    %v1465 = vtanh.pop %v1337
    %v1466 = vtanh.pop %v1338
    %v1467 = vtanh.pop %v1339
    %v1468 = vtanh.pop %v1340
    %v1469 = vtanh.pop %v1341
    %v1470 = vtanh.pop %v1342
    %v1471 = vtanh.pop %v1343
    %v1472 = vtanh.pop %v1344
    %v1473 = vtanh.pop %v1345
    %v1474 = vtanh.pop %v1346
    %v1475 = vtanh.pop %v1347
    %v1476 = vtanh.pop %v1348
    %v1477 = vtanh.pop %v1349
    %v1478 = vtanh.pop %v1350
    %v1479 = vtanh.pop %v1351
    %v1480 = vtanh.pop %v1352
    %v1481 = vtanh.pop %v1353
    %v1482 = vtanh.pop %v1354
    %v1483 = vtanh.pop %v1355
    %v1484 = vtanh.pop %v1356
    %v1485 = vtanh.pop %v1357
    %v1486 = vtanh.pop %v1358
    %v1487 = vtanh.pop %v1359
    %v1488 = vtanh.pop %v1360
    %v1489 = vtanh.pop %v1361
    %v1490 = vtanh.pop %v1362
    %v1491 = vtanh.pop %v1363
    %v1492 = vtanh.pop %v1364
    %v1493 = vtanh.pop %v1365
    %v1494 = vtanh.pop %v1366
    %v1495 = vtanh.pop %v1367
    %v1496 = vtanh.pop %v1368
    %v1497 = vtanh.pop %v1369
    %v1498 = vtanh.pop %v1370
    %v1499 = vtanh.pop %v1371
    %v1500 = vtanh.pop %v1372
    %v1501 = vtanh.pop %v1373
    %v1502 = vtanh.pop %v1374
    %v1503 = vtanh.pop %v1375
    %v1504 = vtanh.pop %v1376
    %v1505 = vtanh.pop %v1377
    %v1506 = vtanh.pop %v1378
    %v1507 = vtanh.pop %v1379
    %v1508 = vtanh.pop %v1380
    %v1509 = vtanh.pop %v1381
    %v1510 = vtanh.pop %v1382
    %v1511 = vtanh.pop %v1383
    %v1512 = vtanh.pop %v1384
    %v1513 = vtanh.pop %v1385
    %v1514 = vtanh.pop %v1386
    %v1515 = vtanh.pop %v1387
    %v1516 = vtanh.pop %v1388
    %v1517 = vtanh.pop %v1389
    %v1518 = vtanh.pop %v1390
    %v1519 = vtanh.pop %v1391
    %v1520 = vtanh.pop %v1392
    %v1521 = vtanh.pop %v1393
    %v1522 = vtanh.pop %v1394
    %v1523 = vtanh.pop %v1395
    %v1524 = vtanh.pop %v1396
    %v1525 = vtanh.pop %v1397
    %v1526 = vtanh.pop %v1398
    %v1527 = vtanh.pop %v1399
    %v1528 = vtanh.pop %v1400
    %v1529 = vtanh.pop %v1401
    %v1530 = vadd.f32 %v1402, 1.0
    %v1531 = vadd.f32 %v1403, 1.0
    %v1532 = vadd.f32 %v1404, 1.0
    %v1533 = vadd.f32 %v1405, 1.0
    %v1534 = vadd.f32 %v1406, 1.0
    %v1535 = vadd.f32 %v1407, 1.0
    %v1536 = vadd.f32 %v1408, 1.0
    %v1537 = vadd.f32 %v1409, 1.0
    %v1538 = vadd.f32 %v1410, 1.0
    %v1539 = vadd.f32 %v1411, 1.0
    %v1540 = vadd.f32 %v1412, 1.0
    %v1541 = vadd.f32 %v1413, 1.0
    %v1542 = vadd.f32 %v1414, 1.0
    %v1543 = vadd.f32 %v1415, 1.0
    %v1544 = vadd.f32 %v1416, 1.0
    %v1545 = vadd.f32 %v1417, 1.0
    %v1546 = vadd.f32 %v1418, 1.0
    %v1547 = vadd.f32 %v1419, 1.0
    %v1548 = vadd.f32 %v1420, 1.0
    %v1549 = vadd.f32 %v1421, 1.0
    %v1550 = vadd.f32 %v1422, 1.0
    %v1551 = vadd.f32 %v1423, 1.0
    %v1552 = vadd.f32 %v1424, 1.0
    %v1553 = vadd.f32 %v1425, 1.0
    %v1554 = vadd.f32 %v1426, 1.0
    %v1555 = vadd.f32 %v1427, 1.0
    %v1556 = vadd.f32 %v1428, 1.0
    %v1557 = vadd.f32 %v1429, 1.0
    %v1558 = vadd.f32 %v1430, 1.0
    %v1559 = vadd.f32 %v1431, 1.0
    %v1560 = vadd.f32 %v1432, 1.0
    %v1561 = vadd.f32 %v1433, 1.0
    %v1562 = vadd.f32 %v1434, 1.0
    %v1563 = vadd.f32 %v1435, 1.0
    %v1564 = vadd.f32 %v1436, 1.0
    %v1565 = vadd.f32 %v1437, 1.0
    %v1566 = vadd.f32 %v1438, 1.0
    %v1567 = vadd.f32 %v1439, 1.0
    %v1568 = vadd.f32 %v1440, 1.0
    %v1569 = vadd.f32 %v1441, 1.0
    %v1570 = vadd.f32 %v1442, 1.0
    %v1571 = vadd.f32 %v1443, 1.0
    %v1572 = vadd.f32 %v1444, 1.0
    %v1573 = vadd.f32 %v1445, 1.0
    %v1574 = vadd.f32 %v1446, 1.0
    %v1575 = vadd.f32 %v1447, 1.0
    %v1576 = vadd.f32 %v1448, 1.0
    %v1577 = vadd.f32 %v1449, 1.0
    %v1578 = vadd.f32 %v1450, 1.0
    %v1579 = vadd.f32 %v1451, 1.0
    %v1580 = vadd.f32 %v1452, 1.0
    %v1581 = vadd.f32 %v1453, 1.0
    %v1582 = vadd.f32 %v1454, 1.0
    %v1583 = vadd.f32 %v1455, 1.0
    %v1584 = vadd.f32 %v1456, 1.0
    %v1585 = vadd.f32 %v1457, 1.0
    %v1586 = vadd.f32 %v1458, 1.0
    %v1587 = vadd.f32 %v1459, 1.0
    %v1588 = vadd.f32 %v1460, 1.0
    %v1589 = vadd.f32 %v1461, 1.0
    %v1590 = vadd.f32 %v1462, 1.0
    %v1591 = vadd.f32 %v1463, 1.0
    %v1592 = vadd.f32 %v1464, 1.0
    %v1593 = vadd.f32 %v1465, 1.0
    %v1594 = vadd.f32 %v1466, 1.0
    %v1595 = vadd.f32 %v1467, 1.0
    %v1596 = vadd.f32 %v1468, 1.0
    %v1597 = vadd.f32 %v1469, 1.0
    %v1598 = vadd.f32 %v1470, 1.0
    %v1599 = vadd.f32 %v1471, 1.0
    %v1600 = vadd.f32 %v1472, 1.0
    %v1601 = vadd.f32 %v1473, 1.0
    %v1602 = vadd.f32 %v1474, 1.0
    %v1603 = vadd.f32 %v1475, 1.0
    %v1604 = vadd.f32 %v1476, 1.0
    %v1605 = vadd.f32 %v1477, 1.0
    %v1606 = vadd.f32 %v1478, 1.0
    %v1607 = vadd.f32 %v1479, 1.0
    %v1608 = vadd.f32 %v1480, 1.0
    %v1609 = vadd.f32 %v1481, 1.0
    %v1610 = vadd.f32 %v1482, 1.0
    %v1611 = vadd.f32 %v1483, 1.0
    %v1612 = vadd.f32 %v1484, 1.0
    %v1613 = vadd.f32 %v1485, 1.0
    %v1614 = vadd.f32 %v1486, 1.0
    %v1615 = vadd.f32 %v1487, 1.0
    %v1616 = vadd.f32 %v1488, 1.0
    %v1617 = vadd.f32 %v1489, 1.0
    %v1618 = vadd.f32 %v1490, 1.0
    %v1619 = vadd.f32 %v1491, 1.0
    %v1620 = vadd.f32 %v1492, 1.0
    %v1621 = vadd.f32 %v1493, 1.0
    %v1622 = vadd.f32 %v1494, 1.0
    %v1623 = vadd.f32 %v1495, 1.0
    %v1624 = vadd.f32 %v1496, 1.0
    %v1625 = vadd.f32 %v1497, 1.0
    %v1626 = vadd.f32 %v1498, 1.0
    %v1627 = vadd.f32 %v1499, 1.0
    %v1628 = vadd.f32 %v1500, 1.0
    %v1629 = vadd.f32 %v1501, 1.0
    %v1630 = vadd.f32 %v1502, 1.0
    %v1631 = vadd.f32 %v1503, 1.0
    %v1632 = vadd.f32 %v1504, 1.0
    %v1633 = vadd.f32 %v1505, 1.0
    %v1634 = vadd.f32 %v1506, 1.0
    %v1635 = vadd.f32 %v1507, 1.0
    %v1636 = vadd.f32 %v1508, 1.0
    %v1637 = vadd.f32 %v1509, 1.0
    %v1638 = vadd.f32 %v1510, 1.0
    %v1639 = vadd.f32 %v1511, 1.0
    %v1640 = vadd.f32 %v1512, 1.0
    %v1641 = vadd.f32 %v1513, 1.0
    %v1642 = vadd.f32 %v1514, 1.0
    %v1643 = vadd.f32 %v1515, 1.0
    %v1644 = vadd.f32 %v1516, 1.0
    %v1645 = vadd.f32 %v1517, 1.0
    %v1646 = vadd.f32 %v1518, 1.0
    %v1647 = vadd.f32 %v1519, 1.0
    %v1648 = vadd.f32 %v1520, 1.0
    %v1649 = vadd.f32 %v1521, 1.0
    %v1650 = vadd.f32 %v1522, 1.0
    %v1651 = vadd.f32 %v1523, 1.0
    %v1652 = vadd.f32 %v1524, 1.0
    %v1653 = vadd.f32 %v1525, 1.0
    %v1654 = vadd.f32 %v1526, 1.0
    %v1655 = vadd.f32 %v1527, 1.0
    %v1656 = vadd.f32 %v1528, 1.0
    %v1657 = vadd.f32 %v1529, 1.0
    %v1658 = vmul.f32 %v1530, 0.5
    %v1659 = vmul.f32 %v1531, 0.5
    %v1660 = vmul.f32 %v1532, 0.5
    %v1661 = vmul.f32 %v1533, 0.5
    %v1662 = vmul.f32 %v1534, 0.5
    %v1663 = vmul.f32 %v1535, 0.5
    %v1664 = vmul.f32 %v1536, 0.5
    %v1665 = vmul.f32 %v1537, 0.5
    %v1666 = vmul.f32 %v1538, 0.5
    %v1667 = vmul.f32 %v1539, 0.5
    %v1668 = vmul.f32 %v1540, 0.5
    %v1669 = vmul.f32 %v1541, 0.5
    %v1670 = vmul.f32 %v1542, 0.5
    %v1671 = vmul.f32 %v1543, 0.5
    %v1672 = vmul.f32 %v1544, 0.5
    %v1673 = vmul.f32 %v1545, 0.5
    %v1674 = vmul.f32 %v1546, 0.5
    %v1675 = vmul.f32 %v1547, 0.5
    %v1676 = vmul.f32 %v1548, 0.5
    %v1677 = vmul.f32 %v1549, 0.5
    %v1678 = vmul.f32 %v1550, 0.5
    %v1679 = vmul.f32 %v1551, 0.5
    %v1680 = vmul.f32 %v1552, 0.5
    %v1681 = vmul.f32 %v1553, 0.5
    %v1682 = vmul.f32 %v1554, 0.5
    %v1683 = vmul.f32 %v1555, 0.5
    %v1684 = vmul.f32 %v1556, 0.5
    %v1685 = vmul.f32 %v1557, 0.5
    %v1686 = vmul.f32 %v1558, 0.5
    %v1687 = vmul.f32 %v1559, 0.5
    %v1688 = vmul.f32 %v1560, 0.5
    %v1689 = vmul.f32 %v1561, 0.5
    %v1690 = vmul.f32 %v1562, 0.5
    %v1691 = vmul.f32 %v1563, 0.5
    %v1692 = vmul.f32 %v1564, 0.5
    %v1693 = vmul.f32 %v1565, 0.5
    %v1694 = vmul.f32 %v1566, 0.5
    %v1695 = vmul.f32 %v1567, 0.5
    %v1696 = vmul.f32 %v1568, 0.5
    %v1697 = vmul.f32 %v1569, 0.5
    %v1698 = vmul.f32 %v1570, 0.5
    %v1699 = vmul.f32 %v1571, 0.5
    %v1700 = vmul.f32 %v1572, 0.5
    %v1701 = vmul.f32 %v1573, 0.5
    %v1702 = vmul.f32 %v1574, 0.5
    %v1703 = vmul.f32 %v1575, 0.5
    %v1704 = vmul.f32 %v1576, 0.5
    %v1705 = vmul.f32 %v1577, 0.5
    %v1706 = vmul.f32 %v1578, 0.5
    %v1707 = vmul.f32 %v1579, 0.5
    %v1708 = vmul.f32 %v1580, 0.5
    %v1709 = vmul.f32 %v1581, 0.5
    %v1710 = vmul.f32 %v1582, 0.5
    %v1711 = vmul.f32 %v1583, 0.5
    %v1712 = vmul.f32 %v1584, 0.5
    %v1713 = vmul.f32 %v1585, 0.5
    %v1714 = vmul.f32 %v1586, 0.5
    %v1715 = vmul.f32 %v1587, 0.5
    %v1716 = vmul.f32 %v1588, 0.5
    %v1717 = vmul.f32 %v1589, 0.5
    %v1718 = vmul.f32 %v1590, 0.5
    %v1719 = vmul.f32 %v1591, 0.5
    %v1720 = vmul.f32 %v1592, 0.5
    %v1721 = vmul.f32 %v1593, 0.5
    %v1722 = vmul.f32 %v1594, 0.5
    %v1723 = vmul.f32 %v1595, 0.5
    %v1724 = vmul.f32 %v1596, 0.5
    %v1725 = vmul.f32 %v1597, 0.5
    %v1726 = vmul.f32 %v1598, 0.5
    %v1727 = vmul.f32 %v1599, 0.5
    %v1728 = vmul.f32 %v1600, 0.5
    %v1729 = vmul.f32 %v1601, 0.5
    %v1730 = vmul.f32 %v1602, 0.5
    %v1731 = vmul.f32 %v1603, 0.5
    %v1732 = vmul.f32 %v1604, 0.5
    %v1733 = vmul.f32 %v1605, 0.5
    %v1734 = vmul.f32 %v1606, 0.5
    %v1735 = vmul.f32 %v1607, 0.5
    %v1736 = vmul.f32 %v1608, 0.5
    %v1737 = vmul.f32 %v1609, 0.5
    %v1738 = vmul.f32 %v1610, 0.5
    %v1739 = vmul.f32 %v1611, 0.5
    %v1740 = vmul.f32 %v1612, 0.5
    %v1741 = vmul.f32 %v1613, 0.5
    %v1742 = vmul.f32 %v1614, 0.5
    %v1743 = vmul.f32 %v1615, 0.5
    %v1744 = vmul.f32 %v1616, 0.5
    %v1745 = vmul.f32 %v1617, 0.5
    %v1746 = vmul.f32 %v1618, 0.5
    %v1747 = vmul.f32 %v1619, 0.5
    %v1748 = vmul.f32 %v1620, 0.5
    %v1749 = vmul.f32 %v1621, 0.5
    %v1750 = vmul.f32 %v1622, 0.5
    %v1751 = vmul.f32 %v1623, 0.5
    %v1752 = vmul.f32 %v1624, 0.5
    %v1753 = vmul.f32 %v1625, 0.5
    %v1754 = vmul.f32 %v1626, 0.5
    %v1755 = vmul.f32 %v1627, 0.5
    %v1756 = vmul.f32 %v1628, 0.5
    %v1757 = vmul.f32 %v1629, 0.5
    %v1758 = vmul.f32 %v1630, 0.5
    %v1759 = vmul.f32 %v1631, 0.5
    %v1760 = vmul.f32 %v1632, 0.5
    %v1761 = vmul.f32 %v1633, 0.5
    %v1762 = vmul.f32 %v1634, 0.5
    %v1763 = vmul.f32 %v1635, 0.5
    %v1764 = vmul.f32 %v1636, 0.5
    %v1765 = vmul.f32 %v1637, 0.5
    %v1766 = vmul.f32 %v1638, 0.5
    %v1767 = vmul.f32 %v1639, 0.5
    %v1768 = vmul.f32 %v1640, 0.5
    %v1769 = vmul.f32 %v1641, 0.5
    %v1770 = vmul.f32 %v1642, 0.5
    %v1771 = vmul.f32 %v1643, 0.5
    %v1772 = vmul.f32 %v1644, 0.5
    %v1773 = vmul.f32 %v1645, 0.5
    %v1774 = vmul.f32 %v1646, 0.5
    %v1775 = vmul.f32 %v1647, 0.5
    %v1776 = vmul.f32 %v1648, 0.5
    %v1777 = vmul.f32 %v1649, 0.5
    %v1778 = vmul.f32 %v1650, 0.5
    %v1779 = vmul.f32 %v1651, 0.5
    %v1780 = vmul.f32 %v1652, 0.5
    %v1781 = vmul.f32 %v1653, 0.5
    %v1782 = vmul.f32 %v1654, 0.5
    %v1783 = vmul.f32 %v1655, 0.5
    %v1784 = vmul.f32 %v1656, 0.5
    %v1785 = vmul.f32 %v1657, 0.5
    %v1786 = vmul.f32 %v345, %v1658
    %v1787 = vmul.f32 %v347, %v1659
    %v1788 = vmul.f32 %v458, %v1660
    %v1789 = vmul.f32 %v460, %v1661
    %v1790 = vmul.f32 %v571, %v1662
    %v1791 = vmul.f32 %v573, %v1663
    %v1792 = vmul.f32 %v684, %v1664
    %v1793 = vmul.f32 %v686, %v1665
    %v1794 = vmul.f32 %v349, %v1666
    %v1795 = vmul.f32 %v351, %v1667
    %v1796 = vmul.f32 %v462, %v1668
    %v1797 = vmul.f32 %v464, %v1669
    %v1798 = vmul.f32 %v575, %v1670
    %v1799 = vmul.f32 %v577, %v1671
    %v1800 = vmul.f32 %v688, %v1672
    %v1801 = vmul.f32 %v690, %v1673
    %v1802 = vmul.f32 %v355, %v1674
    %v1803 = vmul.f32 %v357, %v1675
    %v1804 = vmul.f32 %v468, %v1676
    %v1805 = vmul.f32 %v470, %v1677
    %v1806 = vmul.f32 %v581, %v1678
    %v1807 = vmul.f32 %v583, %v1679
    %v1808 = vmul.f32 %v694, %v1680
    %v1809 = vmul.f32 %v696, %v1681
    %v1810 = vmul.f32 %v359, %v1682
    %v1811 = vmul.f32 %v361, %v1683
    %v1812 = vmul.f32 %v472, %v1684
    %v1813 = vmul.f32 %v474, %v1685
    %v1814 = vmul.f32 %v585, %v1686
    %v1815 = vmul.f32 %v587, %v1687
    %v1816 = vmul.f32 %v698, %v1688
    %v1817 = vmul.f32 %v700, %v1689
    %v1818 = vmul.f32 %v365, %v1690
    %v1819 = vmul.f32 %v367, %v1691
    %v1820 = vmul.f32 %v478, %v1692
    %v1821 = vmul.f32 %v480, %v1693
    %v1822 = vmul.f32 %v591, %v1694
    %v1823 = vmul.f32 %v593, %v1695
    %v1824 = vmul.f32 %v704, %v1696
    %v1825 = vmul.f32 %v706, %v1697
    %v1826 = vmul.f32 %v369, %v1698
    %v1827 = vmul.f32 %v371, %v1699
    %v1828 = vmul.f32 %v482, %v1700
    %v1829 = vmul.f32 %v484, %v1701
    %v1830 = vmul.f32 %v595, %v1702
    %v1831 = vmul.f32 %v597, %v1703
    %v1832 = vmul.f32 %v708, %v1704
    %v1833 = vmul.f32 %v710, %v1705
    %v1834 = vmul.f32 %v375, %v1706
    %v1835 = vmul.f32 %v377, %v1707
    %v1836 = vmul.f32 %v488, %v1708
    %v1837 = vmul.f32 %v490, %v1709
    %v1838 = vmul.f32 %v601, %v1710
    %v1839 = vmul.f32 %v603, %v1711
    %v1840 = vmul.f32 %v714, %v1712
    %v1841 = vmul.f32 %v716, %v1713
    %v1842 = vmul.f32 %v379, %v1714
    %v1843 = vmul.f32 %v381, %v1715
    %v1844 = vmul.f32 %v492, %v1716
    %v1845 = vmul.f32 %v494, %v1717
    %v1846 = vmul.f32 %v605, %v1718
    %v1847 = vmul.f32 %v607, %v1719
    %v1848 = vmul.f32 %v718, %v1720
    %v1849 = vmul.f32 %v720, %v1721
    %v1850 = vmul.f32 %v385, %v1722
    %v1851 = vmul.f32 %v387, %v1723
    %v1852 = vmul.f32 %v498, %v1724
    %v1853 = vmul.f32 %v500, %v1725
    %v1854 = vmul.f32 %v611, %v1726
    %v1855 = vmul.f32 %v613, %v1727
    %v1856 = vmul.f32 %v724, %v1728
    %v1857 = vmul.f32 %v726, %v1729
    %v1858 = vmul.f32 %v389, %v1730
    %v1859 = vmul.f32 %v391, %v1731
    %v1860 = vmul.f32 %v502, %v1732
    %v1861 = vmul.f32 %v504, %v1733
    %v1862 = vmul.f32 %v615, %v1734
    %v1863 = vmul.f32 %v617, %v1735
    %v1864 = vmul.f32 %v728, %v1736
    %v1865 = vmul.f32 %v730, %v1737
    %v1866 = vmul.f32 %v395, %v1738
    %v1867 = vmul.f32 %v397, %v1739
    %v1868 = vmul.f32 %v508, %v1740
    %v1869 = vmul.f32 %v510, %v1741
    %v1870 = vmul.f32 %v621, %v1742
    %v1871 = vmul.f32 %v623, %v1743
    %v1872 = vmul.f32 %v734, %v1744
    %v1873 = vmul.f32 %v736, %v1745
    %v1874 = vmul.f32 %v399, %v1746
    %v1875 = vmul.f32 %v401, %v1747
    %v1876 = vmul.f32 %v512, %v1748
    %v1877 = vmul.f32 %v514, %v1749
    %v1878 = vmul.f32 %v625, %v1750
    %v1879 = vmul.f32 %v627, %v1751
    %v1880 = vmul.f32 %v738, %v1752
    %v1881 = vmul.f32 %v740, %v1753
    %v1882 = vmul.f32 %v405, %v1754
    %v1883 = vmul.f32 %v407, %v1755
    %v1884 = vmul.f32 %v518, %v1756
    %v1885 = vmul.f32 %v520, %v1757
    %v1886 = vmul.f32 %v631, %v1758
    %v1887 = vmul.f32 %v633, %v1759
    %v1888 = vmul.f32 %v744, %v1760
    %v1889 = vmul.f32 %v746, %v1761
    %v1890 = vmul.f32 %v409, %v1762
    %v1891 = vmul.f32 %v411, %v1763
    %v1892 = vmul.f32 %v522, %v1764
    %v1893 = vmul.f32 %v524, %v1765
    %v1894 = vmul.f32 %v635, %v1766
    %v1895 = vmul.f32 %v637, %v1767
    %v1896 = vmul.f32 %v748, %v1768
    %v1897 = vmul.f32 %v750, %v1769
    %v1898 = vmul.f32 %v415, %v1770
    %v1899 = vmul.f32 %v417, %v1771
    %v1900 = vmul.f32 %v528, %v1772
    %v1901 = vmul.f32 %v530, %v1773
    %v1902 = vmul.f32 %v641, %v1774
    %v1903 = vmul.f32 %v643, %v1775
    %v1904 = vmul.f32 %v754, %v1776
    %v1905 = vmul.f32 %v756, %v1777
    %v1906 = vmul.f32 %v419, %v1778
    %v1907 = vmul.f32 %v421, %v1779
    %v1908 = vmul.f32 %v532, %v1780
    %v1909 = vmul.f32 %v534, %v1781
    %v1910 = vmul.f32 %v645, %v1782
    %v1911 = vmul.f32 %v647, %v1783
    %v1912 = vmul.f32 %v758, %v1784
    %v1913 = vmul.f32 %v760, %v1785
    %v1914 = vpack.c.bf16 %v1794, %v1786
    %v1915 = vpack.c.bf16 %v1795, %v1787
    %v1916 = vpack.c.bf16 %v1796, %v1788
    %v1917 = vpack.c.bf16 %v1797, %v1789
    %v1918 = vpack.c.bf16 %v1798, %v1790
    %v1919 = vpack.c.bf16 %v1799, %v1791
    %v1920 = vpack.c.bf16 %v1800, %v1792
    %v1921 = vpack.c.bf16 %v1801, %v1793
    %v1922 = vpack.c.bf16 %v1810, %v1802
    %v1923 = vpack.c.bf16 %v1811, %v1803
    %v1924 = vpack.c.bf16 %v1812, %v1804
    %v1925 = vpack.c.bf16 %v1813, %v1805
    %v1926 = vpack.c.bf16 %v1814, %v1806
    %v1927 = vpack.c.bf16 %v1815, %v1807
    %v1928 = vpack.c.bf16 %v1816, %v1808
    %v1929 = vpack.c.bf16 %v1817, %v1809
    %v1930 = vpack.c.bf16 %v1826, %v1818
    %v1931 = vpack.c.bf16 %v1827, %v1819
    %v1932 = vpack.c.bf16 %v1828, %v1820
    %v1933 = vpack.c.bf16 %v1829, %v1821
    %v1934 = vpack.c.bf16 %v1830, %v1822
    %v1935 = vpack.c.bf16 %v1831, %v1823
    %v1936 = vpack.c.bf16 %v1832, %v1824
    %v1937 = vpack.c.bf16 %v1833, %v1825
    %v1938 = vpack.c.bf16 %v1842, %v1834
    %v1939 = vpack.c.bf16 %v1843, %v1835
    %v1940 = vpack.c.bf16 %v1844, %v1836
    %v1941 = vpack.c.bf16 %v1845, %v1837
    %v1942 = vpack.c.bf16 %v1846, %v1838
    %v1943 = vpack.c.bf16 %v1847, %v1839
    %v1944 = vpack.c.bf16 %v1848, %v1840
    %v1945 = vpack.c.bf16 %v1849, %v1841
    %v1946 = vpack.c.bf16 %v1858, %v1850
    %v1947 = vpack.c.bf16 %v1859, %v1851
    %v1948 = vpack.c.bf16 %v1860, %v1852
    %v1949 = vpack.c.bf16 %v1861, %v1853
    %v1950 = vpack.c.bf16 %v1862, %v1854
    %v1951 = vpack.c.bf16 %v1863, %v1855
    %v1952 = vpack.c.bf16 %v1864, %v1856
    %v1953 = vpack.c.bf16 %v1865, %v1857
    %v1954 = vpack.c.bf16 %v1874, %v1866
    %v1955 = vpack.c.bf16 %v1875, %v1867
    %v1956 = vpack.c.bf16 %v1876, %v1868
    %v1957 = vpack.c.bf16 %v1877, %v1869
    %v1958 = vpack.c.bf16 %v1878, %v1870
    %v1959 = vpack.c.bf16 %v1879, %v1871
    %v1960 = vpack.c.bf16 %v1880, %v1872
    %v1961 = vpack.c.bf16 %v1881, %v1873
    %v1962 = vpack.c.bf16 %v1890, %v1882
    %v1963 = vpack.c.bf16 %v1891, %v1883
    %v1964 = vpack.c.bf16 %v1892, %v1884
    %v1965 = vpack.c.bf16 %v1893, %v1885
    %v1966 = vpack.c.bf16 %v1894, %v1886
    %v1967 = vpack.c.bf16 %v1895, %v1887
    %v1968 = vpack.c.bf16 %v1896, %v1888
    %v1969 = vpack.c.bf16 %v1897, %v1889
    %v1970 = vpack.c.bf16 %v1906, %v1898
    %v1971 = vpack.c.bf16 %v1907, %v1899
    %v1972 = vpack.c.bf16 %v1908, %v1900
    %v1973 = vpack.c.bf16 %v1909, %v1901
    %v1974 = vpack.c.bf16 %v1910, %v1902
    %v1975 = vpack.c.bf16 %v1911, %v1903
    %v1976 = vpack.c.bf16 %v1912, %v1904
    %v1977 = vpack.c.bf16 %v1913, %v1905
    %v1978 = vld [vmem:[#allocation2] sm:$0xff]
    %v1979 = vld [vmem:[#allocation2 + $0x8] sm:$0xf]
    %v1980 = vld [vmem:[#allocation2 + $0xc] sm:$0xff]
    %v1981 = vld [vmem:[#allocation2 + $0x14] sm:$0xf]
    %v1982 = vld [vmem:[#allocation2 + $0x18] sm:$0xff]
    %v1983 = vld [vmem:[#allocation2 + $0x20] sm:$0xf]
    %v1984 = vld [vmem:[#allocation2 + $0x24] sm:$0xff]
    %v1985 = vld [vmem:[#allocation2 + $0x2c] sm:$0xf]
    %v1986 = vld [vmem:[#allocation2 + $0x30] sm:$0xff]
    %v1987 = vld [vmem:[#allocation2 + $0x38] sm:$0xf]
    %v1988 = vld [vmem:[#allocation2 + $0x3c] sm:$0xff]
    %v1989 = vld [vmem:[#allocation2 + $0x44] sm:$0xf]
    %v1990 = vld [vmem:[#allocation2 + $0x48] sm:$0xff]
    %v1991 = vld [vmem:[#allocation2 + $0x50] sm:$0xf]
    %v1992 = vld [vmem:[#allocation2 + $0x54] sm:$0xff]
    %v1993 = vld [vmem:[#allocation2 + $0x5c] sm:$0xf]
    %v1994 = vld [vmem:[#allocation2 + $0x60] sm:$0xff]
    %v1995 = vld [vmem:[#allocation2 + $0x68] sm:$0xf]
    %v1996 = vld [vmem:[#allocation2 + $0x6c] sm:$0xff]
    %v1997 = vld [vmem:[#allocation2 + $0x74] sm:$0xf]
    %v1998 = vld [vmem:[#allocation2 + $0x78] sm:$0xff]
    %v1999 = vld [vmem:[#allocation2 + $0x80] sm:$0xf]
    %v2000 = vld [vmem:[#allocation2 + $0x84] sm:$0xff]
    %v2001 = vld [vmem:[#allocation2 + $0x8c] sm:$0xf]
    %v2002 = vld [vmem:[#allocation2 + $0x90] sm:$0xff]
    %v2003 = vld [vmem:[#allocation2 + $0x98] sm:$0xf]
    %v2004 = vld [vmem:[#allocation2 + $0x9c] sm:$0xff]
    %v2005 = vld [vmem:[#allocation2 + $0xa4] sm:$0xf]
    %v2006 = vld [vmem:[#allocation2 + $0xa8] sm:$0xff]
    %v2007 = vld [vmem:[#allocation2 + $0xb0] sm:$0xf]
    %v2008 = vld [vmem:[#allocation2 + $0xb4] sm:$0xff]
    %v2009 = vld [vmem:[#allocation2 + $0xbc] sm:$0xf]
    %v2010 = vld [vmem:[#allocation2 + $0xc0] sm:$0xff]
    %v2011 = vld [vmem:[#allocation2 + $0xc8] sm:$0xf]
    %v2012 = vld [vmem:[#allocation2 + $0xcc] sm:$0xff]
    %v2013 = vld [vmem:[#allocation2 + $0xd4] sm:$0xf]
    %v2014 = vld [vmem:[#allocation2 + $0xd8] sm:$0xff]
    %v2015 = vld [vmem:[#allocation2 + $0xe0] sm:$0xf]
    %v2016 = vld [vmem:[#allocation2 + $0xe4] sm:$0xff]
    %v2017 = vld [vmem:[#allocation2 + $0xec] sm:$0xf]
    %v2018 = vld [vmem:[#allocation2 + $0xf0] sm:$0xff]
    %v2019 = vld [vmem:[#allocation2 + $0xf8] sm:$0xf]
    %v2020 = vld [vmem:[#allocation2 + $0xfc] sm:$0xff]
    %v2021 = vld [vmem:[#allocation2 + $0x104] sm:$0xf]
    %v2022 = vld [vmem:[#allocation2 + $0x108] sm:$0xff]
    %v2023 = vld [vmem:[#allocation2 + $0x110] sm:$0xf]
    %v2024 = vld [vmem:[#allocation2 + $0x114] sm:$0xff]
    %v2025 = vld [vmem:[#allocation2 + $0x11c] sm:$0xf]
    %v2026 = vld [vmem:[#allocation2 + $0x120] sm:$0xff]
    %v2027 = vld [vmem:[#allocation2 + $0x128] sm:$0xf]
    %v2028 = vld [vmem:[#allocation2 + $0x12c] sm:$0xff]
    %v2029 = vld [vmem:[#allocation2 + $0x134] sm:$0xf]
    %v2030 = vld [vmem:[#allocation2 + $0x138] sm:$0xff]
    %v2031 = vld [vmem:[#allocation2 + $0x140] sm:$0xf]
    %v2032 = vld [vmem:[#allocation2 + $0x144] sm:$0xff]
    %v2033 = vld [vmem:[#allocation2 + $0x14c] sm:$0xf]
    %v2034 = vld [vmem:[#allocation2 + $0x150] sm:$0xff]
    %v2035 = vld [vmem:[#allocation2 + $0x158] sm:$0xf]
    %v2036 = vld [vmem:[#allocation2 + $0x15c] sm:$0xff]
    %v2037 = vld [vmem:[#allocation2 + $0x164] sm:$0xf]
    %v2038 = vld [vmem:[#allocation2 + $0x168] sm:$0xff]
    %v2039 = vld [vmem:[#allocation2 + $0x170] sm:$0xf]
    %v2040 = vld [vmem:[#allocation2 + $0x174] sm:$0xff]
    %v2041 = vld [vmem:[#allocation2 + $0x17c] sm:$0xf]
    %v2042 = vld [vmem:[#allocation2 + $0x180] sm:$0xff]
    %v2043 = vld [vmem:[#allocation2 + $0x188] sm:$0xf]
    %v2044 = vld [vmem:[#allocation2 + $0x18c] sm:$0xff]
    %v2045 = vld [vmem:[#allocation2 + $0x194] sm:$0xf]
    %v2046 = vld [vmem:[#allocation2 + $0x198] sm:$0xff]
    %v2047 = vld [vmem:[#allocation2 + $0x1a0] sm:$0xf]
    %v2048 = vld [vmem:[#allocation2 + $0x1a4] sm:$0xff]
    %v2049 = vld [vmem:[#allocation2 + $0x1ac] sm:$0xf]
    %v2050 = vld [vmem:[#allocation2 + $0x1b0] sm:$0xff]
    %v2051 = vld [vmem:[#allocation2 + $0x1b8] sm:$0xf]
    %v2052 = vld [vmem:[#allocation2 + $0x1bc] sm:$0xff]
    %v2053 = vld [vmem:[#allocation2 + $0x1c4] sm:$0xf]
    %v2054 = vld [vmem:[#allocation2 + $0x1c8] sm:$0xff]
    %v2055 = vld [vmem:[#allocation2 + $0x1d0] sm:$0xf]
    %v2056 = vld [vmem:[#allocation2 + $0x1d4] sm:$0xff]
    %v2057 = vld [vmem:[#allocation2 + $0x1dc] sm:$0xf]
    %v2058 = vld [vmem:[#allocation2 + $0x1e0] sm:$0xff]
    %v2059 = vld [vmem:[#allocation2 + $0x1e8] sm:$0xf]
    %v2060 = vld [vmem:[#allocation2 + $0x1ec] sm:$0xff]
    %v2061 = vld [vmem:[#allocation2 + $0x1f4] sm:$0xf]
    %v2062 = vld [vmem:[#allocation2 + $0x1f8] sm:$0xff]
    %v2063 = vld [vmem:[#allocation2 + $0x200] sm:$0xf]
    %v2064 = vld [vmem:[#allocation2 + $0x204] sm:$0xff]
    %v2065 = vld [vmem:[#allocation2 + $0x20c] sm:$0xf]
    %v2066 = vld [vmem:[#allocation2 + $0x210] sm:$0xff]
    %v2067 = vld [vmem:[#allocation2 + $0x218] sm:$0xf]
    %v2068 = vld [vmem:[#allocation2 + $0x21c] sm:$0xff]
    %v2069 = vld [vmem:[#allocation2 + $0x224] sm:$0xf]
    %v2070 = vld [vmem:[#allocation2 + $0x228] sm:$0xff]
    %v2071 = vld [vmem:[#allocation2 + $0x230] sm:$0xf]
    %v2072 = vld [vmem:[#allocation2 + $0x234] sm:$0xff]
    %v2073 = vld [vmem:[#allocation2 + $0x23c] sm:$0xf]
    %v2074 = vld [vmem:[#allocation2 + $0x240] sm:$0xff]
    %v2075 = vld [vmem:[#allocation2 + $0x248] sm:$0xf]
    %v2076 = vld [vmem:[#allocation2 + $0x24c] sm:$0xff]
    %v2077 = vld [vmem:[#allocation2 + $0x254] sm:$0xf]
    %v2078 = vld [vmem:[#allocation2 + $0x258] sm:$0xff]
    %v2079 = vld [vmem:[#allocation2 + $0x260] sm:$0xf]
    %v2080 = vld [vmem:[#allocation2 + $0x264] sm:$0xff]
    %v2081 = vld [vmem:[#allocation2 + $0x26c] sm:$0xf]
    %v2082 = vld [vmem:[#allocation2 + $0x270] sm:$0xff]
    %v2083 = vld [vmem:[#allocation2 + $0x278] sm:$0xf]
    %v2084 = vld [vmem:[#allocation2 + $0x27c] sm:$0xff]
    %v2085 = vld [vmem:[#allocation2 + $0x284] sm:$0xf]
    %v2086 = vld [vmem:[#allocation2 + $0x288] sm:$0xff]
    %v2087 = vld [vmem:[#allocation2 + $0x290] sm:$0xf]
    %v2088 = vld [vmem:[#allocation2 + $0x294] sm:$0xff]
    %v2089 = vld [vmem:[#allocation2 + $0x29c] sm:$0xf]
    %v2090 = vld [vmem:[#allocation2 + $0x2a0] sm:$0xff]
    %v2091 = vld [vmem:[#allocation2 + $0x2a8] sm:$0xf]
    %v2092 = vld [vmem:[#allocation2 + $0x2ac] sm:$0xff]
    %v2093 = vld [vmem:[#allocation2 + $0x2b4] sm:$0xf]
    %v2094 = vld [vmem:[#allocation2 + $0x2b8] sm:$0xff]
    %v2095 = vld [vmem:[#allocation2 + $0x2c0] sm:$0xf]
    %v2096 = vld [vmem:[#allocation2 + $0x2c4] sm:$0xff]
    %v2097 = vld [vmem:[#allocation2 + $0x2cc] sm:$0xf]
    %v2098 = vld [vmem:[#allocation2 + $0x2d0] sm:$0xff]
    %v2099 = vld [vmem:[#allocation2 + $0x2d8] sm:$0xf]
    %v2100 = vld [vmem:[#allocation2 + $0x2dc] sm:$0xff]
    %v2101 = vld [vmem:[#allocation2 + $0x2e4] sm:$0xf]
    %v2102 = vld [vmem:[#allocation2 + $0x2e8] sm:$0xff]
    %v2103 = vld [vmem:[#allocation2 + $0x2f0] sm:$0xf]
    %v2104 = vld [vmem:[#allocation2 + $0x2f4] sm:$0xff]
    %v2105 = vld [vmem:[#allocation2 + $0x2fc] sm:$0xf]
    %v2106 = vld [vmem:[#allocation2 + $0x300] sm:$0xff]
    %v2107 = vld [vmem:[#allocation2 + $0x308] sm:$0xf]
    %v2108 = vld [vmem:[#allocation2 + $0x30c] sm:$0xff]
    %v2109 = vld [vmem:[#allocation2 + $0x314] sm:$0xf]
    %v2110 = vld [vmem:[#allocation2 + $0x318] sm:$0xff]
    %v2111 = vld [vmem:[#allocation2 + $0x320] sm:$0xf]
    %v2112 = vld [vmem:[#allocation2 + $0x324] sm:$0xff]
    %v2113 = vld [vmem:[#allocation2 + $0x32c] sm:$0xf]
    %v2114 = vld [vmem:[#allocation2 + $0x330] sm:$0xff]
    %v2115 = vld [vmem:[#allocation2 + $0x338] sm:$0xf]
    %v2116 = vld [vmem:[#allocation2 + $0x33c] sm:$0xff]
    %v2117 = vld [vmem:[#allocation2 + $0x344] sm:$0xf]
    %v2118 = vld [vmem:[#allocation2 + $0x348] sm:$0xff]
    %v2119 = vld [vmem:[#allocation2 + $0x350] sm:$0xf]
    %v2120 = vld [vmem:[#allocation2 + $0x354] sm:$0xff]
    %v2121 = vld [vmem:[#allocation2 + $0x35c] sm:$0xf]
    %v2122 = vld [vmem:[#allocation2 + $0x360] sm:$0xff]
    %v2123 = vld [vmem:[#allocation2 + $0x368] sm:$0xf]
    %v2124 = vld [vmem:[#allocation2 + $0x36c] sm:$0xff]
    %v2125 = vld [vmem:[#allocation2 + $0x374] sm:$0xf]
    %v2126 = vld [vmem:[#allocation2 + $0x378] sm:$0xff]
    %v2127 = vld [vmem:[#allocation2 + $0x380] sm:$0xf]
    %v2128 = vld [vmem:[#allocation2 + $0x384] sm:$0xff]
    %v2129 = vld [vmem:[#allocation2 + $0x38c] sm:$0xf]
    %v2130 = vld [vmem:[#allocation2 + $0x390] sm:$0xff]
    %v2131 = vld [vmem:[#allocation2 + $0x398] sm:$0xf]
    %v2132 = vld [vmem:[#allocation2 + $0x39c] sm:$0xff]
    %v2133 = vld [vmem:[#allocation2 + $0x3a4] sm:$0xf]
    %v2134 = vld [vmem:[#allocation2 + $0x3a8] sm:$0xff]
    %v2135 = vld [vmem:[#allocation2 + $0x3b0] sm:$0xf]
    %v2136 = vld [vmem:[#allocation2 + $0x3b4] sm:$0xff]
    %v2137 = vld [vmem:[#allocation2 + $0x3bc] sm:$0xf]
    %v2138 = vld [vmem:[#allocation2 + $0x3c0] sm:$0xff]
    %v2139 = vld [vmem:[#allocation2 + $0x3c8] sm:$0xf]
    %v2140 = vld [vmem:[#allocation2 + $0x3cc] sm:$0xff]
    %v2141 = vld [vmem:[#allocation2 + $0x3d4] sm:$0xf]
    %v2142 = vld [vmem:[#allocation2 + $0x3d8] sm:$0xff]
    %v2143 = vld [vmem:[#allocation2 + $0x3e0] sm:$0xf]
    %v2144 = vld [vmem:[#allocation2 + $0x3e4] sm:$0xff]
    %v2145 = vld [vmem:[#allocation2 + $0x3ec] sm:$0xf]
    %v2146 = vld [vmem:[#allocation2 + $0x3f0] sm:$0xff]
    %v2147 = vld [vmem:[#allocation2 + $0x3f8] sm:$0xf]
    %v2148 = vld [vmem:[#allocation2 + $0x3fc] sm:$0xff]
    %v2149 = vld [vmem:[#allocation2 + $0x404] sm:$0xf]
    %v2150 = vld [vmem:[#allocation2 + $0x408] sm:$0xff]
    %v2151 = vld [vmem:[#allocation2 + $0x410] sm:$0xf]
    %v2152 = vld [vmem:[#allocation2 + $0x414] sm:$0xff]
    %v2153 = vld [vmem:[#allocation2 + $0x41c] sm:$0xf]
    %v2154 = vld [vmem:[#allocation2 + $0x420] sm:$0xff]
    %v2155 = vld [vmem:[#allocation2 + $0x428] sm:$0xf]
    %v2156 = vld [vmem:[#allocation2 + $0x42c] sm:$0xff]
    %v2157 = vld [vmem:[#allocation2 + $0x434] sm:$0xf]
    %v2158 = vld [vmem:[#allocation2 + $0x438] sm:$0xff]
    %v2159 = vld [vmem:[#allocation2 + $0x440] sm:$0xf]
    %v2160 = vld [vmem:[#allocation2 + $0x444] sm:$0xff]
    %v2161 = vld [vmem:[#allocation2 + $0x44c] sm:$0xf]
    %v2162 = vld [vmem:[#allocation2 + $0x450] sm:$0xff]
    %v2163 = vld [vmem:[#allocation2 + $0x458] sm:$0xf]
    %v2164 = vld [vmem:[#allocation2 + $0x45c] sm:$0xff]
    %v2165 = vld [vmem:[#allocation2 + $0x464] sm:$0xf]
    %v2166 = vld [vmem:[#allocation2 + $0x468] sm:$0xff]
    %v2167 = vld [vmem:[#allocation2 + $0x470] sm:$0xf]
    %v2168 = vld [vmem:[#allocation2 + $0x474] sm:$0xff]
    %v2169 = vld [vmem:[#allocation2 + $0x47c] sm:$0xf]
    %v2170 = vld [vmem:[#allocation2 + $0x480] sm:$0xff]
    %v2171 = vld [vmem:[#allocation2 + $0x488] sm:$0xf]
    %v2172 = vld [vmem:[#allocation2 + $0x48c] sm:$0xff]
    %v2173 = vld [vmem:[#allocation2 + $0x494] sm:$0xf]
    %v2174 = vld [vmem:[#allocation2 + $0x498] sm:$0xff]
    %v2175 = vld [vmem:[#allocation2 + $0x4a0] sm:$0xf]
    %v2176 = vld [vmem:[#allocation2 + $0x4a4] sm:$0xff]
    %v2177 = vld [vmem:[#allocation2 + $0x4ac] sm:$0xf]
    %v2178 = vld [vmem:[#allocation2 + $0x4b0] sm:$0xff]
    %v2179 = vld [vmem:[#allocation2 + $0x4b8] sm:$0xf]
    %v2180 = vld [vmem:[#allocation2 + $0x4bc] sm:$0xff]
    %v2181 = vld [vmem:[#allocation2 + $0x4c4] sm:$0xf]
    %v2182 = vld [vmem:[#allocation2 + $0x4c8] sm:$0xff]
    %v2183 = vld [vmem:[#allocation2 + $0x4d0] sm:$0xf]
    %v2184 = vld [vmem:[#allocation2 + $0x4d4] sm:$0xff]
    %v2185 = vld [vmem:[#allocation2 + $0x4dc] sm:$0xf]
    %v2186 = vld [vmem:[#allocation2 + $0x4e0] sm:$0xff]
    %v2187 = vld [vmem:[#allocation2 + $0x4e8] sm:$0xf]
    %v2188 = vld [vmem:[#allocation2 + $0x4ec] sm:$0xff]
    %v2189 = vld [vmem:[#allocation2 + $0x4f4] sm:$0xf]
    %v2190 = vld [vmem:[#allocation2 + $0x4f8] sm:$0xff]
    %v2191 = vld [vmem:[#allocation2 + $0x500] sm:$0xf]
    %v2192 = vld [vmem:[#allocation2 + $0x504] sm:$0xff]
    %v2193 = vld [vmem:[#allocation2 + $0x50c] sm:$0xf]
    %v2194 = vld [vmem:[#allocation2 + $0x510] sm:$0xff]
    %v2195 = vld [vmem:[#allocation2 + $0x518] sm:$0xf]
    %v2196 = vld [vmem:[#allocation2 + $0x51c] sm:$0xff]
    %v2197 = vld [vmem:[#allocation2 + $0x524] sm:$0xf]
    %v2198 = vld [vmem:[#allocation2 + $0x528] sm:$0xff]
    %v2199 = vld [vmem:[#allocation2 + $0x530] sm:$0xf]
    %v2200 = vld [vmem:[#allocation2 + $0x534] sm:$0xff]
    %v2201 = vld [vmem:[#allocation2 + $0x53c] sm:$0xf]
    %v2202 = vld [vmem:[#allocation2 + $0x540] sm:$0xff]
    %v2203 = vld [vmem:[#allocation2 + $0x548] sm:$0xf]
    %v2204 = vld [vmem:[#allocation2 + $0x54c] sm:$0xff]
    %v2205 = vld [vmem:[#allocation2 + $0x554] sm:$0xf]
    %v2206 = vld [vmem:[#allocation2 + $0x558] sm:$0xff]
    %v2207 = vld [vmem:[#allocation2 + $0x560] sm:$0xf]
    %v2208 = vld [vmem:[#allocation2 + $0x564] sm:$0xff]
    %v2209 = vld [vmem:[#allocation2 + $0x56c] sm:$0xf]
    %v2210 = vld [vmem:[#allocation2 + $0x570] sm:$0xff]
    %v2211 = vld [vmem:[#allocation2 + $0x578] sm:$0xf]
    %v2212 = vld [vmem:[#allocation2 + $0x57c] sm:$0xff]
    %v2213 = vld [vmem:[#allocation2 + $0x584] sm:$0xf]
    %v2214 = vld [vmem:[#allocation2 + $0x588] sm:$0xff]
    %v2215 = vld [vmem:[#allocation2 + $0x590] sm:$0xf]
    %v2216 = vld [vmem:[#allocation2 + $0x594] sm:$0xff]
    %v2217 = vld [vmem:[#allocation2 + $0x59c] sm:$0xf]
    %v2218 = vld [vmem:[#allocation2 + $0x5a0] sm:$0xff]
    %v2219 = vld [vmem:[#allocation2 + $0x5a8] sm:$0xf]
    %v2220 = vld [vmem:[#allocation2 + $0x5ac] sm:$0xff]
    %v2221 = vld [vmem:[#allocation2 + $0x5b4] sm:$0xf]
    %v2222 = vld [vmem:[#allocation2 + $0x5b8] sm:$0xff]
    %v2223 = vld [vmem:[#allocation2 + $0x5c0] sm:$0xf]
    %v2224 = vld [vmem:[#allocation2 + $0x5c4] sm:$0xff]
    %v2225 = vld [vmem:[#allocation2 + $0x5cc] sm:$0xf]
    %v2226 = vld [vmem:[#allocation2 + $0x5d0] sm:$0xff]
    %v2227 = vld [vmem:[#allocation2 + $0x5d8] sm:$0xf]
    %v2228 = vld [vmem:[#allocation2 + $0x5dc] sm:$0xff]
    %v2229 = vld [vmem:[#allocation2 + $0x5e4] sm:$0xf]
    %v2230 = vld [vmem:[#allocation2 + $0x5e8] sm:$0xff]
    %v2231 = vld [vmem:[#allocation2 + $0x5f0] sm:$0xf]
    %v2232 = vld [vmem:[#allocation2 + $0x5f4] sm:$0xff]
    %v2233 = vld [vmem:[#allocation2 + $0x5fc] sm:$0xf]
    %v2234 = vld [vmem:[%s5] sm:$0x7]
    %v2236 = vlaneseq
    %v2237 = vshrl.u32 %v2236, 7
    %v2238 = vsub.s32 0, %v2237
    %v2239 = vrot.slane %v2234, %v2238
    %v2240 = vlaneseq
    %v2241 = vshrl.u32 %v2240, 7
    %v2242 = vsub.s32 1, %v2241
    %v2243 = vrot.slane %v2234, %v2242
    %v2244 = vlaneseq
    %v2245 = vshrl.u32 %v2244, 7
    %v2246 = vsub.s32 2, %v2245
    %v2247 = vrot.slane %v2234, %v2246
    %v2507 = vunpack.c.l.b16 %v1978
    %v2508 = vunpack.c.h.b16 %v1978
    %v2509 = vunpack.c.l.b16 %v1979
    %v2510 = vunpack.c.l.b16 %v1980
    %v2511 = vunpack.c.h.b16 %v1980
    %v2512 = vunpack.c.l.b16 %v1981
    %v2513 = vunpack.c.l.b16 %v1982
    %v2514 = vunpack.c.h.b16 %v1982
    %v2515 = vunpack.c.l.b16 %v1983
    %v2516 = vunpack.c.l.b16 %v1984
    %v2517 = vunpack.c.h.b16 %v1984
    %v2518 = vunpack.c.l.b16 %v1985
    %v2519 = vunpack.c.l.b16 %v1986
    %v2520 = vunpack.c.h.b16 %v1986
    %v2521 = vunpack.c.l.b16 %v1987
    %v2522 = vunpack.c.l.b16 %v1988
    %v2523 = vunpack.c.h.b16 %v1988
    %v2524 = vunpack.c.l.b16 %v1989
    %v2525 = vunpack.c.l.b16 %v1990
    %v2526 = vunpack.c.h.b16 %v1990
    %v2527 = vunpack.c.l.b16 %v1991
    %v2528 = vunpack.c.l.b16 %v1992
    %v2529 = vunpack.c.h.b16 %v1992
    %v2530 = vunpack.c.l.b16 %v1993
    %v2531 = vunpack.c.l.b16 %v1994
    %v2532 = vunpack.c.h.b16 %v1994
    %v2533 = vunpack.c.l.b16 %v1995
    %v2534 = vunpack.c.l.b16 %v1996
    %v2535 = vunpack.c.h.b16 %v1996
    %v2536 = vunpack.c.l.b16 %v1997
    %v2537 = vunpack.c.l.b16 %v1998
    %v2538 = vunpack.c.h.b16 %v1998
    %v2539 = vunpack.c.l.b16 %v1999
    %v2540 = vunpack.c.l.b16 %v2000
    %v2541 = vunpack.c.h.b16 %v2000
    %v2542 = vunpack.c.l.b16 %v2001
    %v2543 = vunpack.c.l.b16 %v2002
    %v2544 = vunpack.c.h.b16 %v2002
    %v2545 = vunpack.c.l.b16 %v2003
    %v2546 = vunpack.c.l.b16 %v2004
    %v2547 = vunpack.c.h.b16 %v2004
    %v2548 = vunpack.c.l.b16 %v2005
    %v2549 = vunpack.c.l.b16 %v2006
    %v2550 = vunpack.c.h.b16 %v2006
    %v2551 = vunpack.c.l.b16 %v2007
    %v2552 = vunpack.c.l.b16 %v2008
    %v2553 = vunpack.c.h.b16 %v2008
    %v2554 = vunpack.c.l.b16 %v2009
    %v2555 = vunpack.c.l.b16 %v2010
    %v2556 = vunpack.c.h.b16 %v2010
    %v2557 = vunpack.c.l.b16 %v2011
    %v2558 = vunpack.c.l.b16 %v2012
    %v2559 = vunpack.c.h.b16 %v2012
    %v2560 = vunpack.c.l.b16 %v2013
    %v2561 = vunpack.c.l.b16 %v2014
    %v2562 = vunpack.c.h.b16 %v2014
    %v2563 = vunpack.c.l.b16 %v2015
    %v2564 = vunpack.c.l.b16 %v2016
    %v2565 = vunpack.c.h.b16 %v2016
    %v2566 = vunpack.c.l.b16 %v2017
    %v2567 = vunpack.c.l.b16 %v2018
    %v2568 = vunpack.c.h.b16 %v2018
    %v2569 = vunpack.c.l.b16 %v2019
    %v2570 = vunpack.c.l.b16 %v2020
    %v2571 = vunpack.c.h.b16 %v2020
    %v2572 = vunpack.c.l.b16 %v2021
    %v2573 = vunpack.c.l.b16 %v2022
    %v2574 = vunpack.c.h.b16 %v2022
    %v2575 = vunpack.c.l.b16 %v2023
    %v2576 = vunpack.c.l.b16 %v2024
    %v2577 = vunpack.c.h.b16 %v2024
    %v2578 = vunpack.c.l.b16 %v2025
    %v2579 = vunpack.c.l.b16 %v2026
    %v2580 = vunpack.c.h.b16 %v2026
    %v2581 = vunpack.c.l.b16 %v2027
    %v2582 = vunpack.c.l.b16 %v2028
    %v2583 = vunpack.c.h.b16 %v2028
    %v2584 = vunpack.c.l.b16 %v2029
    %v2585 = vunpack.c.l.b16 %v2030
    %v2586 = vunpack.c.h.b16 %v2030
    %v2587 = vunpack.c.l.b16 %v2031
    %v2588 = vunpack.c.l.b16 %v2032
    %v2589 = vunpack.c.h.b16 %v2032
    %v2590 = vunpack.c.l.b16 %v2033
    %v2591 = vunpack.c.l.b16 %v2034
    %v2592 = vunpack.c.h.b16 %v2034
    %v2593 = vunpack.c.l.b16 %v2035
    %v2594 = vunpack.c.l.b16 %v2036
    %v2595 = vunpack.c.h.b16 %v2036
    %v2596 = vunpack.c.l.b16 %v2037
    %v2597 = vunpack.c.l.b16 %v2038
    %v2598 = vunpack.c.h.b16 %v2038
    %v2599 = vunpack.c.l.b16 %v2039
    %v2600 = vunpack.c.l.b16 %v2040
    %v2601 = vunpack.c.h.b16 %v2040
    %v2602 = vunpack.c.l.b16 %v2041
    %v2603 = vunpack.c.l.b16 %v2042
    %v2604 = vunpack.c.h.b16 %v2042
    %v2605 = vunpack.c.l.b16 %v2043
    %v2606 = vunpack.c.l.b16 %v2044
    %v2607 = vunpack.c.h.b16 %v2044
    %v2608 = vunpack.c.l.b16 %v2045
    %v2609 = vunpack.c.l.b16 %v2046
    %v2610 = vunpack.c.h.b16 %v2046
    %v2611 = vunpack.c.l.b16 %v2047
    %v2612 = vunpack.c.l.b16 %v2048
    %v2613 = vunpack.c.h.b16 %v2048
    %v2614 = vunpack.c.l.b16 %v2049
    %v2615 = vunpack.c.l.b16 %v2050
    %v2616 = vunpack.c.h.b16 %v2050
    %v2617 = vunpack.c.l.b16 %v2051
    %v2618 = vunpack.c.l.b16 %v2052
    %v2619 = vunpack.c.h.b16 %v2052
    %v2620 = vunpack.c.l.b16 %v2053
    %v2621 = vunpack.c.l.b16 %v2054
    %v2622 = vunpack.c.h.b16 %v2054
    %v2623 = vunpack.c.l.b16 %v2055
    %v2624 = vunpack.c.l.b16 %v2056
    %v2625 = vunpack.c.h.b16 %v2056
    %v2626 = vunpack.c.l.b16 %v2057
    %v2627 = vunpack.c.l.b16 %v2058
    %v2628 = vunpack.c.h.b16 %v2058
    %v2629 = vunpack.c.l.b16 %v2059
    %v2630 = vunpack.c.l.b16 %v2060
    %v2631 = vunpack.c.h.b16 %v2060
    %v2632 = vunpack.c.l.b16 %v2061
    %v2633 = vunpack.c.l.b16 %v2062
    %v2634 = vunpack.c.h.b16 %v2062
    %v2635 = vunpack.c.l.b16 %v2063
    %v2636 = vunpack.c.l.b16 %v2064
    %v2637 = vunpack.c.h.b16 %v2064
    %v2638 = vunpack.c.l.b16 %v2065
    %v2639 = vunpack.c.l.b16 %v2066
    %v2640 = vunpack.c.h.b16 %v2066
    %v2641 = vunpack.c.l.b16 %v2067
    %v2642 = vunpack.c.l.b16 %v2068
    %v2643 = vunpack.c.h.b16 %v2068
    %v2644 = vunpack.c.l.b16 %v2069
    %v2645 = vunpack.c.l.b16 %v2070
    %v2646 = vunpack.c.h.b16 %v2070
    %v2647 = vunpack.c.l.b16 %v2071
    %v2648 = vunpack.c.l.b16 %v2072
    %v2649 = vunpack.c.h.b16 %v2072
    %v2650 = vunpack.c.l.b16 %v2073
    %v2651 = vunpack.c.l.b16 %v2074
    %v2652 = vunpack.c.h.b16 %v2074
    %v2653 = vunpack.c.l.b16 %v2075
    %v2654 = vunpack.c.l.b16 %v2076
    %v2655 = vunpack.c.h.b16 %v2076
    %v2656 = vunpack.c.l.b16 %v2077
    %v2657 = vunpack.c.l.b16 %v2078
    %v2658 = vunpack.c.h.b16 %v2078
    %v2659 = vunpack.c.l.b16 %v2079
    %v2660 = vunpack.c.l.b16 %v2080
    %v2661 = vunpack.c.h.b16 %v2080
    %v2662 = vunpack.c.l.b16 %v2081
    %v2663 = vunpack.c.l.b16 %v2082
    %v2664 = vunpack.c.h.b16 %v2082
    %v2665 = vunpack.c.l.b16 %v2083
    %v2666 = vunpack.c.l.b16 %v2084
    %v2667 = vunpack.c.h.b16 %v2084
    %v2668 = vunpack.c.l.b16 %v2085
    %v2669 = vunpack.c.l.b16 %v2086
    %v2670 = vunpack.c.h.b16 %v2086
    %v2671 = vunpack.c.l.b16 %v2087
    %v2672 = vunpack.c.l.b16 %v2088
    %v2673 = vunpack.c.h.b16 %v2088
    %v2674 = vunpack.c.l.b16 %v2089
    %v2675 = vunpack.c.l.b16 %v2090
    %v2676 = vunpack.c.h.b16 %v2090
    %v2677 = vunpack.c.l.b16 %v2091
    %v2678 = vunpack.c.l.b16 %v2092
    %v2679 = vunpack.c.h.b16 %v2092
    %v2680 = vunpack.c.l.b16 %v2093
    %v2681 = vunpack.c.l.b16 %v2094
    %v2682 = vunpack.c.h.b16 %v2094
    %v2683 = vunpack.c.l.b16 %v2095
    %v2684 = vunpack.c.l.b16 %v2096
    %v2685 = vunpack.c.h.b16 %v2096
    %v2686 = vunpack.c.l.b16 %v2097
    %v2687 = vunpack.c.l.b16 %v2098
    %v2688 = vunpack.c.h.b16 %v2098
    %v2689 = vunpack.c.l.b16 %v2099
    %v2690 = vunpack.c.l.b16 %v2100
    %v2691 = vunpack.c.h.b16 %v2100
    %v2692 = vunpack.c.l.b16 %v2101
    %v2693 = vunpack.c.l.b16 %v2102
    %v2694 = vunpack.c.h.b16 %v2102
    %v2695 = vunpack.c.l.b16 %v2103
    %v2696 = vunpack.c.l.b16 %v2104
    %v2697 = vunpack.c.h.b16 %v2104
    %v2698 = vunpack.c.l.b16 %v2105
    %v2699 = vunpack.c.l.b16 %v2106
    %v2700 = vunpack.c.h.b16 %v2106
    %v2701 = vunpack.c.l.b16 %v2107
    %v2702 = vunpack.c.l.b16 %v2108
    %v2703 = vunpack.c.h.b16 %v2108
    %v2704 = vunpack.c.l.b16 %v2109
    %v2705 = vunpack.c.l.b16 %v2110
    %v2706 = vunpack.c.h.b16 %v2110
    %v2707 = vunpack.c.l.b16 %v2111
    %v2708 = vunpack.c.l.b16 %v2112
    %v2709 = vunpack.c.h.b16 %v2112
    %v2710 = vunpack.c.l.b16 %v2113
    %v2711 = vunpack.c.l.b16 %v2114
    %v2712 = vunpack.c.h.b16 %v2114
    %v2713 = vunpack.c.l.b16 %v2115
    %v2714 = vunpack.c.l.b16 %v2116
    %v2715 = vunpack.c.h.b16 %v2116
    %v2716 = vunpack.c.l.b16 %v2117
    %v2717 = vunpack.c.l.b16 %v2118
    %v2718 = vunpack.c.h.b16 %v2118
    %v2719 = vunpack.c.l.b16 %v2119
    %v2720 = vunpack.c.l.b16 %v2120
    %v2721 = vunpack.c.h.b16 %v2120
    %v2722 = vunpack.c.l.b16 %v2121
    %v2723 = vunpack.c.l.b16 %v2122
    %v2724 = vunpack.c.h.b16 %v2122
    %v2725 = vunpack.c.l.b16 %v2123
    %v2726 = vunpack.c.l.b16 %v2124
    %v2727 = vunpack.c.h.b16 %v2124
    %v2728 = vunpack.c.l.b16 %v2125
    %v2729 = vunpack.c.l.b16 %v2126
    %v2730 = vunpack.c.h.b16 %v2126
    %v2731 = vunpack.c.l.b16 %v2127
    %v2732 = vunpack.c.l.b16 %v2128
    %v2733 = vunpack.c.h.b16 %v2128
    %v2734 = vunpack.c.l.b16 %v2129
    %v2735 = vunpack.c.l.b16 %v2130
    %v2736 = vunpack.c.h.b16 %v2130
    %v2737 = vunpack.c.l.b16 %v2131
    %v2738 = vunpack.c.l.b16 %v2132
    %v2739 = vunpack.c.h.b16 %v2132
    %v2740 = vunpack.c.l.b16 %v2133
    %v2741 = vunpack.c.l.b16 %v2134
    %v2742 = vunpack.c.h.b16 %v2134
    %v2743 = vunpack.c.l.b16 %v2135
    %v2744 = vunpack.c.l.b16 %v2136
    %v2745 = vunpack.c.h.b16 %v2136
    %v2746 = vunpack.c.l.b16 %v2137
    %v2747 = vunpack.c.l.b16 %v2138
    %v2748 = vunpack.c.h.b16 %v2138
    %v2749 = vunpack.c.l.b16 %v2139
    %v2750 = vunpack.c.l.b16 %v2140
    %v2751 = vunpack.c.h.b16 %v2140
    %v2752 = vunpack.c.l.b16 %v2141
    %v2753 = vunpack.c.l.b16 %v2142
    %v2754 = vunpack.c.h.b16 %v2142
    %v2755 = vunpack.c.l.b16 %v2143
    %v2756 = vunpack.c.l.b16 %v2144
    %v2757 = vunpack.c.h.b16 %v2144
    %v2758 = vunpack.c.l.b16 %v2145
    %v2759 = vunpack.c.l.b16 %v2146
    %v2760 = vunpack.c.h.b16 %v2146
    %v2761 = vunpack.c.l.b16 %v2147
    %v2762 = vunpack.c.l.b16 %v2148
    %v2763 = vunpack.c.h.b16 %v2148
    %v2764 = vunpack.c.l.b16 %v2149
    %v2765 = vunpack.c.l.b16 %v2150
    %v2766 = vunpack.c.h.b16 %v2150
    %v2767 = vunpack.c.l.b16 %v2151
    %v2768 = vunpack.c.l.b16 %v2152
    %v2769 = vunpack.c.h.b16 %v2152
    %v2770 = vunpack.c.l.b16 %v2153
    %v2771 = vunpack.c.l.b16 %v2154
    %v2772 = vunpack.c.h.b16 %v2154
    %v2773 = vunpack.c.l.b16 %v2155
    %v2774 = vunpack.c.l.b16 %v2156
    %v2775 = vunpack.c.h.b16 %v2156
    %v2776 = vunpack.c.l.b16 %v2157
    %v2777 = vunpack.c.l.b16 %v2158
    %v2778 = vunpack.c.h.b16 %v2158
    %v2779 = vunpack.c.l.b16 %v2159
    %v2780 = vunpack.c.l.b16 %v2160
    %v2781 = vunpack.c.h.b16 %v2160
    %v2782 = vunpack.c.l.b16 %v2161
    %v2783 = vunpack.c.l.b16 %v2162
    %v2784 = vunpack.c.h.b16 %v2162
    %v2785 = vunpack.c.l.b16 %v2163
    %v2786 = vunpack.c.l.b16 %v2164
    %v2787 = vunpack.c.h.b16 %v2164
    %v2788 = vunpack.c.l.b16 %v2165
    %v2789 = vunpack.c.l.b16 %v2166
    %v2790 = vunpack.c.h.b16 %v2166
    %v2791 = vunpack.c.l.b16 %v2167
    %v2792 = vunpack.c.l.b16 %v2168
    %v2793 = vunpack.c.h.b16 %v2168
    %v2794 = vunpack.c.l.b16 %v2169
    %v2795 = vunpack.c.l.b16 %v2170
    %v2796 = vunpack.c.h.b16 %v2170
    %v2797 = vunpack.c.l.b16 %v2171
    %v2798 = vunpack.c.l.b16 %v2172
    %v2799 = vunpack.c.h.b16 %v2172
    %v2800 = vunpack.c.l.b16 %v2173
    %v2801 = vunpack.c.l.b16 %v2174
    %v2802 = vunpack.c.h.b16 %v2174
    %v2803 = vunpack.c.l.b16 %v2175
    %v2804 = vunpack.c.l.b16 %v2176
    %v2805 = vunpack.c.h.b16 %v2176
    %v2806 = vunpack.c.l.b16 %v2177
    %v2807 = vunpack.c.l.b16 %v2178
    %v2808 = vunpack.c.h.b16 %v2178
    %v2809 = vunpack.c.l.b16 %v2179
    %v2810 = vunpack.c.l.b16 %v2180
    %v2811 = vunpack.c.h.b16 %v2180
    %v2812 = vunpack.c.l.b16 %v2181
    %v2813 = vunpack.c.l.b16 %v2182
    %v2814 = vunpack.c.h.b16 %v2182
    %v2815 = vunpack.c.l.b16 %v2183
    %v2816 = vunpack.c.l.b16 %v2184
    %v2817 = vunpack.c.h.b16 %v2184
    %v2818 = vunpack.c.l.b16 %v2185
    %v2819 = vunpack.c.l.b16 %v2186
    %v2820 = vunpack.c.h.b16 %v2186
    %v2821 = vunpack.c.l.b16 %v2187
    %v2822 = vunpack.c.l.b16 %v2188
    %v2823 = vunpack.c.h.b16 %v2188
    %v2824 = vunpack.c.l.b16 %v2189
    %v2825 = vunpack.c.l.b16 %v2190
    %v2826 = vunpack.c.h.b16 %v2190
    %v2827 = vunpack.c.l.b16 %v2191
    %v2828 = vunpack.c.l.b16 %v2192
    %v2829 = vunpack.c.h.b16 %v2192
    %v2830 = vunpack.c.l.b16 %v2193
    %v2831 = vunpack.c.l.b16 %v2194
    %v2832 = vunpack.c.h.b16 %v2194
    %v2833 = vunpack.c.l.b16 %v2195
    %v2834 = vunpack.c.l.b16 %v2196
    %v2835 = vunpack.c.h.b16 %v2196
    %v2836 = vunpack.c.l.b16 %v2197
    %v2837 = vunpack.c.l.b16 %v2198
    %v2838 = vunpack.c.h.b16 %v2198
    %v2839 = vunpack.c.l.b16 %v2199
    %v2840 = vunpack.c.l.b16 %v2200
    %v2841 = vunpack.c.h.b16 %v2200
    %v2842 = vunpack.c.l.b16 %v2201
    %v2843 = vunpack.c.l.b16 %v2202
    %v2844 = vunpack.c.h.b16 %v2202
    %v2845 = vunpack.c.l.b16 %v2203
    %v2846 = vunpack.c.l.b16 %v2204
    %v2847 = vunpack.c.h.b16 %v2204
    %v2848 = vunpack.c.l.b16 %v2205
    %v2849 = vunpack.c.l.b16 %v2206
    %v2850 = vunpack.c.h.b16 %v2206
    %v2851 = vunpack.c.l.b16 %v2207
    %v2852 = vunpack.c.l.b16 %v2208
    %v2853 = vunpack.c.h.b16 %v2208
    %v2854 = vunpack.c.l.b16 %v2209
    %v2855 = vunpack.c.l.b16 %v2210
    %v2856 = vunpack.c.h.b16 %v2210
    %v2857 = vunpack.c.l.b16 %v2211
    %v2858 = vunpack.c.l.b16 %v2212
    %v2859 = vunpack.c.h.b16 %v2212
    %v2860 = vunpack.c.l.b16 %v2213
    %v2861 = vunpack.c.l.b16 %v2214
    %v2862 = vunpack.c.h.b16 %v2214
    %v2863 = vunpack.c.l.b16 %v2215
    %v2864 = vunpack.c.l.b16 %v2216
    %v2865 = vunpack.c.h.b16 %v2216
    %v2866 = vunpack.c.l.b16 %v2217
    %v2867 = vunpack.c.l.b16 %v2218
    %v2868 = vunpack.c.h.b16 %v2218
    %v2869 = vunpack.c.l.b16 %v2219
    %v2870 = vunpack.c.l.b16 %v2220
    %v2871 = vunpack.c.h.b16 %v2220
    %v2872 = vunpack.c.l.b16 %v2221
    %v2873 = vunpack.c.l.b16 %v2222
    %v2874 = vunpack.c.h.b16 %v2222
    %v2875 = vunpack.c.l.b16 %v2223
    %v2876 = vunpack.c.l.b16 %v2224
    %v2877 = vunpack.c.h.b16 %v2224
    %v2878 = vunpack.c.l.b16 %v2225
    %v2879 = vunpack.c.l.b16 %v2226
    %v2880 = vunpack.c.h.b16 %v2226
    %v2881 = vunpack.c.l.b16 %v2227
    %v2882 = vunpack.c.l.b16 %v2228
    %v2883 = vunpack.c.h.b16 %v2228
    %v2884 = vunpack.c.l.b16 %v2229
    %v2885 = vunpack.c.l.b16 %v2230
    %v2886 = vunpack.c.h.b16 %v2230
    %v2887 = vunpack.c.l.b16 %v2231
    %v2888 = vunpack.c.l.b16 %v2232
    %v2889 = vunpack.c.h.b16 %v2232
    %v2890 = vunpack.c.l.b16 %v2233
    %v2891 = vpack.c.b16 %v2510, %v2507
    %v2892 = vpack.c.b16 %v2511, %v2508
    %v2893 = vpack.c.b16 %v2512, %v2509
    %v2894 = vpack.c.b16 %v2516, %v2513
    %v2895 = vpack.c.b16 %v2517, %v2514
    %v2896 = vpack.c.b16 %v2518, %v2515
    %v2897 = vpack.c.b16 %v2522, %v2519
    %v2898 = vpack.c.b16 %v2523, %v2520
    %v2899 = vpack.c.b16 %v2524, %v2521
    %v2900 = vpack.c.b16 %v2528, %v2525
    %v2901 = vpack.c.b16 %v2529, %v2526
    %v2902 = vpack.c.b16 %v2530, %v2527
    %v2903 = vpack.c.b16 %v2534, %v2531
    %v2904 = vpack.c.b16 %v2535, %v2532
    %v2905 = vpack.c.b16 %v2536, %v2533
    %v2906 = vpack.c.b16 %v2540, %v2537
    %v2907 = vpack.c.b16 %v2541, %v2538
    %v2908 = vpack.c.b16 %v2542, %v2539
    %v2909 = vpack.c.b16 %v2546, %v2543
    %v2910 = vpack.c.b16 %v2547, %v2544
    %v2911 = vpack.c.b16 %v2548, %v2545
    %v2912 = vpack.c.b16 %v2552, %v2549
    %v2913 = vpack.c.b16 %v2553, %v2550
    %v2914 = vpack.c.b16 %v2554, %v2551
    %v2915 = vpack.c.b16 %v2558, %v2555
    %v2916 = vpack.c.b16 %v2559, %v2556
    %v2917 = vpack.c.b16 %v2560, %v2557
    %v2918 = vpack.c.b16 %v2564, %v2561
    %v2919 = vpack.c.b16 %v2565, %v2562
    %v2920 = vpack.c.b16 %v2566, %v2563
    %v2921 = vpack.c.b16 %v2570, %v2567
    %v2922 = vpack.c.b16 %v2571, %v2568
    %v2923 = vpack.c.b16 %v2572, %v2569
    %v2924 = vpack.c.b16 %v2576, %v2573
    %v2925 = vpack.c.b16 %v2577, %v2574
    %v2926 = vpack.c.b16 %v2578, %v2575
    %v2927 = vpack.c.b16 %v2582, %v2579
    %v2928 = vpack.c.b16 %v2583, %v2580
    %v2929 = vpack.c.b16 %v2584, %v2581
    %v2930 = vpack.c.b16 %v2588, %v2585
    %v2931 = vpack.c.b16 %v2589, %v2586
    %v2932 = vpack.c.b16 %v2590, %v2587
    %v2933 = vpack.c.b16 %v2594, %v2591
    %v2934 = vpack.c.b16 %v2595, %v2592
    %v2935 = vpack.c.b16 %v2596, %v2593
    %v2936 = vpack.c.b16 %v2600, %v2597
    %v2937 = vpack.c.b16 %v2601, %v2598
    %v2938 = vpack.c.b16 %v2602, %v2599
    %v2939 = vpack.c.b16 %v2606, %v2603
    %v2940 = vpack.c.b16 %v2607, %v2604
    %v2941 = vpack.c.b16 %v2608, %v2605
    %v2942 = vpack.c.b16 %v2612, %v2609
    %v2943 = vpack.c.b16 %v2613, %v2610
    %v2944 = vpack.c.b16 %v2614, %v2611
    %v2945 = vpack.c.b16 %v2618, %v2615
    %v2946 = vpack.c.b16 %v2619, %v2616
    %v2947 = vpack.c.b16 %v2620, %v2617
    %v2948 = vpack.c.b16 %v2624, %v2621
    %v2949 = vpack.c.b16 %v2625, %v2622
    %v2950 = vpack.c.b16 %v2626, %v2623
    %v2951 = vpack.c.b16 %v2630, %v2627
    %v2952 = vpack.c.b16 %v2631, %v2628
    %v2953 = vpack.c.b16 %v2632, %v2629
    %v2954 = vpack.c.b16 %v2636, %v2633
    %v2955 = vpack.c.b16 %v2637, %v2634
    %v2956 = vpack.c.b16 %v2638, %v2635
    %v2957 = vpack.c.b16 %v2642, %v2639
    %v2958 = vpack.c.b16 %v2643, %v2640
    %v2959 = vpack.c.b16 %v2644, %v2641
    %v2960 = vpack.c.b16 %v2648, %v2645
    %v2961 = vpack.c.b16 %v2649, %v2646
    %v2962 = vpack.c.b16 %v2650, %v2647
    %v2963 = vpack.c.b16 %v2654, %v2651
    %v2964 = vpack.c.b16 %v2655, %v2652
    %v2965 = vpack.c.b16 %v2656, %v2653
    %v2966 = vpack.c.b16 %v2660, %v2657
    %v2967 = vpack.c.b16 %v2661, %v2658
    %v2968 = vpack.c.b16 %v2662, %v2659
    %v2969 = vpack.c.b16 %v2666, %v2663
    %v2970 = vpack.c.b16 %v2667, %v2664
    %v2971 = vpack.c.b16 %v2668, %v2665
    %v2972 = vpack.c.b16 %v2672, %v2669
    %v2973 = vpack.c.b16 %v2673, %v2670
    %v2974 = vpack.c.b16 %v2674, %v2671
    %v2975 = vpack.c.b16 %v2678, %v2675
    %v2976 = vpack.c.b16 %v2679, %v2676
    %v2977 = vpack.c.b16 %v2680, %v2677
    %v2978 = vpack.c.b16 %v2684, %v2681
    %v2979 = vpack.c.b16 %v2685, %v2682
    %v2980 = vpack.c.b16 %v2686, %v2683
    %v2981 = vpack.c.b16 %v2690, %v2687
    %v2982 = vpack.c.b16 %v2691, %v2688
    %v2983 = vpack.c.b16 %v2692, %v2689
    %v2984 = vpack.c.b16 %v2696, %v2693
    %v2985 = vpack.c.b16 %v2697, %v2694
    %v2986 = vpack.c.b16 %v2698, %v2695
    %v2987 = vpack.c.b16 %v2702, %v2699
    %v2988 = vpack.c.b16 %v2703, %v2700
    %v2989 = vpack.c.b16 %v2704, %v2701
    %v2990 = vpack.c.b16 %v2708, %v2705
    %v2991 = vpack.c.b16 %v2709, %v2706
    %v2992 = vpack.c.b16 %v2710, %v2707
    %v2993 = vpack.c.b16 %v2714, %v2711
    %v2994 = vpack.c.b16 %v2715, %v2712
    %v2995 = vpack.c.b16 %v2716, %v2713
    %v2996 = vpack.c.b16 %v2720, %v2717
    %v2997 = vpack.c.b16 %v2721, %v2718
    %v2998 = vpack.c.b16 %v2722, %v2719
    %v2999 = vpack.c.b16 %v2726, %v2723
    %v3000 = vpack.c.b16 %v2727, %v2724
    %v3001 = vpack.c.b16 %v2728, %v2725
    %v3002 = vpack.c.b16 %v2732, %v2729
    %v3003 = vpack.c.b16 %v2733, %v2730
    %v3004 = vpack.c.b16 %v2734, %v2731
    %v3005 = vpack.c.b16 %v2738, %v2735
    %v3006 = vpack.c.b16 %v2739, %v2736
    %v3007 = vpack.c.b16 %v2740, %v2737
    %v3008 = vpack.c.b16 %v2744, %v2741
    %v3009 = vpack.c.b16 %v2745, %v2742
    %v3010 = vpack.c.b16 %v2746, %v2743
    %v3011 = vpack.c.b16 %v2750, %v2747
    %v3012 = vpack.c.b16 %v2751, %v2748
    %v3013 = vpack.c.b16 %v2752, %v2749
    %v3014 = vpack.c.b16 %v2756, %v2753
    %v3015 = vpack.c.b16 %v2757, %v2754
    %v3016 = vpack.c.b16 %v2758, %v2755
    %v3017 = vpack.c.b16 %v2762, %v2759
    %v3018 = vpack.c.b16 %v2763, %v2760
    %v3019 = vpack.c.b16 %v2764, %v2761
    %v3020 = vpack.c.b16 %v2768, %v2765
    %v3021 = vpack.c.b16 %v2769, %v2766
    %v3022 = vpack.c.b16 %v2770, %v2767
    %v3023 = vpack.c.b16 %v2774, %v2771
    %v3024 = vpack.c.b16 %v2775, %v2772
    %v3025 = vpack.c.b16 %v2776, %v2773
    %v3026 = vpack.c.b16 %v2780, %v2777
    %v3027 = vpack.c.b16 %v2781, %v2778
    %v3028 = vpack.c.b16 %v2782, %v2779
    %v3029 = vpack.c.b16 %v2786, %v2783
    %v3030 = vpack.c.b16 %v2787, %v2784
    %v3031 = vpack.c.b16 %v2788, %v2785
    %v3032 = vpack.c.b16 %v2792, %v2789
    %v3033 = vpack.c.b16 %v2793, %v2790
    %v3034 = vpack.c.b16 %v2794, %v2791
    %v3035 = vpack.c.b16 %v2798, %v2795
    %v3036 = vpack.c.b16 %v2799, %v2796
    %v3037 = vpack.c.b16 %v2800, %v2797
    %v3038 = vpack.c.b16 %v2804, %v2801
    %v3039 = vpack.c.b16 %v2805, %v2802
    %v3040 = vpack.c.b16 %v2806, %v2803
    %v3041 = vpack.c.b16 %v2810, %v2807
    %v3042 = vpack.c.b16 %v2811, %v2808
    %v3043 = vpack.c.b16 %v2812, %v2809
    %v3044 = vpack.c.b16 %v2816, %v2813
    %v3045 = vpack.c.b16 %v2817, %v2814
    %v3046 = vpack.c.b16 %v2818, %v2815
    %v3047 = vpack.c.b16 %v2822, %v2819
    %v3048 = vpack.c.b16 %v2823, %v2820
    %v3049 = vpack.c.b16 %v2824, %v2821
    %v3050 = vpack.c.b16 %v2828, %v2825
    %v3051 = vpack.c.b16 %v2829, %v2826
    %v3052 = vpack.c.b16 %v2830, %v2827
    %v3053 = vpack.c.b16 %v2834, %v2831
    %v3054 = vpack.c.b16 %v2835, %v2832
    %v3055 = vpack.c.b16 %v2836, %v2833
    %v3056 = vpack.c.b16 %v2840, %v2837
    %v3057 = vpack.c.b16 %v2841, %v2838
    %v3058 = vpack.c.b16 %v2842, %v2839
    %v3059 = vpack.c.b16 %v2846, %v2843
    %v3060 = vpack.c.b16 %v2847, %v2844
    %v3061 = vpack.c.b16 %v2848, %v2845
    %v3062 = vpack.c.b16 %v2852, %v2849
    %v3063 = vpack.c.b16 %v2853, %v2850
    %v3064 = vpack.c.b16 %v2854, %v2851
    %v3065 = vpack.c.b16 %v2858, %v2855
    %v3066 = vpack.c.b16 %v2859, %v2856
    %v3067 = vpack.c.b16 %v2860, %v2857
    %v3068 = vpack.c.b16 %v2864, %v2861
    %v3069 = vpack.c.b16 %v2865, %v2862
    %v3070 = vpack.c.b16 %v2866, %v2863
    %v3071 = vpack.c.b16 %v2870, %v2867
    %v3072 = vpack.c.b16 %v2871, %v2868
    %v3073 = vpack.c.b16 %v2872, %v2869
    %v3074 = vpack.c.b16 %v2876, %v2873
    %v3075 = vpack.c.b16 %v2877, %v2874
    %v3076 = vpack.c.b16 %v2878, %v2875
    %v3077 = vpack.c.b16 %v2882, %v2879
    %v3078 = vpack.c.b16 %v2883, %v2880
    %v3079 = vpack.c.b16 %v2884, %v2881
    %v3080 = vpack.c.b16 %v2888, %v2885
    %v3081 = vpack.c.b16 %v2889, %v2886
    %v3082 = vpack.c.b16 %v2890, %v2887
    %3275 = vmatprep.subr.bf16.mxu0 %v2913
    %3276 = vmatpush1.bf16.msra.mxu0 %v2912
    %3277 = vmatprep.subr.bf16.mxu0 %v2910
    %3278 = vmatpush1.bf16.msra.mxu0 %v2909
    %3279 = vmatprep.subr.bf16.mxu0 %v2907
    %3280 = vmatpush1.bf16.msra.mxu0 %v2906
    %3281 = vmatprep.subr.bf16.mxu0 %v2904
    %3282 = vmatpush1.bf16.msra.mxu0 %v2903
    %3283 = vmatprep.subr.bf16.mxu0 %v2901
    %3284 = vmatpush1.bf16.msra.mxu0 %v2900
    %3285 = vmatprep.subr.bf16.mxu0 %v2898
    %3286 = vmatpush1.bf16.msra.mxu0 %v2897
    %3287 = vmatprep.subr.bf16.mxu0 %v2895
    %3288 = vmatpush1.bf16.msra.mxu0 %v2894
    %3289 = vmatprep.subr.bf16.mxu0 %v2892
    %3290 = vmatpush1.bf16.msra.mxu0 %v2891
    %3291 = vmatprep.subr.bf16.mxu0 %v2937
    %3292 = vmatpush2.bf16.msra.mxu0 %v2936
    %3293 = vmatprep.subr.bf16.mxu0 %v2934
    %3294 = vmatpush2.bf16.msra.mxu0 %v2933
    %3295 = vmatprep.subr.bf16.mxu0 %v2931
    %3296 = vmatpush2.bf16.msra.mxu0 %v2930
    %3297 = vmatprep.subr.bf16.mxu0 %v2928
    %3298 = vmatpush2.bf16.msra.mxu0 %v2927
    %3299 = vmatprep.subr.bf16.mxu0 %v2925
    %3300 = vmatpush2.bf16.msra.mxu0 %v2924
    %3301 = vmatprep.subr.bf16.mxu0 %v2922
    %3302 = vmatpush2.bf16.msra.mxu0 %v2921
    %3303 = vmatprep.subr.bf16.mxu0 %v2919
    %3304 = vmatpush2.bf16.msra.mxu0 %v2918
    %3305 = vmatprep.subr.bf16.mxu0 %v2916
    %3306 = vmatpush2.bf16.msra.mxu0 %v2915
    %3307 = vmatprep.mubr.bf16.mxu0 %v1915
    %3308 = vmatmul.mubr.bf16.gmra.mxu0 %v1914
    %v3309 = vpop.f32.mrf.mxu0
    %v3310 = vadd.f32 %v2239, %v3309
    %v3311 = vpop.f32.mrf.mxu0
    %v3312 = vadd.f32 %v2243, %v3311
    %v3313 = vpop.f32.mrf.mxu0
    %v3314 = vadd.f32 %v2239, %v3313
    %v3315 = vpop.f32.mrf.mxu0
    %v3316 = vadd.f32 %v2243, %v3315
    %3317 = vmatprep.mubr.bf16.mxu0 %v1923
    %3318 = vmatmul.mubr.bf16.gmra.mxu0 %v1922
    %v3319 = vpop.f32.mrf.mxu0
    %v3320 = vadd.f32 %v2239, %v3319
    %v3321 = vpop.f32.mrf.mxu0
    %v3322 = vadd.f32 %v2243, %v3321
    %v3323 = vpop.f32.mrf.mxu0
    %v3324 = vadd.f32 %v2239, %v3323
    %v3325 = vpop.f32.mrf.mxu0
    %v3326 = vadd.f32 %v2243, %v3325
    %3327 = vmatprep.mubr.bf16.mxu0 %v1931
    %3328 = vmatmul.mubr.bf16.gmra.mxu0 %v1930
    %v3329 = vpop.f32.mrf.mxu0
    %v3330 = vadd.f32 %v2239, %v3329
    %v3331 = vpop.f32.mrf.mxu0
    %v3332 = vadd.f32 %v2243, %v3331
    %v3333 = vpop.f32.mrf.mxu0
    %v3334 = vadd.f32 %v2239, %v3333
    %v3335 = vpop.f32.mrf.mxu0
    %v3336 = vadd.f32 %v2243, %v3335
    %3337 = vmatprep.mubr.bf16.mxu0 %v1939
    %3338 = vmatmul.mubr.bf16.gmra.mxu0 %v1938
    %v3339 = vpop.f32.mrf.mxu0
    %v3340 = vadd.f32 %v2239, %v3339
    %v3341 = vpop.f32.mrf.mxu0
    %v3342 = vadd.f32 %v2243, %v3341
    %v3343 = vpop.f32.mrf.mxu0
    %v3344 = vadd.f32 %v2239, %v3343
    %v3345 = vpop.f32.mrf.mxu0
    %v3346 = vadd.f32 %v2243, %v3345
    %3347 = vmatprep.mubr.bf16.mxu0 %v1947
    %3348 = vmatmul.mubr.bf16.gmra.mxu0 %v1946
    %v3349 = vpop.f32.mrf.mxu0
    %v3350 = vadd.f32 %v2239, %v3349
    %v3351 = vpop.f32.mrf.mxu0
    %v3352 = vadd.f32 %v2243, %v3351
    %v3353 = vpop.f32.mrf.mxu0
    %v3354 = vadd.f32 %v2239, %v3353
    %v3355 = vpop.f32.mrf.mxu0
    %v3356 = vadd.f32 %v2243, %v3355
    %3357 = vmatprep.mubr.bf16.mxu0 %v1955
    %3358 = vmatmul.mubr.bf16.gmra.mxu0 %v1954
    %v3359 = vpop.f32.mrf.mxu0
    %v3360 = vadd.f32 %v2239, %v3359
    %v3361 = vpop.f32.mrf.mxu0
    %v3362 = vadd.f32 %v2243, %v3361
    %v3363 = vpop.f32.mrf.mxu0
    %v3364 = vadd.f32 %v2239, %v3363
    %v3365 = vpop.f32.mrf.mxu0
    %v3366 = vadd.f32 %v2243, %v3365
    %3367 = vmatprep.mubr.bf16.mxu0 %v1963
    %3368 = vmatmul.mubr.bf16.gmra.mxu0 %v1962
    %v3369 = vpop.f32.mrf.mxu0
    %v3370 = vadd.f32 %v2239, %v3369
    %v3371 = vpop.f32.mrf.mxu0
    %v3372 = vadd.f32 %v2243, %v3371
    %v3373 = vpop.f32.mrf.mxu0
    %v3374 = vadd.f32 %v2239, %v3373
    %v3375 = vpop.f32.mrf.mxu0
    %v3376 = vadd.f32 %v2243, %v3375
    %3377 = vmatprep.mubr.bf16.mxu0 %v1971
    %3378 = vmatmul.mubr.bf16.gmra.mxu0 %v1970
    %v3379 = vpop.f32.mrf.mxu0
    %v3380 = vadd.f32 %v2239, %v3379
    %v3381 = vpop.f32.mrf.mxu0
    %v3382 = vadd.f32 %v2243, %v3381
    %v3383 = vpop.f32.mrf.mxu0
    %v3384 = vadd.f32 %v2239, %v3383
    %v3385 = vpop.f32.mrf.mxu0
    %v3386 = vadd.f32 %v2243, %v3385
    %3387 = vdwg.mxu0
    %3388 = vmatprep.subr.bf16.mxu0 %v2961
    %3389 = vmatpush1.bf16.msra.mxu0 %v2960
    %3390 = vmatprep.subr.bf16.mxu0 %v2958
    %3391 = vmatpush1.bf16.msra.mxu0 %v2957
    %3392 = vmatprep.subr.bf16.mxu0 %v2955
    %3393 = vmatpush1.bf16.msra.mxu0 %v2954
    %3394 = vmatprep.subr.bf16.mxu0 %v2952
    %3395 = vmatpush1.bf16.msra.mxu0 %v2951
    %3396 = vmatprep.subr.bf16.mxu0 %v2949
    %3397 = vmatpush1.bf16.msra.mxu0 %v2948
    %3398 = vmatprep.subr.bf16.mxu0 %v2946
    %3399 = vmatpush1.bf16.msra.mxu0 %v2945
    %3400 = vmatprep.subr.bf16.mxu0 %v2943
    %3401 = vmatpush1.bf16.msra.mxu0 %v2942
    %3402 = vmatprep.subr.bf16.mxu0 %v2940
    %3403 = vmatpush1.bf16.msra.mxu0 %v2939
    %3404 = vmatprep.subr.bf16.mxu0 %v2985
    %3405 = vmatpush2.bf16.msra.mxu0 %v2984
    %3406 = vmatprep.subr.bf16.mxu0 %v2982
    %3407 = vmatpush2.bf16.msra.mxu0 %v2981
    %3408 = vmatprep.subr.bf16.mxu0 %v2979
    %3409 = vmatpush2.bf16.msra.mxu0 %v2978
    %3410 = vmatprep.subr.bf16.mxu0 %v2976
    %3411 = vmatpush2.bf16.msra.mxu0 %v2975
    %3412 = vmatprep.subr.bf16.mxu0 %v2973
    %3413 = vmatpush2.bf16.msra.mxu0 %v2972
    %3414 = vmatprep.subr.bf16.mxu0 %v2970
    %3415 = vmatpush2.bf16.msra.mxu0 %v2969
    %3416 = vmatprep.subr.bf16.mxu0 %v2967
    %3417 = vmatpush2.bf16.msra.mxu0 %v2966
    %3418 = vmatprep.subr.bf16.mxu0 %v2964
    %3419 = vmatpush2.bf16.msra.mxu0 %v2963
    %3420 = vmatprep.mubr.bf16.mxu0 %v1917
    %3421 = vmatmul.mubr.bf16.gmra.mxu0 %v1916
    %v3422 = vpop.f32.mrf.mxu0
    %v3423 = vadd.f32 %v3310, %v3422
    %v3424 = vpop.f32.mrf.mxu0
    %v3425 = vadd.f32 %v3312, %v3424
    %v3426 = vpop.f32.mrf.mxu0
    %v3427 = vadd.f32 %v3314, %v3426
    %v3428 = vpop.f32.mrf.mxu0
    %v3429 = vadd.f32 %v3316, %v3428
    %3430 = vmatprep.mubr.bf16.mxu0 %v1925
    %3431 = vmatmul.mubr.bf16.gmra.mxu0 %v1924
    %v3432 = vpop.f32.mrf.mxu0
    %v3433 = vadd.f32 %v3320, %v3432
    %v3434 = vpop.f32.mrf.mxu0
    %v3435 = vadd.f32 %v3322, %v3434
    %v3436 = vpop.f32.mrf.mxu0
    %v3437 = vadd.f32 %v3324, %v3436
    %v3438 = vpop.f32.mrf.mxu0
    %v3439 = vadd.f32 %v3326, %v3438
    %3440 = vmatprep.mubr.bf16.mxu0 %v1933
    %3441 = vmatmul.mubr.bf16.gmra.mxu0 %v1932
    %v3442 = vpop.f32.mrf.mxu0
    %v3443 = vadd.f32 %v3330, %v3442
    %v3444 = vpop.f32.mrf.mxu0
    %v3445 = vadd.f32 %v3332, %v3444
    %v3446 = vpop.f32.mrf.mxu0
    %v3447 = vadd.f32 %v3334, %v3446
    %v3448 = vpop.f32.mrf.mxu0
    %v3449 = vadd.f32 %v3336, %v3448
    %3450 = vmatprep.mubr.bf16.mxu0 %v1941
    %3451 = vmatmul.mubr.bf16.gmra.mxu0 %v1940
    %v3452 = vpop.f32.mrf.mxu0
    %v3453 = vadd.f32 %v3340, %v3452
    %v3454 = vpop.f32.mrf.mxu0
    %v3455 = vadd.f32 %v3342, %v3454
    %v3456 = vpop.f32.mrf.mxu0
    %v3457 = vadd.f32 %v3344, %v3456
    %v3458 = vpop.f32.mrf.mxu0
    %v3459 = vadd.f32 %v3346, %v3458
    %3460 = vmatprep.mubr.bf16.mxu0 %v1949
    %3461 = vmatmul.mubr.bf16.gmra.mxu0 %v1948
    %v3462 = vpop.f32.mrf.mxu0
    %v3463 = vadd.f32 %v3350, %v3462
    %v3464 = vpop.f32.mrf.mxu0
    %v3465 = vadd.f32 %v3352, %v3464
    %v3466 = vpop.f32.mrf.mxu0
    %v3467 = vadd.f32 %v3354, %v3466
    %v3468 = vpop.f32.mrf.mxu0
    %v3469 = vadd.f32 %v3356, %v3468
    %3470 = vmatprep.mubr.bf16.mxu0 %v1957
    %3471 = vmatmul.mubr.bf16.gmra.mxu0 %v1956
    %v3472 = vpop.f32.mrf.mxu0
    %v3473 = vadd.f32 %v3360, %v3472
    %v3474 = vpop.f32.mrf.mxu0
    %v3475 = vadd.f32 %v3362, %v3474
    %v3476 = vpop.f32.mrf.mxu0
    %v3477 = vadd.f32 %v3364, %v3476
    %v3478 = vpop.f32.mrf.mxu0
    %v3479 = vadd.f32 %v3366, %v3478
    %3480 = vmatprep.mubr.bf16.mxu0 %v1965
    %3481 = vmatmul.mubr.bf16.gmra.mxu0 %v1964
    %v3482 = vpop.f32.mrf.mxu0
    %v3483 = vadd.f32 %v3370, %v3482
    %v3484 = vpop.f32.mrf.mxu0
    %v3485 = vadd.f32 %v3372, %v3484
    %v3486 = vpop.f32.mrf.mxu0
    %v3487 = vadd.f32 %v3374, %v3486
    %v3488 = vpop.f32.mrf.mxu0
    %v3489 = vadd.f32 %v3376, %v3488
    %3490 = vmatprep.mubr.bf16.mxu0 %v1973
    %3491 = vmatmul.mubr.bf16.gmra.mxu0 %v1972
    %v3492 = vpop.f32.mrf.mxu0
    %v3493 = vadd.f32 %v3380, %v3492
    %v3494 = vpop.f32.mrf.mxu0
    %v3495 = vadd.f32 %v3382, %v3494
    %v3496 = vpop.f32.mrf.mxu0
    %v3497 = vadd.f32 %v3384, %v3496
    %v3498 = vpop.f32.mrf.mxu0
    %v3499 = vadd.f32 %v3386, %v3498
    %3500 = vdwg.mxu0
    %3501 = vmatprep.subr.bf16.mxu0 %v3009
    %3502 = vmatpush1.bf16.msra.mxu0 %v3008
    %3503 = vmatprep.subr.bf16.mxu0 %v3006
    %3504 = vmatpush1.bf16.msra.mxu0 %v3005
    %3505 = vmatprep.subr.bf16.mxu0 %v3003
    %3506 = vmatpush1.bf16.msra.mxu0 %v3002
    %3507 = vmatprep.subr.bf16.mxu0 %v3000
    %3508 = vmatpush1.bf16.msra.mxu0 %v2999
    %3509 = vmatprep.subr.bf16.mxu0 %v2997
    %3510 = vmatpush1.bf16.msra.mxu0 %v2996
    %3511 = vmatprep.subr.bf16.mxu0 %v2994
    %3512 = vmatpush1.bf16.msra.mxu0 %v2993
    %3513 = vmatprep.subr.bf16.mxu0 %v2991
    %3514 = vmatpush1.bf16.msra.mxu0 %v2990
    %3515 = vmatprep.subr.bf16.mxu0 %v2988
    %3516 = vmatpush1.bf16.msra.mxu0 %v2987
    %3517 = vmatprep.subr.bf16.mxu0 %v3033
    %3518 = vmatpush2.bf16.msra.mxu0 %v3032
    %3519 = vmatprep.subr.bf16.mxu0 %v3030
    %3520 = vmatpush2.bf16.msra.mxu0 %v3029
    %3521 = vmatprep.subr.bf16.mxu0 %v3027
    %3522 = vmatpush2.bf16.msra.mxu0 %v3026
    %3523 = vmatprep.subr.bf16.mxu0 %v3024
    %3524 = vmatpush2.bf16.msra.mxu0 %v3023
    %3525 = vmatprep.subr.bf16.mxu0 %v3021
    %3526 = vmatpush2.bf16.msra.mxu0 %v3020
    %3527 = vmatprep.subr.bf16.mxu0 %v3018
    %3528 = vmatpush2.bf16.msra.mxu0 %v3017
    %3529 = vmatprep.subr.bf16.mxu0 %v3015
    %3530 = vmatpush2.bf16.msra.mxu0 %v3014
    %3531 = vmatprep.subr.bf16.mxu0 %v3012
    %3532 = vmatpush2.bf16.msra.mxu0 %v3011
    %3533 = vmatprep.mubr.bf16.mxu0 %v1919
    %3534 = vmatmul.mubr.bf16.gmra.mxu0 %v1918
    %v3535 = vpop.f32.mrf.mxu0
    %v3536 = vadd.f32 %v3423, %v3535
    %v3537 = vpop.f32.mrf.mxu0
    %v3538 = vadd.f32 %v3425, %v3537
    %v3539 = vpop.f32.mrf.mxu0
    %v3540 = vadd.f32 %v3427, %v3539
    %v3541 = vpop.f32.mrf.mxu0
    %v3542 = vadd.f32 %v3429, %v3541
    %3543 = vmatprep.mubr.bf16.mxu0 %v1927
    %3544 = vmatmul.mubr.bf16.gmra.mxu0 %v1926
    %v3545 = vpop.f32.mrf.mxu0
    %v3546 = vadd.f32 %v3433, %v3545
    %v3547 = vpop.f32.mrf.mxu0
    %v3548 = vadd.f32 %v3435, %v3547
    %v3549 = vpop.f32.mrf.mxu0
    %v3550 = vadd.f32 %v3437, %v3549
    %v3551 = vpop.f32.mrf.mxu0
    %v3552 = vadd.f32 %v3439, %v3551
    %3553 = vmatprep.mubr.bf16.mxu0 %v1935
    %3554 = vmatmul.mubr.bf16.gmra.mxu0 %v1934
    %v3555 = vpop.f32.mrf.mxu0
    %v3556 = vadd.f32 %v3443, %v3555
    %v3557 = vpop.f32.mrf.mxu0
    %v3558 = vadd.f32 %v3445, %v3557
    %v3559 = vpop.f32.mrf.mxu0
    %v3560 = vadd.f32 %v3447, %v3559
    %v3561 = vpop.f32.mrf.mxu0
    %v3562 = vadd.f32 %v3449, %v3561
    %3563 = vmatprep.mubr.bf16.mxu0 %v1943
    %3564 = vmatmul.mubr.bf16.gmra.mxu0 %v1942
    %v3565 = vpop.f32.mrf.mxu0
    %v3566 = vadd.f32 %v3453, %v3565
    %v3567 = vpop.f32.mrf.mxu0
    %v3568 = vadd.f32 %v3455, %v3567
    %v3569 = vpop.f32.mrf.mxu0
    %v3570 = vadd.f32 %v3457, %v3569
    %v3571 = vpop.f32.mrf.mxu0
    %v3572 = vadd.f32 %v3459, %v3571
    %3573 = vmatprep.mubr.bf16.mxu0 %v1951
    %3574 = vmatmul.mubr.bf16.gmra.mxu0 %v1950
    %v3575 = vpop.f32.mrf.mxu0
    %v3576 = vadd.f32 %v3463, %v3575
    %v3577 = vpop.f32.mrf.mxu0
    %v3578 = vadd.f32 %v3465, %v3577
    %v3579 = vpop.f32.mrf.mxu0
    %v3580 = vadd.f32 %v3467, %v3579
    %v3581 = vpop.f32.mrf.mxu0
    %v3582 = vadd.f32 %v3469, %v3581
    %3583 = vmatprep.mubr.bf16.mxu0 %v1959
    %3584 = vmatmul.mubr.bf16.gmra.mxu0 %v1958
    %v3585 = vpop.f32.mrf.mxu0
    %v3586 = vadd.f32 %v3473, %v3585
    %v3587 = vpop.f32.mrf.mxu0
    %v3588 = vadd.f32 %v3475, %v3587
    %v3589 = vpop.f32.mrf.mxu0
    %v3590 = vadd.f32 %v3477, %v3589
    %v3591 = vpop.f32.mrf.mxu0
    %v3592 = vadd.f32 %v3479, %v3591
    %3593 = vmatprep.mubr.bf16.mxu0 %v1967
    %3594 = vmatmul.mubr.bf16.gmra.mxu0 %v1966
    %v3595 = vpop.f32.mrf.mxu0
    %v3596 = vadd.f32 %v3483, %v3595
    %v3597 = vpop.f32.mrf.mxu0
    %v3598 = vadd.f32 %v3485, %v3597
    %v3599 = vpop.f32.mrf.mxu0
    %v3600 = vadd.f32 %v3487, %v3599
    %v3601 = vpop.f32.mrf.mxu0
    %v3602 = vadd.f32 %v3489, %v3601
    %3603 = vmatprep.mubr.bf16.mxu0 %v1975
    %3604 = vmatmul.mubr.bf16.gmra.mxu0 %v1974
    %v3605 = vpop.f32.mrf.mxu0
    %v3606 = vadd.f32 %v3493, %v3605
    %v3607 = vpop.f32.mrf.mxu0
    %v3608 = vadd.f32 %v3495, %v3607
    %v3609 = vpop.f32.mrf.mxu0
    %v3610 = vadd.f32 %v3497, %v3609
    %v3611 = vpop.f32.mrf.mxu0
    %v3612 = vadd.f32 %v3499, %v3611
    %3613 = vdwg.mxu0
    %3614 = vmatprep.subr.bf16.mxu0 %v3057
    %3615 = vmatpush1.bf16.msra.mxu0 %v3056
    %3616 = vmatprep.subr.bf16.mxu0 %v3054
    %3617 = vmatpush1.bf16.msra.mxu0 %v3053
    %3618 = vmatprep.subr.bf16.mxu0 %v3051
    %3619 = vmatpush1.bf16.msra.mxu0 %v3050
    %3620 = vmatprep.subr.bf16.mxu0 %v3048
    %3621 = vmatpush1.bf16.msra.mxu0 %v3047
    %3622 = vmatprep.subr.bf16.mxu0 %v3045
    %3623 = vmatpush1.bf16.msra.mxu0 %v3044
    %3624 = vmatprep.subr.bf16.mxu0 %v3042
    %3625 = vmatpush1.bf16.msra.mxu0 %v3041
    %3626 = vmatprep.subr.bf16.mxu0 %v3039
    %3627 = vmatpush1.bf16.msra.mxu0 %v3038
    %3628 = vmatprep.subr.bf16.mxu0 %v3036
    %3629 = vmatpush1.bf16.msra.mxu0 %v3035
    %3630 = vmatprep.subr.bf16.mxu0 %v3081
    %3631 = vmatpush2.bf16.msra.mxu0 %v3080
    %3632 = vmatprep.subr.bf16.mxu0 %v3078
    %3633 = vmatpush2.bf16.msra.mxu0 %v3077
    %3634 = vmatprep.subr.bf16.mxu0 %v3075
    %3635 = vmatpush2.bf16.msra.mxu0 %v3074
    %3636 = vmatprep.subr.bf16.mxu0 %v3072
    %3637 = vmatpush2.bf16.msra.mxu0 %v3071
    %3638 = vmatprep.subr.bf16.mxu0 %v3069
    %3639 = vmatpush2.bf16.msra.mxu0 %v3068
    %3640 = vmatprep.subr.bf16.mxu0 %v3066
    %3641 = vmatpush2.bf16.msra.mxu0 %v3065
    %3642 = vmatprep.subr.bf16.mxu0 %v3063
    %3643 = vmatpush2.bf16.msra.mxu0 %v3062
    %3644 = vmatprep.subr.bf16.mxu0 %v3060
    %3645 = vmatpush2.bf16.msra.mxu0 %v3059
    %3646 = vmatprep.mubr.bf16.mxu0 %v1921
    %3647 = vmatmul.mubr.bf16.gmra.mxu0 %v1920
    %v3648 = vpop.f32.mrf.mxu0
    %v3649 = vadd.f32 %v3536, %v3648
    %v3650 = vpop.f32.mrf.mxu0
    %v3651 = vadd.f32 %v3538, %v3650
    %v3652 = vpop.f32.mrf.mxu0
    %v3653 = vadd.f32 %v3540, %v3652
    %v3654 = vpop.f32.mrf.mxu0
    %v3655 = vadd.f32 %v3542, %v3654
    %3656 = vmatprep.mubr.bf16.mxu0 %v1929
    %3657 = vmatmul.mubr.bf16.gmra.mxu0 %v1928
    %v3658 = vpop.f32.mrf.mxu0
    %v3659 = vadd.f32 %v3546, %v3658
    %v3660 = vpop.f32.mrf.mxu0
    %v3661 = vadd.f32 %v3548, %v3660
    %v3662 = vpop.f32.mrf.mxu0
    %v3663 = vadd.f32 %v3550, %v3662
    %v3664 = vpop.f32.mrf.mxu0
    %v3665 = vadd.f32 %v3552, %v3664
    %3666 = vmatprep.mubr.bf16.mxu0 %v1937
    %3667 = vmatmul.mubr.bf16.gmra.mxu0 %v1936
    %v3668 = vpop.f32.mrf.mxu0
    %v3669 = vadd.f32 %v3556, %v3668
    %v3670 = vpop.f32.mrf.mxu0
    %v3671 = vadd.f32 %v3558, %v3670
    %v3672 = vpop.f32.mrf.mxu0
    %v3673 = vadd.f32 %v3560, %v3672
    %v3674 = vpop.f32.mrf.mxu0
    %v3675 = vadd.f32 %v3562, %v3674
    %3676 = vmatprep.mubr.bf16.mxu0 %v1945
    %3677 = vmatmul.mubr.bf16.gmra.mxu0 %v1944
    %v3678 = vpop.f32.mrf.mxu0
    %v3679 = vadd.f32 %v3566, %v3678
    %v3680 = vpop.f32.mrf.mxu0
    %v3681 = vadd.f32 %v3568, %v3680
    %v3682 = vpop.f32.mrf.mxu0
    %v3683 = vadd.f32 %v3570, %v3682
    %v3684 = vpop.f32.mrf.mxu0
    %v3685 = vadd.f32 %v3572, %v3684
    %3686 = vmatprep.mubr.bf16.mxu0 %v1953
    %3687 = vmatmul.mubr.bf16.gmra.mxu0 %v1952
    %v3688 = vpop.f32.mrf.mxu0
    %v3689 = vadd.f32 %v3576, %v3688
    %v3690 = vpop.f32.mrf.mxu0
    %v3691 = vadd.f32 %v3578, %v3690
    %v3692 = vpop.f32.mrf.mxu0
    %v3693 = vadd.f32 %v3580, %v3692
    %v3694 = vpop.f32.mrf.mxu0
    %v3695 = vadd.f32 %v3582, %v3694
    %3696 = vmatprep.mubr.bf16.mxu0 %v1961
    %3697 = vmatmul.mubr.bf16.gmra.mxu0 %v1960
    %v3698 = vpop.f32.mrf.mxu0
    %v3699 = vadd.f32 %v3586, %v3698
    %v3700 = vpop.f32.mrf.mxu0
    %v3701 = vadd.f32 %v3588, %v3700
    %v3702 = vpop.f32.mrf.mxu0
    %v3703 = vadd.f32 %v3590, %v3702
    %v3704 = vpop.f32.mrf.mxu0
    %v3705 = vadd.f32 %v3592, %v3704
    %3706 = vmatprep.mubr.bf16.mxu0 %v1969
    %3707 = vmatmul.mubr.bf16.gmra.mxu0 %v1968
    %v3708 = vpop.f32.mrf.mxu0
    %v3709 = vadd.f32 %v3596, %v3708
    %v3710 = vpop.f32.mrf.mxu0
    %v3711 = vadd.f32 %v3598, %v3710
    %v3712 = vpop.f32.mrf.mxu0
    %v3713 = vadd.f32 %v3600, %v3712
    %v3714 = vpop.f32.mrf.mxu0
    %v3715 = vadd.f32 %v3602, %v3714
    %3716 = vmatprep.mubr.bf16.mxu0 %v1977
    %3717 = vmatmul.mubr.bf16.gmra.mxu0 %v1976
    %v3718 = vpop.f32.mrf.mxu0
    %v3719 = vadd.f32 %v3606, %v3718
    %v3720 = vpop.f32.mrf.mxu0
    %v3721 = vadd.f32 %v3608, %v3720
    %v3722 = vpop.f32.mrf.mxu0
    %v3723 = vadd.f32 %v3610, %v3722
    %v3724 = vpop.f32.mrf.mxu0
    %v3725 = vadd.f32 %v3612, %v3724
    %3726 = vdwg.mxu0
    %3727 = vmatprep.subr.bf16.mxu0 0
    %3728 = vmatpush1.bf16.msra.mxu0 %v2914
    %3729 = vmatprep.subr.bf16.mxu0 0
    %3730 = vmatpush1.bf16.msra.mxu0 %v2911
    %3731 = vmatprep.subr.bf16.mxu0 0
    %3732 = vmatpush1.bf16.msra.mxu0 %v2908
    %3733 = vmatprep.subr.bf16.mxu0 0
    %3734 = vmatpush1.bf16.msra.mxu0 %v2905
    %3735 = vmatprep.subr.bf16.mxu0 0
    %3736 = vmatpush1.bf16.msra.mxu0 %v2902
    %3737 = vmatprep.subr.bf16.mxu0 0
    %3738 = vmatpush1.bf16.msra.mxu0 %v2899
    %3739 = vmatprep.subr.bf16.mxu0 0
    %3740 = vmatpush1.bf16.msra.mxu0 %v2896
    %3741 = vmatprep.subr.bf16.mxu0 0
    %3742 = vmatpush1.bf16.msra.mxu0 %v2893
    %3743 = vmatprep.subr.bf16.mxu0 0
    %3744 = vmatpush2.bf16.msra.mxu0 %v2938
    %3745 = vmatprep.subr.bf16.mxu0 0
    %3746 = vmatpush2.bf16.msra.mxu0 %v2935
    %3747 = vmatprep.subr.bf16.mxu0 0
    %3748 = vmatpush2.bf16.msra.mxu0 %v2932
    %3749 = vmatprep.subr.bf16.mxu0 0
    %3750 = vmatpush2.bf16.msra.mxu0 %v2929
    %3751 = vmatprep.subr.bf16.mxu0 0
    %3752 = vmatpush2.bf16.msra.mxu0 %v2926
    %3753 = vmatprep.subr.bf16.mxu0 0
    %3754 = vmatpush2.bf16.msra.mxu0 %v2923
    %3755 = vmatprep.subr.bf16.mxu0 0
    %3756 = vmatpush2.bf16.msra.mxu0 %v2920
    %3757 = vmatprep.subr.bf16.mxu0 0
    %3758 = vmatpush2.bf16.msra.mxu0 %v2917
    %3759 = vmatprep.mubr.bf16.mxu0 %v1915
    %3760 = vmatmul.mubr.bf16.gmra.mxu0 %v1914
    %v3761 = vpop.f32.mrf.mxu0
    %v3762 = vadd.f32 %v2247, %v3761
    %v3763 = vpop.f32.mrf.mxu0
    %v3764 = vpop.f32.mrf.mxu0
    %v3765 = vadd.f32 %v2247, %v3764
    %v3766 = vpop.f32.mrf.mxu0
    %3767 = vmatprep.mubr.bf16.mxu0 %v1923
    %3768 = vmatmul.mubr.bf16.gmra.mxu0 %v1922
    %v3769 = vpop.f32.mrf.mxu0
    %v3770 = vadd.f32 %v2247, %v3769
    %v3771 = vpop.f32.mrf.mxu0
    %v3772 = vpop.f32.mrf.mxu0
    %v3773 = vadd.f32 %v2247, %v3772
    %v3774 = vpop.f32.mrf.mxu0
    %3775 = vmatprep.mubr.bf16.mxu0 %v1931
    %3776 = vmatmul.mubr.bf16.gmra.mxu0 %v1930
    %v3777 = vpop.f32.mrf.mxu0
    %v3778 = vadd.f32 %v2247, %v3777
    %v3779 = vpop.f32.mrf.mxu0
    %v3780 = vpop.f32.mrf.mxu0
    %v3781 = vadd.f32 %v2247, %v3780
    %v3782 = vpop.f32.mrf.mxu0
    %3783 = vmatprep.mubr.bf16.mxu0 %v1939
    %3784 = vmatmul.mubr.bf16.gmra.mxu0 %v1938
    %v3785 = vpop.f32.mrf.mxu0
    %v3786 = vadd.f32 %v2247, %v3785
    %v3787 = vpop.f32.mrf.mxu0
    %v3788 = vpop.f32.mrf.mxu0
    %v3789 = vadd.f32 %v2247, %v3788
    %v3790 = vpop.f32.mrf.mxu0
    %3791 = vmatprep.mubr.bf16.mxu0 %v1947
    %3792 = vmatmul.mubr.bf16.gmra.mxu0 %v1946
    %v3793 = vpop.f32.mrf.mxu0
    %v3794 = vadd.f32 %v2247, %v3793
    %v3795 = vpop.f32.mrf.mxu0
    %v3796 = vpop.f32.mrf.mxu0
    %v3797 = vadd.f32 %v2247, %v3796
    %v3798 = vpop.f32.mrf.mxu0
    %3799 = vmatprep.mubr.bf16.mxu0 %v1955
    %3800 = vmatmul.mubr.bf16.gmra.mxu0 %v1954
    %v3801 = vpop.f32.mrf.mxu0
    %v3802 = vadd.f32 %v2247, %v3801
    %v3803 = vpop.f32.mrf.mxu0
    %v3804 = vpop.f32.mrf.mxu0
    %v3805 = vadd.f32 %v2247, %v3804
    %v3806 = vpop.f32.mrf.mxu0
    %3807 = vmatprep.mubr.bf16.mxu0 %v1963
    %3808 = vmatmul.mubr.bf16.gmra.mxu0 %v1962
    %v3809 = vpop.f32.mrf.mxu0
    %v3810 = vadd.f32 %v2247, %v3809
    %v3811 = vpop.f32.mrf.mxu0
    %v3812 = vpop.f32.mrf.mxu0
    %v3813 = vadd.f32 %v2247, %v3812
    %v3814 = vpop.f32.mrf.mxu0
    %3815 = vmatprep.mubr.bf16.mxu0 %v1971
    %3816 = vmatmul.mubr.bf16.gmra.mxu0 %v1970
    %v3817 = vpop.f32.mrf.mxu0
    %v3818 = vadd.f32 %v2247, %v3817
    %v3819 = vpop.f32.mrf.mxu0
    %v3820 = vpop.f32.mrf.mxu0
    %v3821 = vadd.f32 %v2247, %v3820
    %v3822 = vpop.f32.mrf.mxu0
    %3823 = vdwg.mxu0
    %3824 = vmatprep.subr.bf16.mxu0 0
    %3825 = vmatpush1.bf16.msra.mxu0 %v2962
    %3826 = vmatprep.subr.bf16.mxu0 0
    %3827 = vmatpush1.bf16.msra.mxu0 %v2959
    %3828 = vmatprep.subr.bf16.mxu0 0
    %3829 = vmatpush1.bf16.msra.mxu0 %v2956
    %3830 = vmatprep.subr.bf16.mxu0 0
    %3831 = vmatpush1.bf16.msra.mxu0 %v2953
    %3832 = vmatprep.subr.bf16.mxu0 0
    %3833 = vmatpush1.bf16.msra.mxu0 %v2950
    %3834 = vmatprep.subr.bf16.mxu0 0
    %3835 = vmatpush1.bf16.msra.mxu0 %v2947
    %3836 = vmatprep.subr.bf16.mxu0 0
    %3837 = vmatpush1.bf16.msra.mxu0 %v2944
    %3838 = vmatprep.subr.bf16.mxu0 0
    %3839 = vmatpush1.bf16.msra.mxu0 %v2941
    %3840 = vmatprep.subr.bf16.mxu0 0
    %3841 = vmatpush2.bf16.msra.mxu0 %v2986
    %3842 = vmatprep.subr.bf16.mxu0 0
    %3843 = vmatpush2.bf16.msra.mxu0 %v2983
    %3844 = vmatprep.subr.bf16.mxu0 0
    %3845 = vmatpush2.bf16.msra.mxu0 %v2980
    %3846 = vmatprep.subr.bf16.mxu0 0
    %3847 = vmatpush2.bf16.msra.mxu0 %v2977
    %3848 = vmatprep.subr.bf16.mxu0 0
    %3849 = vmatpush2.bf16.msra.mxu0 %v2974
    %3850 = vmatprep.subr.bf16.mxu0 0
    %3851 = vmatpush2.bf16.msra.mxu0 %v2971
    %3852 = vmatprep.subr.bf16.mxu0 0
    %3853 = vmatpush2.bf16.msra.mxu0 %v2968
    %3854 = vmatprep.subr.bf16.mxu0 0
    %3855 = vmatpush2.bf16.msra.mxu0 %v2965
    %3856 = vmatprep.mubr.bf16.mxu0 %v1917
    %3857 = vmatmul.mubr.bf16.gmra.mxu0 %v1916
    %v3858 = vpop.f32.mrf.mxu0
    %v3859 = vadd.f32 %v3762, %v3858
    %v3860 = vpop.f32.mrf.mxu0
    %v3861 = vpop.f32.mrf.mxu0
    %v3862 = vadd.f32 %v3765, %v3861
    %v3863 = vpop.f32.mrf.mxu0
    %3864 = vmatprep.mubr.bf16.mxu0 %v1925
    %3865 = vmatmul.mubr.bf16.gmra.mxu0 %v1924
    %v3866 = vpop.f32.mrf.mxu0
    %v3867 = vadd.f32 %v3770, %v3866
    %v3868 = vpop.f32.mrf.mxu0
    %v3869 = vpop.f32.mrf.mxu0
    %v3870 = vadd.f32 %v3773, %v3869
    %v3871 = vpop.f32.mrf.mxu0
    %3872 = vmatprep.mubr.bf16.mxu0 %v1933
    %3873 = vmatmul.mubr.bf16.gmra.mxu0 %v1932
    %v3874 = vpop.f32.mrf.mxu0
    %v3875 = vadd.f32 %v3778, %v3874
    %v3876 = vpop.f32.mrf.mxu0
    %v3877 = vpop.f32.mrf.mxu0
    %v3878 = vadd.f32 %v3781, %v3877
    %v3879 = vpop.f32.mrf.mxu0
    %3880 = vmatprep.mubr.bf16.mxu0 %v1941
    %3881 = vmatmul.mubr.bf16.gmra.mxu0 %v1940
    %v3882 = vpop.f32.mrf.mxu0
    %v3883 = vadd.f32 %v3786, %v3882
    %v3884 = vpop.f32.mrf.mxu0
    %v3885 = vpop.f32.mrf.mxu0
    %v3886 = vadd.f32 %v3789, %v3885
    %v3887 = vpop.f32.mrf.mxu0
    %3888 = vmatprep.mubr.bf16.mxu0 %v1949
    %3889 = vmatmul.mubr.bf16.gmra.mxu0 %v1948
    %v3890 = vpop.f32.mrf.mxu0
    %v3891 = vadd.f32 %v3794, %v3890
    %v3892 = vpop.f32.mrf.mxu0
    %v3893 = vpop.f32.mrf.mxu0
    %v3894 = vadd.f32 %v3797, %v3893
    %v3895 = vpop.f32.mrf.mxu0
    %3896 = vmatprep.mubr.bf16.mxu0 %v1957
    %3897 = vmatmul.mubr.bf16.gmra.mxu0 %v1956
    %v3898 = vpop.f32.mrf.mxu0
    %v3899 = vadd.f32 %v3802, %v3898
    %v3900 = vpop.f32.mrf.mxu0
    %v3901 = vpop.f32.mrf.mxu0
    %v3902 = vadd.f32 %v3805, %v3901
    %v3903 = vpop.f32.mrf.mxu0
    %3904 = vmatprep.mubr.bf16.mxu0 %v1965
    %3905 = vmatmul.mubr.bf16.gmra.mxu0 %v1964
    %v3906 = vpop.f32.mrf.mxu0
    %v3907 = vadd.f32 %v3810, %v3906
    %v3908 = vpop.f32.mrf.mxu0
    %v3909 = vpop.f32.mrf.mxu0
    %v3910 = vadd.f32 %v3813, %v3909
    %v3911 = vpop.f32.mrf.mxu0
    %3912 = vmatprep.mubr.bf16.mxu0 %v1973
    %3913 = vmatmul.mubr.bf16.gmra.mxu0 %v1972
    %v3914 = vpop.f32.mrf.mxu0
    %v3915 = vadd.f32 %v3818, %v3914
    %v3916 = vpop.f32.mrf.mxu0
    %v3917 = vpop.f32.mrf.mxu0
    %v3918 = vadd.f32 %v3821, %v3917
    %v3919 = vpop.f32.mrf.mxu0
    %3920 = vdwg.mxu0
    %3921 = vmatprep.subr.bf16.mxu0 0
    %3922 = vmatpush1.bf16.msra.mxu0 %v3010
    %3923 = vmatprep.subr.bf16.mxu0 0
    %3924 = vmatpush1.bf16.msra.mxu0 %v3007
    %3925 = vmatprep.subr.bf16.mxu0 0
    %3926 = vmatpush1.bf16.msra.mxu0 %v3004
    %3927 = vmatprep.subr.bf16.mxu0 0
    %3928 = vmatpush1.bf16.msra.mxu0 %v3001
    %3929 = vmatprep.subr.bf16.mxu0 0
    %3930 = vmatpush1.bf16.msra.mxu0 %v2998
    %3931 = vmatprep.subr.bf16.mxu0 0
    %3932 = vmatpush1.bf16.msra.mxu0 %v2995
    %3933 = vmatprep.subr.bf16.mxu0 0
    %3934 = vmatpush1.bf16.msra.mxu0 %v2992
    %3935 = vmatprep.subr.bf16.mxu0 0
    %3936 = vmatpush1.bf16.msra.mxu0 %v2989
    %3937 = vmatprep.subr.bf16.mxu0 0
    %3938 = vmatpush2.bf16.msra.mxu0 %v3034
    %3939 = vmatprep.subr.bf16.mxu0 0
    %3940 = vmatpush2.bf16.msra.mxu0 %v3031
    %3941 = vmatprep.subr.bf16.mxu0 0
    %3942 = vmatpush2.bf16.msra.mxu0 %v3028
    %3943 = vmatprep.subr.bf16.mxu0 0
    %3944 = vmatpush2.bf16.msra.mxu0 %v3025
    %3945 = vmatprep.subr.bf16.mxu0 0
    %3946 = vmatpush2.bf16.msra.mxu0 %v3022
    %3947 = vmatprep.subr.bf16.mxu0 0
    %3948 = vmatpush2.bf16.msra.mxu0 %v3019
    %3949 = vmatprep.subr.bf16.mxu0 0
    %3950 = vmatpush2.bf16.msra.mxu0 %v3016
    %3951 = vmatprep.subr.bf16.mxu0 0
    %3952 = vmatpush2.bf16.msra.mxu0 %v3013
    %3953 = vmatprep.mubr.bf16.mxu0 %v1919
    %3954 = vmatmul.mubr.bf16.gmra.mxu0 %v1918
    %v3955 = vpop.f32.mrf.mxu0
    %v3956 = vadd.f32 %v3859, %v3955
    %v3957 = vpop.f32.mrf.mxu0
    %v3958 = vpop.f32.mrf.mxu0
    %v3959 = vadd.f32 %v3862, %v3958
    %v3960 = vpop.f32.mrf.mxu0
    %3961 = vmatprep.mubr.bf16.mxu0 %v1927
    %3962 = vmatmul.mubr.bf16.gmra.mxu0 %v1926
    %v3963 = vpop.f32.mrf.mxu0
    %v3964 = vadd.f32 %v3867, %v3963
    %v3965 = vpop.f32.mrf.mxu0
    %v3966 = vpop.f32.mrf.mxu0
    %v3967 = vadd.f32 %v3870, %v3966
    %v3968 = vpop.f32.mrf.mxu0
    %3969 = vmatprep.mubr.bf16.mxu0 %v1935
    %3970 = vmatmul.mubr.bf16.gmra.mxu0 %v1934
    %v3971 = vpop.f32.mrf.mxu0
    %v3972 = vadd.f32 %v3875, %v3971
    %v3973 = vpop.f32.mrf.mxu0
    %v3974 = vpop.f32.mrf.mxu0
    %v3975 = vadd.f32 %v3878, %v3974
    %v3976 = vpop.f32.mrf.mxu0
    %3977 = vmatprep.mubr.bf16.mxu0 %v1943
    %3978 = vmatmul.mubr.bf16.gmra.mxu0 %v1942
    %v3979 = vpop.f32.mrf.mxu0
    %v3980 = vadd.f32 %v3883, %v3979
    %v3981 = vpop.f32.mrf.mxu0
    %v3982 = vpop.f32.mrf.mxu0
    %v3983 = vadd.f32 %v3886, %v3982
    %v3984 = vpop.f32.mrf.mxu0
    %3985 = vmatprep.mubr.bf16.mxu0 %v1951
    %3986 = vmatmul.mubr.bf16.gmra.mxu0 %v1950
    %v3987 = vpop.f32.mrf.mxu0
    %v3988 = vadd.f32 %v3891, %v3987
    %v3989 = vpop.f32.mrf.mxu0
    %v3990 = vpop.f32.mrf.mxu0
    %v3991 = vadd.f32 %v3894, %v3990
    %v3992 = vpop.f32.mrf.mxu0
    %3993 = vmatprep.mubr.bf16.mxu0 %v1959
    %3994 = vmatmul.mubr.bf16.gmra.mxu0 %v1958
    %v3995 = vpop.f32.mrf.mxu0
    %v3996 = vadd.f32 %v3899, %v3995
    %v3997 = vpop.f32.mrf.mxu0
    %v3998 = vpop.f32.mrf.mxu0
    %v3999 = vadd.f32 %v3902, %v3998
    %v4000 = vpop.f32.mrf.mxu0
    %4001 = vmatprep.mubr.bf16.mxu0 %v1967
    %4002 = vmatmul.mubr.bf16.gmra.mxu0 %v1966
    %v4003 = vpop.f32.mrf.mxu0
    %v4004 = vadd.f32 %v3907, %v4003
    %v4005 = vpop.f32.mrf.mxu0
    %v4006 = vpop.f32.mrf.mxu0
    %v4007 = vadd.f32 %v3910, %v4006
    %v4008 = vpop.f32.mrf.mxu0
    %4009 = vmatprep.mubr.bf16.mxu0 %v1975
    %4010 = vmatmul.mubr.bf16.gmra.mxu0 %v1974
    %v4011 = vpop.f32.mrf.mxu0
    %v4012 = vadd.f32 %v3915, %v4011
    %v4013 = vpop.f32.mrf.mxu0
    %v4014 = vpop.f32.mrf.mxu0
    %v4015 = vadd.f32 %v3918, %v4014
    %v4016 = vpop.f32.mrf.mxu0
    %4017 = vdwg.mxu0
    %4018 = vmatprep.subr.bf16.mxu0 0
    %4019 = vmatpush1.bf16.msra.mxu0 %v3058
    %4020 = vmatprep.subr.bf16.mxu0 0
    %4021 = vmatpush1.bf16.msra.mxu0 %v3055
    %4022 = vmatprep.subr.bf16.mxu0 0
    %4023 = vmatpush1.bf16.msra.mxu0 %v3052
    %4024 = vmatprep.subr.bf16.mxu0 0
    %4025 = vmatpush1.bf16.msra.mxu0 %v3049
    %4026 = vmatprep.subr.bf16.mxu0 0
    %4027 = vmatpush1.bf16.msra.mxu0 %v3046
    %4028 = vmatprep.subr.bf16.mxu0 0
    %4029 = vmatpush1.bf16.msra.mxu0 %v3043
    %4030 = vmatprep.subr.bf16.mxu0 0
    %4031 = vmatpush1.bf16.msra.mxu0 %v3040
    %4032 = vmatprep.subr.bf16.mxu0 0
    %4033 = vmatpush1.bf16.msra.mxu0 %v3037
    %4034 = vmatprep.subr.bf16.mxu0 0
    %4035 = vmatpush2.bf16.msra.mxu0 %v3082
    %4036 = vmatprep.subr.bf16.mxu0 0
    %4037 = vmatpush2.bf16.msra.mxu0 %v3079
    %4038 = vmatprep.subr.bf16.mxu0 0
    %4039 = vmatpush2.bf16.msra.mxu0 %v3076
    %4040 = vmatprep.subr.bf16.mxu0 0
    %4041 = vmatpush2.bf16.msra.mxu0 %v3073
    %4042 = vmatprep.subr.bf16.mxu0 0
    %4043 = vmatpush2.bf16.msra.mxu0 %v3070
    %4044 = vmatprep.subr.bf16.mxu0 0
    %4045 = vmatpush2.bf16.msra.mxu0 %v3067
    %4046 = vmatprep.subr.bf16.mxu0 0
    %4047 = vmatpush2.bf16.msra.mxu0 %v3064
    %4048 = vmatprep.subr.bf16.mxu0 0
    %4049 = vmatpush2.bf16.msra.mxu0 %v3061
    %4050 = vmatprep.mubr.bf16.mxu0 %v1921
    %4051 = vmatmul.mubr.bf16.gmra.mxu0 %v1920
    %v4052 = vpop.f32.mrf.mxu0
    %v4053 = vadd.f32 %v3956, %v4052
    %v4054 = vpop.f32.mrf.mxu0
    %v4055 = vpop.f32.mrf.mxu0
    %v4056 = vadd.f32 %v3959, %v4055
    %v4057 = vpop.f32.mrf.mxu0
    %4058 = vmatprep.mubr.bf16.mxu0 %v1929
    %4059 = vmatmul.mubr.bf16.gmra.mxu0 %v1928
    %v4060 = vpop.f32.mrf.mxu0
    %v4061 = vadd.f32 %v3964, %v4060
    %v4062 = vpop.f32.mrf.mxu0
    %v4063 = vpop.f32.mrf.mxu0
    %v4064 = vadd.f32 %v3967, %v4063
    %v4065 = vpop.f32.mrf.mxu0
    %4066 = vmatprep.mubr.bf16.mxu0 %v1937
    %4067 = vmatmul.mubr.bf16.gmra.mxu0 %v1936
    %v4068 = vpop.f32.mrf.mxu0
    %v4069 = vadd.f32 %v3972, %v4068
    %v4070 = vpop.f32.mrf.mxu0
    %v4071 = vpop.f32.mrf.mxu0
    %v4072 = vadd.f32 %v3975, %v4071
    %v4073 = vpop.f32.mrf.mxu0
    %4074 = vmatprep.mubr.bf16.mxu0 %v1945
    %4075 = vmatmul.mubr.bf16.gmra.mxu0 %v1944
    %v4076 = vpop.f32.mrf.mxu0
    %v4077 = vadd.f32 %v3980, %v4076
    %v4078 = vpop.f32.mrf.mxu0
    %v4079 = vpop.f32.mrf.mxu0
    %v4080 = vadd.f32 %v3983, %v4079
    %v4081 = vpop.f32.mrf.mxu0
    %4082 = vmatprep.mubr.bf16.mxu0 %v1953
    %4083 = vmatmul.mubr.bf16.gmra.mxu0 %v1952
    %v4084 = vpop.f32.mrf.mxu0
    %v4085 = vadd.f32 %v3988, %v4084
    %v4086 = vpop.f32.mrf.mxu0
    %v4087 = vpop.f32.mrf.mxu0
    %v4088 = vadd.f32 %v3991, %v4087
    %v4089 = vpop.f32.mrf.mxu0
    %4090 = vmatprep.mubr.bf16.mxu0 %v1961
    %4091 = vmatmul.mubr.bf16.gmra.mxu0 %v1960
    %v4092 = vpop.f32.mrf.mxu0
    %v4093 = vadd.f32 %v3996, %v4092
    %v4094 = vpop.f32.mrf.mxu0
    %v4095 = vpop.f32.mrf.mxu0
    %v4096 = vadd.f32 %v3999, %v4095
    %v4097 = vpop.f32.mrf.mxu0
    %4098 = vmatprep.mubr.bf16.mxu0 %v1969
    %4099 = vmatmul.mubr.bf16.gmra.mxu0 %v1968
    %v4100 = vpop.f32.mrf.mxu0
    %v4101 = vadd.f32 %v4004, %v4100
    %v4102 = vpop.f32.mrf.mxu0
    %v4103 = vpop.f32.mrf.mxu0
    %v4104 = vadd.f32 %v4007, %v4103
    %v4105 = vpop.f32.mrf.mxu0
    %4106 = vmatprep.mubr.bf16.mxu0 %v1977
    %4107 = vmatmul.mubr.bf16.gmra.mxu0 %v1976
    %v4108 = vpop.f32.mrf.mxu0
    %v4109 = vadd.f32 %v4012, %v4108
    %v4110 = vpop.f32.mrf.mxu0
    %v4111 = vpop.f32.mrf.mxu0
    %v4112 = vadd.f32 %v4015, %v4111
    %v4113 = vpop.f32.mrf.mxu0
    %4114 = vdwg.mxu0
    %v4115 = vmul.f32 %v3649, %v3649
    %v4116 = vmul.f32 %v3651, %v3651
    %v4117 = vmul.f32 %v4053, %v4053
    %v4118 = vmul.f32 %v3653, %v3653
    %v4119 = vmul.f32 %v3655, %v3655
    %v4120 = vmul.f32 %v4056, %v4056
    %v4121 = vmul.f32 %v3659, %v3659
    %v4122 = vmul.f32 %v3661, %v3661
    %v4123 = vmul.f32 %v4061, %v4061
    %v4124 = vmul.f32 %v3663, %v3663
    %v4125 = vmul.f32 %v3665, %v3665
    %v4126 = vmul.f32 %v4064, %v4064
    %v4127 = vmul.f32 %v3669, %v3669
    %v4128 = vmul.f32 %v3671, %v3671
    %v4129 = vmul.f32 %v4069, %v4069
    %v4130 = vmul.f32 %v3673, %v3673
    %v4131 = vmul.f32 %v3675, %v3675
    %v4132 = vmul.f32 %v4072, %v4072
    %v4133 = vmul.f32 %v3679, %v3679
    %v4134 = vmul.f32 %v3681, %v3681
    %v4135 = vmul.f32 %v4077, %v4077
    %v4136 = vmul.f32 %v3683, %v3683
    %v4137 = vmul.f32 %v3685, %v3685
    %v4138 = vmul.f32 %v4080, %v4080
    %v4139 = vmul.f32 %v3689, %v3689
    %v4140 = vmul.f32 %v3691, %v3691
    %v4141 = vmul.f32 %v4085, %v4085
    %v4142 = vmul.f32 %v3693, %v3693
    %v4143 = vmul.f32 %v3695, %v3695
    %v4144 = vmul.f32 %v4088, %v4088
    %v4145 = vmul.f32 %v3699, %v3699
    %v4146 = vmul.f32 %v3701, %v3701
    %v4147 = vmul.f32 %v4093, %v4093
    %v4148 = vmul.f32 %v3703, %v3703
    %v4149 = vmul.f32 %v3705, %v3705
    %v4150 = vmul.f32 %v4096, %v4096
    %v4151 = vmul.f32 %v3709, %v3709
    %v4152 = vmul.f32 %v3711, %v3711
    %v4153 = vmul.f32 %v4101, %v4101
    %v4154 = vmul.f32 %v3713, %v3713
    %v4155 = vmul.f32 %v3715, %v3715
    %v4156 = vmul.f32 %v4104, %v4104
    %v4157 = vmul.f32 %v3719, %v3719
    %v4158 = vmul.f32 %v3721, %v3721
    %v4159 = vmul.f32 %v4109, %v4109
    %v4160 = vmul.f32 %v3723, %v3723
    %v4161 = vmul.f32 %v3725, %v3725
    %v4162 = vmul.f32 %v4112, %v4112
    %v4163 = vmul.f32 %v3649, %v4115
    %v4164 = vmul.f32 %v3651, %v4116
    %v4165 = vmul.f32 %v4053, %v4117
    %v4166 = vmul.f32 %v3653, %v4118
    %v4167 = vmul.f32 %v3655, %v4119
    %v4168 = vmul.f32 %v4056, %v4120
    %v4169 = vmul.f32 %v3659, %v4121
    %v4170 = vmul.f32 %v3661, %v4122
    %v4171 = vmul.f32 %v4061, %v4123
    %v4172 = vmul.f32 %v3663, %v4124
    %v4173 = vmul.f32 %v3665, %v4125
    %v4174 = vmul.f32 %v4064, %v4126
    %v4175 = vmul.f32 %v3669, %v4127
    %v4176 = vmul.f32 %v3671, %v4128
    %v4177 = vmul.f32 %v4069, %v4129
    %v4178 = vmul.f32 %v3673, %v4130
    %v4179 = vmul.f32 %v3675, %v4131
    %v4180 = vmul.f32 %v4072, %v4132
    %v4181 = vmul.f32 %v3679, %v4133
    %v4182 = vmul.f32 %v3681, %v4134
    %v4183 = vmul.f32 %v4077, %v4135
    %v4184 = vmul.f32 %v3683, %v4136
    %v4185 = vmul.f32 %v3685, %v4137
    %v4186 = vmul.f32 %v4080, %v4138
    %v4187 = vmul.f32 %v3689, %v4139
    %v4188 = vmul.f32 %v3691, %v4140
    %v4189 = vmul.f32 %v4085, %v4141
    %v4190 = vmul.f32 %v3693, %v4142
    %v4191 = vmul.f32 %v3695, %v4143
    %v4192 = vmul.f32 %v4088, %v4144
    %v4193 = vmul.f32 %v3699, %v4145
    %v4194 = vmul.f32 %v3701, %v4146
    %v4195 = vmul.f32 %v4093, %v4147
    %v4196 = vmul.f32 %v3703, %v4148
    %v4197 = vmul.f32 %v3705, %v4149
    %v4198 = vmul.f32 %v4096, %v4150
    %v4199 = vmul.f32 %v3709, %v4151
    %v4200 = vmul.f32 %v3711, %v4152
    %v4201 = vmul.f32 %v4101, %v4153
    %v4202 = vmul.f32 %v3713, %v4154
    %v4203 = vmul.f32 %v3715, %v4155
    %v4204 = vmul.f32 %v4104, %v4156
    %v4205 = vmul.f32 %v3719, %v4157
    %v4206 = vmul.f32 %v3721, %v4158
    %v4207 = vmul.f32 %v4109, %v4159
    %v4208 = vmul.f32 %v3723, %v4160
    %v4209 = vmul.f32 %v3725, %v4161
    %v4210 = vmul.f32 %v4112, %v4162
    %v4211 = vmul.f32 %v4163, 0.044715
    %v4212 = vmul.f32 %v4164, 0.044715
    %v4213 = vmul.f32 %v4165, 0.044715
    %v4214 = vmul.f32 %v4166, 0.044715
    %v4215 = vmul.f32 %v4167, 0.044715
    %v4216 = vmul.f32 %v4168, 0.044715
    %v4217 = vmul.f32 %v4169, 0.044715
    %v4218 = vmul.f32 %v4170, 0.044715
    %v4219 = vmul.f32 %v4171, 0.044715
    %v4220 = vmul.f32 %v4172, 0.044715
    %v4221 = vmul.f32 %v4173, 0.044715
    %v4222 = vmul.f32 %v4174, 0.044715
    %v4223 = vmul.f32 %v4175, 0.044715
    %v4224 = vmul.f32 %v4176, 0.044715
    %v4225 = vmul.f32 %v4177, 0.044715
    %v4226 = vmul.f32 %v4178, 0.044715
    %v4227 = vmul.f32 %v4179, 0.044715
    %v4228 = vmul.f32 %v4180, 0.044715
    %v4229 = vmul.f32 %v4181, 0.044715
    %v4230 = vmul.f32 %v4182, 0.044715
    %v4231 = vmul.f32 %v4183, 0.044715
    %v4232 = vmul.f32 %v4184, 0.044715
    %v4233 = vmul.f32 %v4185, 0.044715
    %v4234 = vmul.f32 %v4186, 0.044715
    %v4235 = vmul.f32 %v4187, 0.044715
    %v4236 = vmul.f32 %v4188, 0.044715
    %v4237 = vmul.f32 %v4189, 0.044715
    %v4238 = vmul.f32 %v4190, 0.044715
    %v4239 = vmul.f32 %v4191, 0.044715
    %v4240 = vmul.f32 %v4192, 0.044715
    %v4241 = vmul.f32 %v4193, 0.044715
    %v4242 = vmul.f32 %v4194, 0.044715
    %v4243 = vmul.f32 %v4195, 0.044715
    %v4244 = vmul.f32 %v4196, 0.044715
    %v4245 = vmul.f32 %v4197, 0.044715
    %v4246 = vmul.f32 %v4198, 0.044715
    %v4247 = vmul.f32 %v4199, 0.044715
    %v4248 = vmul.f32 %v4200, 0.044715
    %v4249 = vmul.f32 %v4201, 0.044715
    %v4250 = vmul.f32 %v4202, 0.044715
    %v4251 = vmul.f32 %v4203, 0.044715
    %v4252 = vmul.f32 %v4204, 0.044715
    %v4253 = vmul.f32 %v4205, 0.044715
    %v4254 = vmul.f32 %v4206, 0.044715
    %v4255 = vmul.f32 %v4207, 0.044715
    %v4256 = vmul.f32 %v4208, 0.044715
    %v4257 = vmul.f32 %v4209, 0.044715
    %v4258 = vmul.f32 %v4210, 0.044715
    %v4259 = vadd.f32 %v3649, %v4211
    %v4260 = vadd.f32 %v3651, %v4212
    %v4261 = vadd.f32 %v4053, %v4213
    %v4262 = vadd.f32 %v3653, %v4214
    %v4263 = vadd.f32 %v3655, %v4215
    %v4264 = vadd.f32 %v4056, %v4216
    %v4265 = vadd.f32 %v3659, %v4217
    %v4266 = vadd.f32 %v3661, %v4218
    %v4267 = vadd.f32 %v4061, %v4219
    %v4268 = vadd.f32 %v3663, %v4220
    %v4269 = vadd.f32 %v3665, %v4221
    %v4270 = vadd.f32 %v4064, %v4222
    %v4271 = vadd.f32 %v3669, %v4223
    %v4272 = vadd.f32 %v3671, %v4224
    %v4273 = vadd.f32 %v4069, %v4225
    %v4274 = vadd.f32 %v3673, %v4226
    %v4275 = vadd.f32 %v3675, %v4227
    %v4276 = vadd.f32 %v4072, %v4228
    %v4277 = vadd.f32 %v3679, %v4229
    %v4278 = vadd.f32 %v3681, %v4230
    %v4279 = vadd.f32 %v4077, %v4231
    %v4280 = vadd.f32 %v3683, %v4232
    %v4281 = vadd.f32 %v3685, %v4233
    %v4282 = vadd.f32 %v4080, %v4234
    %v4283 = vadd.f32 %v3689, %v4235
    %v4284 = vadd.f32 %v3691, %v4236
    %v4285 = vadd.f32 %v4085, %v4237
    %v4286 = vadd.f32 %v3693, %v4238
    %v4287 = vadd.f32 %v3695, %v4239
    %v4288 = vadd.f32 %v4088, %v4240
    %v4289 = vadd.f32 %v3699, %v4241
    %v4290 = vadd.f32 %v3701, %v4242
    %v4291 = vadd.f32 %v4093, %v4243
    %v4292 = vadd.f32 %v3703, %v4244
    %v4293 = vadd.f32 %v3705, %v4245
    %v4294 = vadd.f32 %v4096, %v4246
    %v4295 = vadd.f32 %v3709, %v4247
    %v4296 = vadd.f32 %v3711, %v4248
    %v4297 = vadd.f32 %v4101, %v4249
    %v4298 = vadd.f32 %v3713, %v4250
    %v4299 = vadd.f32 %v3715, %v4251
    %v4300 = vadd.f32 %v4104, %v4252
    %v4301 = vadd.f32 %v3719, %v4253
    %v4302 = vadd.f32 %v3721, %v4254
    %v4303 = vadd.f32 %v4109, %v4255
    %v4304 = vadd.f32 %v3723, %v4256
    %v4305 = vadd.f32 %v3725, %v4257
    %v4306 = vadd.f32 %v4112, %v4258
    %v4307 = vmul.f32 %v4259, 0.7978846
    %v4308 = vmul.f32 %v4260, 0.7978846
    %v4309 = vmul.f32 %v4261, 0.7978846
    %v4310 = vmul.f32 %v4262, 0.7978846
    %v4311 = vmul.f32 %v4263, 0.7978846
    %v4312 = vmul.f32 %v4264, 0.7978846
    %v4313 = vmul.f32 %v4265, 0.7978846
    %v4314 = vmul.f32 %v4266, 0.7978846
    %v4315 = vmul.f32 %v4267, 0.7978846
    %v4316 = vmul.f32 %v4268, 0.7978846
    %v4317 = vmul.f32 %v4269, 0.7978846
    %v4318 = vmul.f32 %v4270, 0.7978846
    %v4319 = vmul.f32 %v4271, 0.7978846
    %v4320 = vmul.f32 %v4272, 0.7978846
    %v4321 = vmul.f32 %v4273, 0.7978846
    %v4322 = vmul.f32 %v4274, 0.7978846
    %v4323 = vmul.f32 %v4275, 0.7978846
    %v4324 = vmul.f32 %v4276, 0.7978846
    %v4325 = vmul.f32 %v4277, 0.7978846
    %v4326 = vmul.f32 %v4278, 0.7978846
    %v4327 = vmul.f32 %v4279, 0.7978846
    %v4328 = vmul.f32 %v4280, 0.7978846
    %v4329 = vmul.f32 %v4281, 0.7978846
    %v4330 = vmul.f32 %v4282, 0.7978846
    %v4331 = vmul.f32 %v4283, 0.7978846
    %v4332 = vmul.f32 %v4284, 0.7978846
    %v4333 = vmul.f32 %v4285, 0.7978846
    %v4334 = vmul.f32 %v4286, 0.7978846
    %v4335 = vmul.f32 %v4287, 0.7978846
    %v4336 = vmul.f32 %v4288, 0.7978846
    %v4337 = vmul.f32 %v4289, 0.7978846
    %v4338 = vmul.f32 %v4290, 0.7978846
    %v4339 = vmul.f32 %v4291, 0.7978846
    %v4340 = vmul.f32 %v4292, 0.7978846
    %v4341 = vmul.f32 %v4293, 0.7978846
    %v4342 = vmul.f32 %v4294, 0.7978846
    %v4343 = vmul.f32 %v4295, 0.7978846
    %v4344 = vmul.f32 %v4296, 0.7978846
    %v4345 = vmul.f32 %v4297, 0.7978846
    %v4346 = vmul.f32 %v4298, 0.7978846
    %v4347 = vmul.f32 %v4299, 0.7978846
    %v4348 = vmul.f32 %v4300, 0.7978846
    %v4349 = vmul.f32 %v4301, 0.7978846
    %v4350 = vmul.f32 %v4302, 0.7978846
    %v4351 = vmul.f32 %v4303, 0.7978846
    %v4352 = vmul.f32 %v4304, 0.7978846
    %v4353 = vmul.f32 %v4305, 0.7978846
    %v4354 = vmul.f32 %v4306, 0.7978846
    %v4355 = vtanh.pop %v4307
    %v4356 = vtanh.pop %v4308
    %v4357 = vtanh.pop %v4309
    %v4358 = vtanh.pop %v4310
    %v4359 = vtanh.pop %v4311
    %v4360 = vtanh.pop %v4312
    %v4361 = vtanh.pop %v4313
    %v4362 = vtanh.pop %v4314
    %v4363 = vtanh.pop %v4315
    %v4364 = vtanh.pop %v4316
    %v4365 = vtanh.pop %v4317
    %v4366 = vtanh.pop %v4318
    %v4367 = vtanh.pop %v4319
    %v4368 = vtanh.pop %v4320
    %v4369 = vtanh.pop %v4321
    %v4370 = vtanh.pop %v4322
    %v4371 = vtanh.pop %v4323
    %v4372 = vtanh.pop %v4324
    %v4373 = vtanh.pop %v4325
    %v4374 = vtanh.pop %v4326
    %v4375 = vtanh.pop %v4327
    %v4376 = vtanh.pop %v4328
    %v4377 = vtanh.pop %v4329
    %v4378 = vtanh.pop %v4330
    %v4379 = vtanh.pop %v4331
    %v4380 = vtanh.pop %v4332
    %v4381 = vtanh.pop %v4333
    %v4382 = vtanh.pop %v4334
    %v4383 = vtanh.pop %v4335
    %v4384 = vtanh.pop %v4336
    %v4385 = vtanh.pop %v4337
    %v4386 = vtanh.pop %v4338
    %v4387 = vtanh.pop %v4339
    %v4388 = vtanh.pop %v4340
    %v4389 = vtanh.pop %v4341
    %v4390 = vtanh.pop %v4342
    %v4391 = vtanh.pop %v4343
    %v4392 = vtanh.pop %v4344
    %v4393 = vtanh.pop %v4345
    %v4394 = vtanh.pop %v4346
    %v4395 = vtanh.pop %v4347
    %v4396 = vtanh.pop %v4348
    %v4397 = vtanh.pop %v4349
    %v4398 = vtanh.pop %v4350
    %v4399 = vtanh.pop %v4351
    %v4400 = vtanh.pop %v4352
    %v4401 = vtanh.pop %v4353
    %v4402 = vtanh.pop %v4354
    %v4403 = vadd.f32 %v4355, 1.0
    %v4404 = vadd.f32 %v4356, 1.0
    %v4405 = vadd.f32 %v4357, 1.0
    %v4406 = vadd.f32 %v4358, 1.0
    %v4407 = vadd.f32 %v4359, 1.0
    %v4408 = vadd.f32 %v4360, 1.0
    %v4409 = vadd.f32 %v4361, 1.0
    %v4410 = vadd.f32 %v4362, 1.0
    %v4411 = vadd.f32 %v4363, 1.0
    %v4412 = vadd.f32 %v4364, 1.0
    %v4413 = vadd.f32 %v4365, 1.0
    %v4414 = vadd.f32 %v4366, 1.0
    %v4415 = vadd.f32 %v4367, 1.0
    %v4416 = vadd.f32 %v4368, 1.0
    %v4417 = vadd.f32 %v4369, 1.0
    %v4418 = vadd.f32 %v4370, 1.0
    %v4419 = vadd.f32 %v4371, 1.0
    %v4420 = vadd.f32 %v4372, 1.0
    %v4421 = vadd.f32 %v4373, 1.0
    %v4422 = vadd.f32 %v4374, 1.0
    %v4423 = vadd.f32 %v4375, 1.0
    %v4424 = vadd.f32 %v4376, 1.0
    %v4425 = vadd.f32 %v4377, 1.0
    %v4426 = vadd.f32 %v4378, 1.0
    %v4427 = vadd.f32 %v4379, 1.0
    %v4428 = vadd.f32 %v4380, 1.0
    %v4429 = vadd.f32 %v4381, 1.0
    %v4430 = vadd.f32 %v4382, 1.0
    %v4431 = vadd.f32 %v4383, 1.0
    %v4432 = vadd.f32 %v4384, 1.0
    %v4433 = vadd.f32 %v4385, 1.0
    %v4434 = vadd.f32 %v4386, 1.0
    %v4435 = vadd.f32 %v4387, 1.0
    %v4436 = vadd.f32 %v4388, 1.0
    %v4437 = vadd.f32 %v4389, 1.0
    %v4438 = vadd.f32 %v4390, 1.0
    %v4439 = vadd.f32 %v4391, 1.0
    %v4440 = vadd.f32 %v4392, 1.0
    %v4441 = vadd.f32 %v4393, 1.0
    %v4442 = vadd.f32 %v4394, 1.0
    %v4443 = vadd.f32 %v4395, 1.0
    %v4444 = vadd.f32 %v4396, 1.0
    %v4445 = vadd.f32 %v4397, 1.0
    %v4446 = vadd.f32 %v4398, 1.0
    %v4447 = vadd.f32 %v4399, 1.0
    %v4448 = vadd.f32 %v4400, 1.0
    %v4449 = vadd.f32 %v4401, 1.0
    %v4450 = vadd.f32 %v4402, 1.0
    %v4451 = vmul.f32 %v4403, 0.5
    %v4452 = vmul.f32 %v4404, 0.5
    %v4453 = vmul.f32 %v4405, 0.5
    %v4454 = vmul.f32 %v4406, 0.5
    %v4455 = vmul.f32 %v4407, 0.5
    %v4456 = vmul.f32 %v4408, 0.5
    %v4457 = vmul.f32 %v4409, 0.5
    %v4458 = vmul.f32 %v4410, 0.5
    %v4459 = vmul.f32 %v4411, 0.5
    %v4460 = vmul.f32 %v4412, 0.5
    %v4461 = vmul.f32 %v4413, 0.5
    %v4462 = vmul.f32 %v4414, 0.5
    %v4463 = vmul.f32 %v4415, 0.5
    %v4464 = vmul.f32 %v4416, 0.5
    %v4465 = vmul.f32 %v4417, 0.5
    %v4466 = vmul.f32 %v4418, 0.5
    %v4467 = vmul.f32 %v4419, 0.5
    %v4468 = vmul.f32 %v4420, 0.5
    %v4469 = vmul.f32 %v4421, 0.5
    %v4470 = vmul.f32 %v4422, 0.5
    %v4471 = vmul.f32 %v4423, 0.5
    %v4472 = vmul.f32 %v4424, 0.5
    %v4473 = vmul.f32 %v4425, 0.5
    %v4474 = vmul.f32 %v4426, 0.5
    %v4475 = vmul.f32 %v4427, 0.5
    %v4476 = vmul.f32 %v4428, 0.5
    %v4477 = vmul.f32 %v4429, 0.5
    %v4478 = vmul.f32 %v4430, 0.5
    %v4479 = vmul.f32 %v4431, 0.5
    %v4480 = vmul.f32 %v4432, 0.5
    %v4481 = vmul.f32 %v4433, 0.5
    %v4482 = vmul.f32 %v4434, 0.5
    %v4483 = vmul.f32 %v4435, 0.5
    %v4484 = vmul.f32 %v4436, 0.5
    %v4485 = vmul.f32 %v4437, 0.5
    %v4486 = vmul.f32 %v4438, 0.5
    %v4487 = vmul.f32 %v4439, 0.5
    %v4488 = vmul.f32 %v4440, 0.5
    %v4489 = vmul.f32 %v4441, 0.5
    %v4490 = vmul.f32 %v4442, 0.5
    %v4491 = vmul.f32 %v4443, 0.5
    %v4492 = vmul.f32 %v4444, 0.5
    %v4493 = vmul.f32 %v4445, 0.5
    %v4494 = vmul.f32 %v4446, 0.5
    %v4495 = vmul.f32 %v4447, 0.5
    %v4496 = vmul.f32 %v4448, 0.5
    %v4497 = vmul.f32 %v4449, 0.5
    %v4498 = vmul.f32 %v4450, 0.5
    %v4499 = vmul.f32 %v3649, %v4451
    %v4500 = vmul.f32 %v3651, %v4452
    %v4501 = vmul.f32 %v4053, %v4453
    %v4502 = vmul.f32 %v3653, %v4454
    %v4503 = vmul.f32 %v3655, %v4455
    %v4504 = vmul.f32 %v4056, %v4456
    %v4505 = vmul.f32 %v3659, %v4457
    %v4506 = vmul.f32 %v3661, %v4458
    %v4507 = vmul.f32 %v4061, %v4459
    %v4508 = vmul.f32 %v3663, %v4460
    %v4509 = vmul.f32 %v3665, %v4461
    %v4510 = vmul.f32 %v4064, %v4462
    %v4511 = vmul.f32 %v3669, %v4463
    %v4512 = vmul.f32 %v3671, %v4464
    %v4513 = vmul.f32 %v4069, %v4465
    %v4514 = vmul.f32 %v3673, %v4466
    %v4515 = vmul.f32 %v3675, %v4467
    %v4516 = vmul.f32 %v4072, %v4468
    %v4517 = vmul.f32 %v3679, %v4469
    %v4518 = vmul.f32 %v3681, %v4470
    %v4519 = vmul.f32 %v4077, %v4471
    %v4520 = vmul.f32 %v3683, %v4472
    %v4521 = vmul.f32 %v3685, %v4473
    %v4522 = vmul.f32 %v4080, %v4474
    %v4523 = vmul.f32 %v3689, %v4475
    %v4524 = vmul.f32 %v3691, %v4476
    %v4525 = vmul.f32 %v4085, %v4477
    %v4526 = vmul.f32 %v3693, %v4478
    %v4527 = vmul.f32 %v3695, %v4479
    %v4528 = vmul.f32 %v4088, %v4480
    %v4529 = vmul.f32 %v3699, %v4481
    %v4530 = vmul.f32 %v3701, %v4482
    %v4531 = vmul.f32 %v4093, %v4483
    %v4532 = vmul.f32 %v3703, %v4484
    %v4533 = vmul.f32 %v3705, %v4485
    %v4534 = vmul.f32 %v4096, %v4486
    %v4535 = vmul.f32 %v3709, %v4487
    %v4536 = vmul.f32 %v3711, %v4488
    %v4537 = vmul.f32 %v4101, %v4489
    %v4538 = vmul.f32 %v3713, %v4490
    %v4539 = vmul.f32 %v3715, %v4491
    %v4540 = vmul.f32 %v4104, %v4492
    %v4541 = vmul.f32 %v3719, %v4493
    %v4542 = vmul.f32 %v3721, %v4494
    %v4543 = vmul.f32 %v4109, %v4495
    %v4544 = vmul.f32 %v3723, %v4496
    %v4545 = vmul.f32 %v3725, %v4497
    %v4546 = vmul.f32 %v4112, %v4498
    %v4547 = vpack.c.bf16 %v4502, %v4499
    %v4548 = vpack.c.bf16 %v4503, %v4500
    %v4549 = vpack.c.bf16 %v4504, %v4501
    %v4550 = vpack.c.bf16 %v4508, %v4505
    %v4551 = vpack.c.bf16 %v4509, %v4506
    %v4552 = vpack.c.bf16 %v4510, %v4507
    %v4553 = vpack.c.bf16 %v4514, %v4511
    %v4554 = vpack.c.bf16 %v4515, %v4512
    %v4555 = vpack.c.bf16 %v4516, %v4513
    %v4556 = vpack.c.bf16 %v4520, %v4517
    %v4557 = vpack.c.bf16 %v4521, %v4518
    %v4558 = vpack.c.bf16 %v4522, %v4519
    %v4559 = vpack.c.bf16 %v4526, %v4523
    %v4560 = vpack.c.bf16 %v4527, %v4524
    %v4561 = vpack.c.bf16 %v4528, %v4525
    %v4562 = vpack.c.bf16 %v4532, %v4529
    %v4563 = vpack.c.bf16 %v4533, %v4530
    %v4564 = vpack.c.bf16 %v4534, %v4531
    %v4565 = vpack.c.bf16 %v4538, %v4535
    %v4566 = vpack.c.bf16 %v4539, %v4536
    %v4567 = vpack.c.bf16 %v4540, %v4537
    %v4568 = vpack.c.bf16 %v4544, %v4541
    %v4569 = vpack.c.bf16 %v4545, %v4542
    %v4570 = vpack.c.bf16 %v4546, %v4543
    %v4571 = vld [vmem:[#allocation5] sm:$0xf]
    %v4572 = vld [vmem:[#allocation5 + $0x4] sm:$0xf]
    %v4573 = vld [vmem:[#allocation5 + $0x8] sm:$0xf]
    %v4574 = vld [vmem:[#allocation5 + $0xc] sm:$0xf]
    %v4575 = vld [vmem:[#allocation5 + $0x10] sm:$0xf]
    %v4576 = vld [vmem:[#allocation5 + $0x14] sm:$0xf]
    %v4577 = vld [vmem:[#allocation5 + $0x18] sm:$0xf]
    %v4578 = vld [vmem:[#allocation5 + $0x1c] sm:$0xf]
    %v4579 = vld [vmem:[#allocation5 + $0x20] sm:$0xf]
    %v4580 = vld [vmem:[#allocation5 + $0x24] sm:$0xf]
    %v4581 = vld [vmem:[#allocation5 + $0x28] sm:$0xf]
    %v4582 = vld [vmem:[#allocation5 + $0x2c] sm:$0xf]
    %v4583 = vld [vmem:[#allocation5 + $0x30] sm:$0xf]
    %v4584 = vld [vmem:[#allocation5 + $0x34] sm:$0xf]
    %v4585 = vld [vmem:[#allocation5 + $0x38] sm:$0xf]
    %v4586 = vld [vmem:[#allocation5 + $0x3c] sm:$0xf]
    %v4587 = vld [vmem:[#allocation5 + $0x40] sm:$0xf]
    %v4588 = vld [vmem:[#allocation5 + $0x44] sm:$0xf]
    %v4589 = vld [vmem:[#allocation5 + $0x48] sm:$0xf]
    %v4590 = vld [vmem:[#allocation5 + $0x4c] sm:$0xf]
    %v4591 = vld [vmem:[#allocation5 + $0x50] sm:$0xf]
    %v4592 = vld [vmem:[#allocation5 + $0x54] sm:$0xf]
    %v4593 = vld [vmem:[#allocation5 + $0x58] sm:$0xf]
    %v4594 = vld [vmem:[#allocation5 + $0x5c] sm:$0xf]
    %v4595 = vld [vmem:[#allocation5 + $0x60] sm:$0xf]
    %v4596 = vld [vmem:[#allocation5 + $0x64] sm:$0xf]
    %v4597 = vld [vmem:[#allocation5 + $0x68] sm:$0xf]
    %v4598 = vld [vmem:[#allocation5 + $0x6c] sm:$0xf]
    %v4599 = vld [vmem:[#allocation5 + $0x70] sm:$0xf]
    %v4600 = vld [vmem:[#allocation5 + $0x74] sm:$0xf]
    %v4601 = vld [vmem:[#allocation5 + $0x78] sm:$0xf]
    %v4602 = vld [vmem:[#allocation5 + $0x7c] sm:$0xf]
    %v4603 = vld [vmem:[#allocation5 + $0x80] sm:$0xf]
    %v4604 = vld [vmem:[#allocation5 + $0x84] sm:$0xf]
    %v4605 = vld [vmem:[#allocation5 + $0x88] sm:$0xf]
    %v4606 = vld [vmem:[#allocation5 + $0x8c] sm:$0xf]
    %v4607 = vld [vmem:[#allocation5 + $0x90] sm:$0xf]
    %v4608 = vld [vmem:[#allocation5 + $0x94] sm:$0xf]
    %v4609 = vld [vmem:[#allocation5 + $0x98] sm:$0xf]
    %v4610 = vld [vmem:[#allocation5 + $0x9c] sm:$0xf]
    %v4611 = vld [vmem:[#allocation5 + $0xa0] sm:$0xf]
    %v4612 = vld [vmem:[#allocation5 + $0xa4] sm:$0xf]
    %v4613 = vld [vmem:[#allocation5 + $0xa8] sm:$0xf]
    %v4614 = vld [vmem:[#allocation5 + $0xac] sm:$0xf]
    %v4615 = vld [vmem:[#allocation5 + $0xb0] sm:$0xf]
    %v4616 = vld [vmem:[#allocation5 + $0xb4] sm:$0xf]
    %v4617 = vld [vmem:[#allocation5 + $0xb8] sm:$0xf]
    %v4618 = vld [vmem:[#allocation5 + $0xbc] sm:$0xf]
    %v4619 = vld [vmem:[%s7] sm:$0x1]
    %v4621 = vlaneseq
    %v4622 = vshrl.u32 %v4621, 7
    %v4623 = vsub.s32 0, %v4622
    %v4624 = vrot.slane %v4619, %v4623
    %v4674 = vunpack.c.l.b16 %v4571
    %v4675 = vunpack.c.l.b16 %v4572
    %v4676 = vunpack.c.l.b16 %v4573
    %v4677 = vunpack.c.l.b16 %v4574
    %v4678 = vunpack.c.l.b16 %v4575
    %v4679 = vunpack.c.l.b16 %v4576
    %v4680 = vunpack.c.l.b16 %v4577
    %v4681 = vunpack.c.l.b16 %v4578
    %v4682 = vunpack.c.l.b16 %v4579
    %v4683 = vunpack.c.l.b16 %v4580
    %v4684 = vunpack.c.l.b16 %v4581
    %v4685 = vunpack.c.l.b16 %v4582
    %v4686 = vunpack.c.l.b16 %v4583
    %v4687 = vunpack.c.l.b16 %v4584
    %v4688 = vunpack.c.l.b16 %v4585
    %v4689 = vunpack.c.l.b16 %v4586
    %v4690 = vunpack.c.l.b16 %v4587
    %v4691 = vunpack.c.l.b16 %v4588
    %v4692 = vunpack.c.l.b16 %v4589
    %v4693 = vunpack.c.l.b16 %v4590
    %v4694 = vunpack.c.l.b16 %v4591
    %v4695 = vunpack.c.l.b16 %v4592
    %v4696 = vunpack.c.l.b16 %v4593
    %v4697 = vunpack.c.l.b16 %v4594
    %v4698 = vunpack.c.l.b16 %v4595
    %v4699 = vunpack.c.l.b16 %v4596
    %v4700 = vunpack.c.l.b16 %v4597
    %v4701 = vunpack.c.l.b16 %v4598
    %v4702 = vunpack.c.l.b16 %v4599
    %v4703 = vunpack.c.l.b16 %v4600
    %v4704 = vunpack.c.l.b16 %v4601
    %v4705 = vunpack.c.l.b16 %v4602
    %v4706 = vunpack.c.l.b16 %v4603
    %v4707 = vunpack.c.l.b16 %v4604
    %v4708 = vunpack.c.l.b16 %v4605
    %v4709 = vunpack.c.l.b16 %v4606
    %v4710 = vunpack.c.l.b16 %v4607
    %v4711 = vunpack.c.l.b16 %v4608
    %v4712 = vunpack.c.l.b16 %v4609
    %v4713 = vunpack.c.l.b16 %v4610
    %v4714 = vunpack.c.l.b16 %v4611
    %v4715 = vunpack.c.l.b16 %v4612
    %v4716 = vunpack.c.l.b16 %v4613
    %v4717 = vunpack.c.l.b16 %v4614
    %v4718 = vunpack.c.l.b16 %v4615
    %v4719 = vunpack.c.l.b16 %v4616
    %v4720 = vunpack.c.l.b16 %v4617
    %v4721 = vunpack.c.l.b16 %v4618
    %v4722 = vpack.c.b16 %v4675, %v4674
    %v4723 = vpack.c.b16 %v4677, %v4676
    %v4724 = vpack.c.b16 %v4679, %v4678
    %v4725 = vpack.c.b16 %v4681, %v4680
    %v4726 = vpack.c.b16 %v4683, %v4682
    %v4727 = vpack.c.b16 %v4685, %v4684
    %v4728 = vpack.c.b16 %v4687, %v4686
    %v4729 = vpack.c.b16 %v4689, %v4688
    %v4730 = vpack.c.b16 %v4691, %v4690
    %v4731 = vpack.c.b16 %v4693, %v4692
    %v4732 = vpack.c.b16 %v4695, %v4694
    %v4733 = vpack.c.b16 %v4697, %v4696
    %v4734 = vpack.c.b16 %v4699, %v4698
    %v4735 = vpack.c.b16 %v4701, %v4700
    %v4736 = vpack.c.b16 %v4703, %v4702
    %v4737 = vpack.c.b16 %v4705, %v4704
    %v4738 = vpack.c.b16 %v4707, %v4706
    %v4739 = vpack.c.b16 %v4709, %v4708
    %v4740 = vpack.c.b16 %v4711, %v4710
    %v4741 = vpack.c.b16 %v4713, %v4712
    %v4742 = vpack.c.b16 %v4715, %v4714
    %v4743 = vpack.c.b16 %v4717, %v4716
    %v4744 = vpack.c.b16 %v4719, %v4718
    %v4745 = vpack.c.b16 %v4721, %v4720
    %4770 = vmatprep.subr.bf16.mxu0 0
    %4771 = vmatpush1.bf16.msra.mxu0 %v4729
    %4772 = vmatprep.subr.bf16.mxu0 0
    %4773 = vmatpush1.bf16.msra.mxu0 %v4728
    %4774 = vmatprep.subr.bf16.mxu0 0
    %4775 = vmatpush1.bf16.msra.mxu0 %v4727
    %4776 = vmatprep.subr.bf16.mxu0 0
    %4777 = vmatpush1.bf16.msra.mxu0 %v4726
    %4778 = vmatprep.subr.bf16.mxu0 0
    %4779 = vmatpush1.bf16.msra.mxu0 %v4725
    %4780 = vmatprep.subr.bf16.mxu0 0
    %4781 = vmatpush1.bf16.msra.mxu0 %v4724
    %4782 = vmatprep.subr.bf16.mxu0 0
    %4783 = vmatpush1.bf16.msra.mxu0 %v4723
    %4784 = vmatprep.subr.bf16.mxu0 0
    %4785 = vmatpush1.bf16.msra.mxu0 %v4722
    %4786 = vmatprep.subr.bf16.mxu0 0
    %4787 = vmatpush2.bf16.msra.mxu0 %v4737
    %4788 = vmatprep.subr.bf16.mxu0 0
    %4789 = vmatpush2.bf16.msra.mxu0 %v4736
    %4790 = vmatprep.subr.bf16.mxu0 0
    %4791 = vmatpush2.bf16.msra.mxu0 %v4735
    %4792 = vmatprep.subr.bf16.mxu0 0
    %4793 = vmatpush2.bf16.msra.mxu0 %v4734
    %4794 = vmatprep.subr.bf16.mxu0 0
    %4795 = vmatpush2.bf16.msra.mxu0 %v4733
    %4796 = vmatprep.subr.bf16.mxu0 0
    %4797 = vmatpush2.bf16.msra.mxu0 %v4732
    %4798 = vmatprep.subr.bf16.mxu0 0
    %4799 = vmatpush2.bf16.msra.mxu0 %v4731
    %4800 = vmatprep.subr.bf16.mxu0 0
    %4801 = vmatpush2.bf16.msra.mxu0 %v4730
    %4802 = vmatprep.mubr.bf16.mxu0 %v4548
    %4803 = vmatmul.mubr.bf16.gmra.mxu0 %v4547
    %v4804 = vpop.f32.mrf.mxu0
    %v4805 = vadd.f32 %v4624, %v4804
    %v4806 = vpop.f32.mrf.mxu0
    %v4807 = vpop.f32.mrf.mxu0
    %v4808 = vadd.f32 %v4624, %v4807
    %v4809 = vpop.f32.mrf.mxu0
    %4810 = vmatprep.mubr.bf16.mxu0 %v4551
    %4811 = vmatmul.mubr.bf16.gmra.mxu0 %v4550
    %v4812 = vpop.f32.mrf.mxu0
    %v4813 = vadd.f32 %v4624, %v4812
    %v4814 = vpop.f32.mrf.mxu0
    %v4815 = vpop.f32.mrf.mxu0
    %v4816 = vadd.f32 %v4624, %v4815
    %v4817 = vpop.f32.mrf.mxu0
    %4818 = vmatprep.mubr.bf16.mxu0 %v4554
    %4819 = vmatmul.mubr.bf16.gmra.mxu0 %v4553
    %v4820 = vpop.f32.mrf.mxu0
    %v4821 = vadd.f32 %v4624, %v4820
    %v4822 = vpop.f32.mrf.mxu0
    %v4823 = vpop.f32.mrf.mxu0
    %v4824 = vadd.f32 %v4624, %v4823
    %v4825 = vpop.f32.mrf.mxu0
    %4826 = vmatprep.mubr.bf16.mxu0 %v4557
    %4827 = vmatmul.mubr.bf16.gmra.mxu0 %v4556
    %v4828 = vpop.f32.mrf.mxu0
    %v4829 = vadd.f32 %v4624, %v4828
    %v4830 = vpop.f32.mrf.mxu0
    %v4831 = vpop.f32.mrf.mxu0
    %v4832 = vadd.f32 %v4624, %v4831
    %v4833 = vpop.f32.mrf.mxu0
    %4834 = vmatprep.mubr.bf16.mxu0 %v4560
    %4835 = vmatmul.mubr.bf16.gmra.mxu0 %v4559
    %v4836 = vpop.f32.mrf.mxu0
    %v4837 = vadd.f32 %v4624, %v4836
    %v4838 = vpop.f32.mrf.mxu0
    %v4839 = vpop.f32.mrf.mxu0
    %v4840 = vadd.f32 %v4624, %v4839
    %v4841 = vpop.f32.mrf.mxu0
    %4842 = vmatprep.mubr.bf16.mxu0 %v4563
    %4843 = vmatmul.mubr.bf16.gmra.mxu0 %v4562
    %v4844 = vpop.f32.mrf.mxu0
    %v4845 = vadd.f32 %v4624, %v4844
    %v4846 = vpop.f32.mrf.mxu0
    %v4847 = vpop.f32.mrf.mxu0
    %v4848 = vadd.f32 %v4624, %v4847
    %v4849 = vpop.f32.mrf.mxu0
    %4850 = vmatprep.mubr.bf16.mxu0 %v4566
    %4851 = vmatmul.mubr.bf16.gmra.mxu0 %v4565
    %v4852 = vpop.f32.mrf.mxu0
    %v4853 = vadd.f32 %v4624, %v4852
    %v4854 = vpop.f32.mrf.mxu0
    %v4855 = vpop.f32.mrf.mxu0
    %v4856 = vadd.f32 %v4624, %v4855
    %v4857 = vpop.f32.mrf.mxu0
    %4858 = vmatprep.mubr.bf16.mxu0 %v4569
    %4859 = vmatmul.mubr.bf16.gmra.mxu0 %v4568
    %v4860 = vpop.f32.mrf.mxu0
    %v4861 = vadd.f32 %v4624, %v4860
    %v4862 = vpop.f32.mrf.mxu0
    %v4863 = vpop.f32.mrf.mxu0
    %v4864 = vadd.f32 %v4624, %v4863
    %v4865 = vpop.f32.mrf.mxu0
    %4866 = vdwg.mxu0
    %4867 = vmatprep.subr.bf16.mxu0 0
    %4868 = vmatpush1.bf16.msra.mxu0 %v4745
    %4869 = vmatprep.subr.bf16.mxu0 0
    %4870 = vmatpush1.bf16.msra.mxu0 %v4744
    %4871 = vmatprep.subr.bf16.mxu0 0
    %4872 = vmatpush1.bf16.msra.mxu0 %v4743
    %4873 = vmatprep.subr.bf16.mxu0 0
    %4874 = vmatpush1.bf16.msra.mxu0 %v4742
    %4875 = vmatprep.subr.bf16.mxu0 0
    %4876 = vmatpush1.bf16.msra.mxu0 %v4741
    %4877 = vmatprep.subr.bf16.mxu0 0
    %4878 = vmatpush1.bf16.msra.mxu0 %v4740
    %4879 = vmatprep.subr.bf16.mxu0 0
    %4880 = vmatpush1.bf16.msra.mxu0 %v4739
    %4881 = vmatprep.subr.bf16.mxu0 0
    %4882 = vmatpush1.bf16.msra.mxu0 %v4738
    %4883 = vmatprep.subr.bf16.mxu0 0
    %4884 = vmatpush2.bf16.msra.mxu0 0
    %4885 = vmatprep.subr.bf16.mxu0 0
    %4886 = vmatpush2.bf16.msra.mxu0 0
    %4887 = vmatprep.subr.bf16.mxu0 0
    %4888 = vmatpush2.bf16.msra.mxu0 0
    %4889 = vmatprep.subr.bf16.mxu0 0
    %4890 = vmatpush2.bf16.msra.mxu0 0
    %4891 = vmatprep.subr.bf16.mxu0 0
    %4892 = vmatpush2.bf16.msra.mxu0 0
    %4893 = vmatprep.subr.bf16.mxu0 0
    %4894 = vmatpush2.bf16.msra.mxu0 0
    %4895 = vmatprep.subr.bf16.mxu0 0
    %4896 = vmatpush2.bf16.msra.mxu0 0
    %4897 = vmatprep.subr.bf16.mxu0 0
    %4898 = vmatpush2.bf16.msra.mxu0 0
    %4899 = vmatprep.mubr.bf16.mxu0 0
    %4900 = vmatmul.mubr.bf16.gmra.mxu0 %v4549
    %v4901 = vpop.f32.mrf.mxu0
    %v4902 = vadd.f32 %v4805, %v4901
    %v4903 = vpop.f32.mrf.mxu0
    %v4904 = vpop.f32.mrf.mxu0
    %v4905 = vadd.f32 %v4808, %v4904
    %v4906 = vpop.f32.mrf.mxu0
    %4907 = vmatprep.mubr.bf16.mxu0 0
    %4908 = vmatmul.mubr.bf16.gmra.mxu0 %v4552
    %v4909 = vpop.f32.mrf.mxu0
    %v4910 = vadd.f32 %v4813, %v4909
    %v4911 = vpop.f32.mrf.mxu0
    %v4912 = vpop.f32.mrf.mxu0
    %v4913 = vadd.f32 %v4816, %v4912
    %v4914 = vpop.f32.mrf.mxu0
    %4915 = vmatprep.mubr.bf16.mxu0 0
    %4916 = vmatmul.mubr.bf16.gmra.mxu0 %v4555
    %v4917 = vpop.f32.mrf.mxu0
    %v4918 = vadd.f32 %v4821, %v4917
    %v4919 = vpop.f32.mrf.mxu0
    %v4920 = vpop.f32.mrf.mxu0
    %v4921 = vadd.f32 %v4824, %v4920
    %v4922 = vpop.f32.mrf.mxu0
    %4923 = vmatprep.mubr.bf16.mxu0 0
    %4924 = vmatmul.mubr.bf16.gmra.mxu0 %v4558
    %v4925 = vpop.f32.mrf.mxu0
    %v4926 = vadd.f32 %v4829, %v4925
    %v4927 = vpop.f32.mrf.mxu0
    %v4928 = vpop.f32.mrf.mxu0
    %v4929 = vadd.f32 %v4832, %v4928
    %v4930 = vpop.f32.mrf.mxu0
    %4931 = vmatprep.mubr.bf16.mxu0 0
    %4932 = vmatmul.mubr.bf16.gmra.mxu0 %v4561
    %v4933 = vpop.f32.mrf.mxu0
    %v4934 = vadd.f32 %v4837, %v4933
    %v4935 = vpop.f32.mrf.mxu0
    %v4936 = vpop.f32.mrf.mxu0
    %v4937 = vadd.f32 %v4840, %v4936
    %v4938 = vpop.f32.mrf.mxu0
    %4939 = vmatprep.mubr.bf16.mxu0 0
    %4940 = vmatmul.mubr.bf16.gmra.mxu0 %v4564
    %v4941 = vpop.f32.mrf.mxu0
    %v4942 = vadd.f32 %v4845, %v4941
    %v4943 = vpop.f32.mrf.mxu0
    %v4944 = vpop.f32.mrf.mxu0
    %v4945 = vadd.f32 %v4848, %v4944
    %v4946 = vpop.f32.mrf.mxu0
    %4947 = vmatprep.mubr.bf16.mxu0 0
    %4948 = vmatmul.mubr.bf16.gmra.mxu0 %v4567
    %v4949 = vpop.f32.mrf.mxu0
    %v4950 = vadd.f32 %v4853, %v4949
    %v4951 = vpop.f32.mrf.mxu0
    %v4952 = vpop.f32.mrf.mxu0
    %v4953 = vadd.f32 %v4856, %v4952
    %v4954 = vpop.f32.mrf.mxu0
    %4955 = vmatprep.mubr.bf16.mxu0 0
    %4956 = vmatmul.mubr.bf16.gmra.mxu0 %v4570
    %v4957 = vpop.f32.mrf.mxu0
    %v4958 = vadd.f32 %v4861, %v4957
    %v4959 = vpop.f32.mrf.mxu0
    %v4960 = vpop.f32.mrf.mxu0
    %v4961 = vadd.f32 %v4864, %v4960
    %v4962 = vpop.f32.mrf.mxu0
    %4963 = vdwg.mxu0
    %v4964 = vxor.u32 %v4902, 2147483648
    %v4965 = vxor.u32 %v4905, 2147483648
    %v4966 = vxor.u32 %v4910, 2147483648
    %v4967 = vxor.u32 %v4913, 2147483648
    %v4968 = vxor.u32 %v4918, 2147483648
    %v4969 = vxor.u32 %v4921, 2147483648
    %v4970 = vxor.u32 %v4926, 2147483648
    %v4971 = vxor.u32 %v4929, 2147483648
    %v4972 = vxor.u32 %v4934, 2147483648
    %v4973 = vxor.u32 %v4937, 2147483648
    %v4974 = vxor.u32 %v4942, 2147483648
    %v4975 = vxor.u32 %v4945, 2147483648
    %v4976 = vxor.u32 %v4950, 2147483648
    %v4977 = vxor.u32 %v4953, 2147483648
    %v4978 = vxor.u32 %v4958, 2147483648
    %v4979 = vxor.u32 %v4961, 2147483648
    %v4980 = vmul.f32 %v4964, 1.442695
    %v4981 = vpow.pop %v4980
    %v4982 = vmul.f32 %v4965, 1.442695
    %v4983 = vpow.pop %v4982
    %v4984 = vmul.f32 %v4966, 1.442695
    %v4985 = vpow.pop %v4984
    %v4986 = vmul.f32 %v4967, 1.442695
    %v4987 = vpow.pop %v4986
    %v4988 = vmul.f32 %v4968, 1.442695
    %v4989 = vpow.pop %v4988
    %v4990 = vmul.f32 %v4969, 1.442695
    %v4991 = vpow.pop %v4990
    %v4992 = vmul.f32 %v4970, 1.442695
    %v4993 = vpow.pop %v4992
    %v4994 = vmul.f32 %v4971, 1.442695
    %v4995 = vpow.pop %v4994
    %v4996 = vmul.f32 %v4972, 1.442695
    %v4997 = vpow.pop %v4996
    %v4998 = vmul.f32 %v4973, 1.442695
    %v4999 = vpow.pop %v4998
    %v5000 = vmul.f32 %v4974, 1.442695
    %v5001 = vpow.pop %v5000
    %v5002 = vmul.f32 %v4975, 1.442695
    %v5003 = vpow.pop %v5002
    %v5004 = vmul.f32 %v4976, 1.442695
    %v5005 = vpow.pop %v5004
    %v5006 = vmul.f32 %v4977, 1.442695
    %v5007 = vpow.pop %v5006
    %v5008 = vmul.f32 %v4978, 1.442695
    %v5009 = vpow.pop %v5008
    %v5010 = vmul.f32 %v4979, 1.442695
    %v5011 = vpow.pop %v5010
    %v5012 = vadd.f32 %v4981, 1.0
    %v5013 = vadd.f32 %v4983, 1.0
    %v5014 = vadd.f32 %v4985, 1.0
    %v5015 = vadd.f32 %v4987, 1.0
    %v5016 = vadd.f32 %v4989, 1.0
    %v5017 = vadd.f32 %v4991, 1.0
    %v5018 = vadd.f32 %v4993, 1.0
    %v5019 = vadd.f32 %v4995, 1.0
    %v5020 = vadd.f32 %v4997, 1.0
    %v5021 = vadd.f32 %v4999, 1.0
    %v5022 = vadd.f32 %v5001, 1.0
    %v5023 = vadd.f32 %v5003, 1.0
    %v5024 = vadd.f32 %v5005, 1.0
    %v5025 = vadd.f32 %v5007, 1.0
    %v5026 = vadd.f32 %v5009, 1.0
    %v5027 = vadd.f32 %v5011, 1.0
    %v5028 = vrcp.pop %v5012
    %v5029 = vmul.f32 1.0, %v5028
    %v5030 = vrcp.pop %v5013
    %v5031 = vmul.f32 1.0, %v5030
    %v5032 = vrcp.pop %v5014
    %v5033 = vmul.f32 1.0, %v5032
    %v5034 = vrcp.pop %v5015
    %v5035 = vmul.f32 1.0, %v5034
    %v5036 = vrcp.pop %v5016
    %v5037 = vmul.f32 1.0, %v5036
    %v5038 = vrcp.pop %v5017
    %v5039 = vmul.f32 1.0, %v5038
    %v5040 = vrcp.pop %v5018
    %v5041 = vmul.f32 1.0, %v5040
    %v5042 = vrcp.pop %v5019
    %v5043 = vmul.f32 1.0, %v5042
    %v5044 = vrcp.pop %v5020
    %v5045 = vmul.f32 1.0, %v5044
    %v5046 = vrcp.pop %v5021
    %v5047 = vmul.f32 1.0, %v5046
    %v5048 = vrcp.pop %v5022
    %v5049 = vmul.f32 1.0, %v5048
    %v5050 = vrcp.pop %v5023
    %v5051 = vmul.f32 1.0, %v5050
    %v5052 = vrcp.pop %v5024
    %v5053 = vmul.f32 1.0, %v5052
    %v5054 = vrcp.pop %v5025
    %v5055 = vmul.f32 1.0, %v5054
    %v5056 = vrcp.pop %v5026
    %v5057 = vmul.f32 1.0, %v5056
    %v5058 = vrcp.pop %v5027
    %v5059 = vmul.f32 1.0, %v5058
    %5060 = vst [vmem:[#allocation7] sm:$0xff] %v5029
    %5061 = vst [vmem:[#allocation7 + $0x8] sm:$0xff] %v5031
    %5062 = vst [vmem:[#allocation7 + $0x10] sm:$0xff] %v5033
    %5063 = vst [vmem:[#allocation7 + $0x18] sm:$0xff] %v5035
    %5064 = vst [vmem:[#allocation7 + $0x20] sm:$0xff] %v5037
    %5065 = vst [vmem:[#allocation7 + $0x28] sm:$0xff] %v5039
    %5066 = vst [vmem:[#allocation7 + $0x30] sm:$0xff] %v5041
    %5067 = vst [vmem:[#allocation7 + $0x38] sm:$0xff] %v5043
    %5068 = vst [vmem:[#allocation7 + $0x40] sm:$0xff] %v5045
    %5069 = vst [vmem:[#allocation7 + $0x48] sm:$0xff] %v5047
    %5070 = vst [vmem:[#allocation7 + $0x50] sm:$0xff] %v5049
    %5071 = vst [vmem:[#allocation7 + $0x58] sm:$0xff] %v5051
    %5072 = vst [vmem:[#allocation7 + $0x60] sm:$0xff] %v5053
    %5073 = vst [vmem:[#allocation7 + $0x68] sm:$0xff] %v5055
    %5074 = vst [vmem:[#allocation7 + $0x70] sm:$0xff] %v5057
    %5075 = vst [vmem:[#allocation7 + $0x78] sm:$0xff] %v5059
    // Predicated region
    $region42: #{tpu_custom_call.1} parent=1 // pred_check
      _
    $region43: #{tpu_custom_call.1} parent=1 // pred_check_branch
      %5077 = sbr.rel (0) target = $region45
    $region44: #{tpu_custom_call.1} parent=1 // pred_region
      %s5079 = ssub.s32 2048, 2048
      %5080 = vsyncadd [#allocation4], %s5079
      %s5081 = sshll.u32 [#allocation7], 4
      %s5082 = int_to_ptr.vmem [resolvable:$true] %s5081
      %5087 = dma.vmem_to_hbm [thread:$0]  %s5082, 2048, %s8, [#allocation4], 128, 128, 8
    $region45: #{tpu_custom_call.1} parent=1 // pred_fallthru
      _
    // Predicated region
    $region46: #{tpu_custom_call.1} parent=1 // pred_check
      _
    $region47: #{tpu_custom_call.1} parent=1 // pred_check_branch
      %5089 = sbr.rel (0) target = $region49
    $region48: #{tpu_custom_call.1} parent=1 // pred_region
      %5090 = dma.done [#allocation4], 2048
    $region49: #{tpu_custom_call.1} parent=1 // pred_fallthru
      _
    %5091 = vsyncpa [#allocation3], 1
    %5092 = vsyncpa [#allocation6], 1
    %5093 = vsyncpa [#allocation4], 1

</llo_original>
